<compile_context>
chip_gen: v7x
topology: tpu7x:2x2x1
jax: 0.10.0
libtpu: 0.0.40
codegen_flags: <defaults>
</compile_context>

<pallas_src>
import functools

import jax
import jax.numpy as jnp
from jax import lax
from jax.experimental import pallas as pl
from jax.experimental.pallas import tpu as pltpu

IGNORE_INDEX = 255
GDICE_EPS = 1e-6
FOCAL_WEIGHT = 0.8   # Focal_DiceLoss: gdice + 0.8 * focal (gamma=0.6 attr is unused)
FOCAL_GAMMA = 2      # FocalLoss default

# Class weights from Focal_DiceLoss.__init__ (defines C = 11).
ALPHA_LIST = (0.82574772, 0.83875163, 1.05331599, 1.26657997, 1.0,
              0.75292588, 2.01820546, 0.78543563, 1.44473342, 2.04551365,
              0.97269181)
ALPHA = jnp.array(ALPHA_LIST, dtype=jnp.float32)


def _alpha_column(C):
    """(C, 1) class-weight column built from scalar constants (no extra input)."""
    cls = lax.broadcasted_iota(jnp.int32, (C, 1), 0)
    col = jnp.full((C, 1), ALPHA_LIST[0], dtype=jnp.float32)
    for k in range(1, C):
        col = jnp.where(cls == k, jnp.float32(ALPHA_LIST[k]), col)
    return col


def _focal_dice_kernel(x_ref, y_ref,
                       inter_out, psum_out, tsum_out, focal_out,
                       inter_acc, psum_acc, tsum_acc, focal_acc,
                       *, n_pixels, tile, tiles_per_split):
    s = pl.program_id(0)            # split (parallel across TensorCores)
    j = pl.program_id(1)            # tile within split (reduction axis)
    nj = pl.num_programs(1)

    @pl.when(j == 0)
    def _():
        inter_acc[...] = jnp.zeros_like(inter_acc)
        psum_acc[...] = jnp.zeros_like(psum_acc)
        tsum_acc[...] = jnp.zeros_like(tsum_acc)
        focal_acc[...] = jnp.zeros_like(focal_acc)

    x = x_ref[...].astype(jnp.float32)   # (C, T) logits, pixels on lanes
    y = y_ref[...]                       # (1, T) int32 labels
    C, T = x.shape

    # one-hot targets: ignore/pad label 255 (>= C) yields an all-zero column
    cls = lax.broadcasted_iota(jnp.int32, (C, T), 0)
    onehot = (cls == y).astype(jnp.float32)            # (C, T)

    # softmax over the class (sublane) axis; single full-tile exp, exact reciprocal
    m = jnp.max(x, axis=0, keepdims=True)              # (1, T)
    xs = x - m                                         # (C, T)
    e = jnp.exp(xs)                                    # (C, T) -- only full-tile EUP op
    ssum = jnp.sum(e, axis=0, keepdims=True)           # (1, T)
    logs = jnp.log(ssum)                               # (1, T)
    p = e * (1.0 / ssum)                               # (C, T) softmax probs

    # ---- Generalized Dice partials: plain VPU adds into lane-wide scratch ----
    tsum_acc[...] += onehot
    inter_acc[...] += p * onehot

    # padding only affects the softmax-prob sum; mask only tiles overlapping it
    tile_start = (s * tiles_per_split + j) * tile
    no_pad = tile_start + tile <= n_pixels

    @pl.when(no_pad)
    def _():
        psum_acc[...] += p

    @pl.when(jnp.logical_not(no_pad))
    def _():
        lane = lax.broadcasted_iota(jnp.int32, (1, T), 1)
        valid = (tile_start + lane) < n_pixels          # (1, T)
        psum_acc[...] += jnp.where(valid, p, 0.0)

    # ---- Focal partials ----
    # weighted CE per pixel: logpt = alpha[y] * (log-sum-exp - x_y); pad rows -> 0
    alpha_col = _alpha_column(C)                        # (C, 1)
    logpt = jnp.sum(onehot * alpha_col * (logs - xs),
                    axis=0, keepdims=True)              # (1, T)
    pt = jnp.exp(-logpt)
    one_m_pt = 1.0 - pt
    focal_acc[...] += one_m_pt * one_m_pt * logpt       # gamma = 2

    # ---- emit this split's per-class partial sums at its last tile ----
    @pl.when(j == nj - 1)
    def _():
        inter_out[...] = jnp.sum(inter_acc[...], axis=1, keepdims=True)   # (C, 1)
        psum_out[...] = jnp.sum(psum_acc[...], axis=1, keepdims=True)
        tsum_out[...] = jnp.sum(tsum_acc[...], axis=1, keepdims=True)
        focal_out[...] = jnp.sum(focal_acc[...], axis=1, keepdims=True)   # (1, 1)


def focal_dice_loss(logits_nchw, target_nhw, *, tile=4096, n_splits=2):
    """Focal_DiceLoss.forward(output, target); output NCHW logits, target NHW int."""
    N, C, H, W = logits_nchw.shape
    assert C == len(ALPHA_LIST), "alpha weight length must match num classes"
    assert tile % 128 == 0, "pixel tile must be a multiple of 128 lanes"
    # TODO(synk): PyTorch batch==1 concat branch of GeneralizedDiceLoss not reproduced.
    assert N > 1

    # ignore_index remap done by GeneralizedDiceLoss (in-place in torch, so the
    # subsequent FocalLoss sees the remapped target too)
    tmin = jnp.min(target_nhw)
    target = jnp.where(target_nhw == IGNORE_INDEX, tmin, target_nhw).astype(jnp.int32)

    # NCHW -> (C, P): classes on sublanes, pixels on lanes
    x = jnp.transpose(logits_nchw, (1, 0, 2, 3)).reshape(C, -1).astype(jnp.float32)
    y = target.reshape(1, -1)
    n_pixels = x.shape[1]

    tiles_per_split = pl.cdiv(n_pixels, n_splits * tile)
    total = n_splits * tiles_per_split * tile
    n_pad = total - n_pixels
    if n_pad:
        x = jnp.pad(x, ((0, 0), (0, n_pad)))
        y = jnp.pad(y, ((0, 0), (0, n_pad)), constant_values=IGNORE_INDEX)

    kernel = functools.partial(_focal_dice_kernel, n_pixels=n_pixels, tile=tile,
                               tiles_per_split=tiles_per_split)
    per_class_spec = pl.BlockSpec((None, C, 1), lambda s, j: (s, 0, 0))
    scalar_spec = pl.BlockSpec((None, 1, 1), lambda s, j: (s, 0, 0))

    inter_p, psum_p, tsum_p, focal_p = pl.pallas_call(
        kernel,
        out_shape=(
            jax.ShapeDtypeStruct((n_splits, C, 1), jnp.float32),
            jax.ShapeDtypeStruct((n_splits, C, 1), jnp.float32),
            jax.ShapeDtypeStruct((n_splits, C, 1), jnp.float32),
            jax.ShapeDtypeStruct((n_splits, 1, 1), jnp.float32),
        ),
        grid_spec=pltpu.PrefetchScalarGridSpec(
            num_scalar_prefetch=0,
            grid=(n_splits, tiles_per_split),
            in_specs=[
                pl.BlockSpec((C, tile), lambda s, j: (0, s * tiles_per_split + j)),
                pl.BlockSpec((1, tile), lambda s, j: (0, s * tiles_per_split + j)),
            ],
            out_specs=[per_class_spec, per_class_spec, per_class_spec, scalar_spec],
            scratch_shapes=[
                pltpu.VMEM((C, tile), jnp.float32),   # intersect partials (per lane)
                pltpu.VMEM((C, tile), jnp.float32),   # softmax-prob-sum partials
                pltpu.VMEM((C, tile), jnp.float32),   # target-count partials
                pltpu.VMEM((1, tile), jnp.float32),   # focal-loss partials
            ],
        ),
        compiler_params=pltpu.CompilerParams(
            dimension_semantics=("parallel", "arbitrary")),
    )(x, y)

    # ---- tiny finalize on the (n_splits, C) partials ----
    inter = jnp.sum(inter_p[:, :, 0], axis=0)           # (C,)
    psum = jnp.sum(psum_p[:, :, 0], axis=0)
    tsum = jnp.sum(tsum_p[:, :, 0], axis=0)
    focal_sum = jnp.sum(focal_p)

    w = 1.0 / jnp.maximum(tsum * tsum, GDICE_EPS)
    intersect = jnp.sum(inter * w)
    denom = jnp.sum(jnp.maximum((psum + tsum) * w, GDICE_EPS))
    dice = 1.0 - 2.0 * (intersect / denom)
    focal_mean = focal_sum / float(n_pixels)
    return dice + FOCAL_WEIGHT * focal_mean


def focal_dice_ref(logits, target):
    """Pure-JAX reference mirroring the PyTorch forward."""
    N, C, H, W = logits.shape
    tmin = jnp.min(target)
    t = jnp.where(target == IGNORE_INDEX, tmin, target).astype(jnp.int32)

    # Generalized Dice
    onehot = jax.nn.one_hot(t, C, axis=1, dtype=jnp.float32)       # (N,C,H,W)
    probs = jax.nn.softmax(logits, axis=1)
    pred = probs.transpose(1, 0, 2, 3).reshape(C, -1)
    tgt = onehot.transpose(1, 0, 2, 3).reshape(C, -1)
    w = 1.0 / jnp.maximum(jnp.sum(tgt, -1) ** 2, GDICE_EPS)
    inter = jnp.sum(pred * tgt, -1) * w
    denom = jnp.maximum(jnp.sum(pred + tgt, -1) * w, GDICE_EPS)
    dice = 1.0 - 2.0 * (jnp.sum(inter) / jnp.sum(denom))

    # Focal (weighted CE, gamma=2, size_average=True)
    logp = jax.nn.log_softmax(logits, axis=1)
    logp_y = jnp.take_along_axis(logp, t[:, None, :, :], axis=1)[:, 0]
    a_y = ALPHA[t]
    valid = (t != IGNORE_INDEX)
    logpt = jnp.where(valid, -a_y * logp_y, 0.0)
    pt = jnp.exp(-logpt)
    focal = jnp.mean((1.0 - pt) ** 2 * logpt)
    return dice + FOCAL_WEIGHT * focal


if __name__ == "__main__":
    key = jax.random.PRNGKey(0)
    k1, k2 = jax.random.split(key)
    N, C, H, W = 2, 11, 16, 16
    logits = jax.random.normal(k1, (N, C, H, W), dtype=jnp.float32)
    target = jax.random.randint(k2, (N, H, W), 0, C, dtype=jnp.int32)

    loss = focal_dice_loss(logits, target)
    jax.block_until_ready(loss)

    ref = focal_dice_ref(logits, target)
    assert jnp.allclose(loss, ref, rtol=1e-4, atol=1e-5), (float(loss), float(ref))
    print("KERNEL_OK")
</pallas_src>

<mosaic_0001>
module attributes {stable_mosaic.version = 11 : i64} {
  func.func @_focal_dice_kernel(%arg0: i32, %arg1: i32, %arg2: memref<11x4096xf32, #tpu.memory_space<vmem>>, %arg3: memref<1x4096xi32, #tpu.memory_space<vmem>>, %arg4: memref<1x11x1xf32, #tpu.memory_space<vmem>>, %arg5: memref<1x11x1xf32, #tpu.memory_space<vmem>>, %arg6: memref<1x11x1xf32, #tpu.memory_space<vmem>>, %arg7: memref<1x1x1xf32, #tpu.memory_space<vmem>>, %arg8: memref<11x4096xf32, #tpu.memory_space<vmem>>, %arg9: memref<11x4096xf32, #tpu.memory_space<vmem>>, %arg10: memref<11x4096xf32, #tpu.memory_space<vmem>>, %arg11: memref<1x4096xf32, #tpu.memory_space<vmem>>) attributes {dimension_semantics = [#tpu.dimension_semantics<parallel>, #tpu.dimension_semantics<arbitrary>], iteration_bounds = array<i64: 2, 1>, scalar_prefetch = 0 : i64, scratch_operands = 4 : i64, tpu.core_type = #tpu.core_type<tc>, window_params = [{transform_indices = @transform_0, window_bounds = array<i64: 11, 4096>}, {transform_indices = @transform_1, window_bounds = array<i64: 1, 4096>}, {transform_indices = @transform_2, window_bounds = array<i64: 1, 11, 1>}, {transform_indices = @transform_3, window_bounds = array<i64: 1, 11, 1>}, {transform_indices = @transform_4, window_bounds = array<i64: 1, 11, 1>}, {transform_indices = @transform_5, window_bounds = array<i64: 1, 1, 1>}]} {
    %c0_i32 = arith.constant 0 : i32
    %0 = arith.cmpi eq, %arg1, %c0_i32 : i32
    %1 = arith.extui %0 : i1 to i32
    %c0_i32_0 = arith.constant 0 : i32
    %2 = arith.cmpi ne, %1, %c0_i32_0 : i32
    scf.if %2 {
      %cst_38 = arith.constant 0.000000e+00 : f32
      %101 = vector.broadcast %cst_38 : f32 to vector<11x4096xf32>
      %c0_39 = arith.constant 0 : index
      %c0_40 = arith.constant 0 : index
      %102 = vector.load %arg8[%c0_39, %c0_40] : memref<11x4096xf32, #tpu.memory_space<vmem>>, vector<11x4096xf32>
      tpu.vector_store %arg8[%c0_39, %c0_40], %101 {strides = array<i32>} : memref<11x4096xf32, #tpu.memory_space<vmem>>, vector<11x4096xf32>,
      %cst_41 = arith.constant 0.000000e+00 : f32
      %103 = vector.broadcast %cst_41 : f32 to vector<11x4096xf32>
      %c0_42 = arith.constant 0 : index
      %c0_43 = arith.constant 0 : index
      %104 = vector.load %arg9[%c0_42, %c0_43] : memref<11x4096xf32, #tpu.memory_space<vmem>>, vector<11x4096xf32>
      tpu.vector_store %arg9[%c0_42, %c0_43], %103 {strides = array<i32>} : memref<11x4096xf32, #tpu.memory_space<vmem>>, vector<11x4096xf32>,
      %cst_44 = arith.constant 0.000000e+00 : f32
      %105 = vector.broadcast %cst_44 : f32 to vector<11x4096xf32>
      %c0_45 = arith.constant 0 : index
      %c0_46 = arith.constant 0 : index
      %106 = vector.load %arg10[%c0_45, %c0_46] : memref<11x4096xf32, #tpu.memory_space<vmem>>, vector<11x4096xf32>
      tpu.vector_store %arg10[%c0_45, %c0_46], %105 {strides = array<i32>} : memref<11x4096xf32, #tpu.memory_space<vmem>>, vector<11x4096xf32>,
      %cst_47 = arith.constant 0.000000e+00 : f32
      %107 = vector.broadcast %cst_47 : f32 to vector<1x4096xf32>
      %c0_48 = arith.constant 0 : index
      %c0_49 = arith.constant 0 : index
      %108 = vector.load %arg11[%c0_48, %c0_49] : memref<1x4096xf32, #tpu.memory_space<vmem>>, vector<1x4096xf32>
      tpu.vector_store %arg11[%c0_48, %c0_49], %107 {strides = array<i32>} : memref<1x4096xf32, #tpu.memory_space<vmem>>, vector<1x4096xf32>,
    } else {
    }
    %c0 = arith.constant 0 : index
    %c0_1 = arith.constant 0 : index
    %3 = vector.load %arg2[%c0, %c0_1] : memref<11x4096xf32, #tpu.memory_space<vmem>>, vector<11x4096xf32>
    %c0_2 = arith.constant 0 : index
    %c0_3 = arith.constant 0 : index
    %4 = vector.load %arg3[%c0_2, %c0_3] : memref<1x4096xi32, #tpu.memory_space<vmem>>, vector<1x4096xi32>
    %5 = tpu.iota {dimensions = array<i32: 0>} : vector<11x4096xi32>
    %6 = vector.broadcast %4 : vector<1x4096xi32> to vector<11x4096xi32>
    %7 = arith.cmpi eq, %5, %6 : vector<11x4096xi32>
    %8 = arith.extui %7 : vector<11x4096xi1> to vector<11x4096xi32>
    %9 = arith.sitofp %8 : vector<11x4096xi32> to vector<11x4096xf32>
    %cst = arith.constant dense<0xFF800000> : vector<4096xf32>
    %10 = vector.multi_reduction <maximumf>, %3, %cst [0] : vector<11x4096xf32> to vector<4096xf32>
    %11 = vector.shape_cast %10 : vector<4096xf32> to vector<1x4096xf32>
    %12 = vector.broadcast %11 : vector<1x4096xf32> to vector<11x4096xf32>
    %13 = arith.subf %3, %12 : vector<11x4096xf32>
    %14 = math.exp %13 : vector<11x4096xf32>
    %cst_4 = arith.constant dense<0.000000e+00> : vector<4096xf32>
    %15 = vector.multi_reduction <add>, %14, %cst_4 [0] : vector<11x4096xf32> to vector<4096xf32>
    %16 = vector.shape_cast %15 : vector<4096xf32> to vector<1x4096xf32>
    %17 = math.log %16 : vector<1x4096xf32>
    %cst_5 = arith.constant 1.000000e+00 : f32
    %18 = vector.broadcast %cst_5 : f32 to vector<1x4096xf32>
    %19 = arith.divf %18, %16 : vector<1x4096xf32>
    %20 = vector.broadcast %19 : vector<1x4096xf32> to vector<11x4096xf32>
    %21 = arith.mulf %14, %20 : vector<11x4096xf32>
    %c0_6 = arith.constant 0 : index
    %c0_7 = arith.constant 0 : index
    %22 = vector.load %arg10[%c0_6, %c0_7] : memref<11x4096xf32, #tpu.memory_space<vmem>>, vector<11x4096xf32>
    %23 = arith.addf %22, %9 : vector<11x4096xf32>
    %c0_8 = arith.constant 0 : index
    %c0_9 = arith.constant 0 : index
    %24 = vector.load %arg10[%c0_8, %c0_9] : memref<11x4096xf32, #tpu.memory_space<vmem>>, vector<11x4096xf32>
    tpu.vector_store %arg10[%c0_8, %c0_9], %23 {strides = array<i32>} : memref<11x4096xf32, #tpu.memory_space<vmem>>, vector<11x4096xf32>,
    %c0_10 = arith.constant 0 : index
    %c0_11 = arith.constant 0 : index
    %25 = vector.load %arg8[%c0_10, %c0_11] : memref<11x4096xf32, #tpu.memory_space<vmem>>, vector<11x4096xf32>
    %26 = arith.mulf %21, %9 : vector<11x4096xf32>
    %27 = arith.addf %25, %26 : vector<11x4096xf32>
    %c0_12 = arith.constant 0 : index
    %c0_13 = arith.constant 0 : index
    %28 = vector.load %arg8[%c0_12, %c0_13] : memref<11x4096xf32, #tpu.memory_space<vmem>>, vector<11x4096xf32>
    tpu.vector_store %arg8[%c0_12, %c0_13], %27 {strides = array<i32>} : memref<11x4096xf32, #tpu.memory_space<vmem>>, vector<11x4096xf32>,
    %c1_i32 = arith.constant 1 : i32
    %29 = arith.muli %arg0, %c1_i32 : i32
    %30 = arith.addi %29, %arg1 : i32
    %c4096_i32 = arith.constant 4096 : i32
    %31 = arith.muli %30, %c4096_i32 : i32
    %c4096_i32_14 = arith.constant 4096 : i32
    %32 = arith.addi %31, %c4096_i32_14 : i32
    %c512_i32 = arith.constant 512 : i32
    %33 = arith.cmpi sle, %32, %c512_i32 : i32
    %34 = arith.extui %33 : i1 to i32
    %c0_i32_15 = arith.constant 0 : i32
    %35 = arith.cmpi ne, %34, %c0_i32_15 : i32
    scf.if %35 {
      %c0_38 = arith.constant 0 : index
      %c0_39 = arith.constant 0 : index
      %101 = vector.load %arg9[%c0_38, %c0_39] : memref<11x4096xf32, #tpu.memory_space<vmem>>, vector<11x4096xf32>
      %102 = arith.addf %101, %21 : vector<11x4096xf32>
      %c0_40 = arith.constant 0 : index
      %c0_41 = arith.constant 0 : index
      %103 = vector.load %arg9[%c0_40, %c0_41] : memref<11x4096xf32, #tpu.memory_space<vmem>>, vector<11x4096xf32>
      tpu.vector_store %arg9[%c0_40, %c0_41], %102 {strides = array<i32>} : memref<11x4096xf32, #tpu.memory_space<vmem>>, vector<11x4096xf32>,
    } else {
    }
    %true = arith.constant true
    %36 = arith.xori %33, %true : i1
    %37 = arith.extui %36 : i1 to i32
    %c0_i32_16 = arith.constant 0 : i32
    %38 = arith.cmpi ne, %37, %c0_i32_16 : i32
    scf.if %38 {
      %101 = tpu.iota {dimensions = array<i32: 1>} : vector<1x4096xi32>
      %102 = vector.broadcast %31 : i32 to vector<1x4096xi32>
      %103 = arith.addi %102, %101 : vector<1x4096xi32>
      %c512_i32_38 = arith.constant 512 : i32
      %104 = vector.broadcast %c512_i32_38 : i32 to vector<1x4096xi32>
      %105 = arith.cmpi slt, %103, %104 : vector<1x4096xi32>
      %c0_39 = arith.constant 0 : index
      %c0_40 = arith.constant 0 : index
      %106 = vector.load %arg9[%c0_39, %c0_40] : memref<11x4096xf32, #tpu.memory_space<vmem>>, vector<11x4096xf32>
      %cst_41 = arith.constant 0.000000e+00 : f32
      %107 = vector.shape_cast %105 : vector<1x4096xi1> to vector<1x4096xi1>
      %108 = vector.broadcast %107 : vector<1x4096xi1> to vector<11x4096xi1>
      %109 = vector.broadcast %cst_41 : f32 to vector<11x4096xf32>
      %110 = arith.select %108, %21, %109 : vector<11x4096xi1>, vector<11x4096xf32>
      %111 = arith.addf %106, %110 : vector<11x4096xf32>
      %c0_42 = arith.constant 0 : index
      %c0_43 = arith.constant 0 : index
      %112 = vector.load %arg9[%c0_42, %c0_43] : memref<11x4096xf32, #tpu.memory_space<vmem>>, vector<11x4096xf32>
      tpu.vector_store %arg9[%c0_42, %c0_43], %111 {strides = array<i32>} : memref<11x4096xf32, #tpu.memory_space<vmem>>, vector<11x4096xf32>,
    } else {
    }
    %39 = tpu.iota {dimensions = array<i32: 0>} : vector<11x1xi32>
    %cst_17 = arith.constant 0.825747728 : f32
    %40 = vector.broadcast %cst_17 : f32 to vector<11x1xf32>
    %c1_i32_18 = arith.constant 1 : i32
    %41 = vector.broadcast %c1_i32_18 : i32 to vector<11x1xi32>
    %42 = arith.cmpi eq, %39, %41 : vector<11x1xi32>
    %cst_19 = arith.constant 0.838751614 : f32
    %43 = vector.broadcast %cst_19 : f32 to vector<11x1xf32>
    %44 = arith.select %42, %43, %40 : vector<11x1xi1>, vector<11x1xf32>
    %c2_i32 = arith.constant 2 : i32
    %45 = vector.broadcast %c2_i32 : i32 to vector<11x1xi32>
    %46 = arith.cmpi eq, %39, %45 : vector<11x1xi32>
    %cst_20 = arith.constant 1.053316 : f32
    %47 = vector.broadcast %cst_20 : f32 to vector<11x1xf32>
    %48 = arith.select %46, %47, %44 : vector<11x1xi1>, vector<11x1xf32>
    %c3_i32 = arith.constant 3 : i32
    %49 = vector.broadcast %c3_i32 : i32 to vector<11x1xi32>
    %50 = arith.cmpi eq, %39, %49 : vector<11x1xi32>
    %cst_21 = arith.constant 1.266580e+00 : f32
    %51 = vector.broadcast %cst_21 : f32 to vector<11x1xf32>
    %52 = arith.select %50, %51, %48 : vector<11x1xi1>, vector<11x1xf32>
    %c4_i32 = arith.constant 4 : i32
    %53 = vector.broadcast %c4_i32 : i32 to vector<11x1xi32>
    %54 = arith.cmpi eq, %39, %53 : vector<11x1xi32>
    %cst_22 = arith.constant 1.000000e+00 : f32
    %55 = vector.broadcast %cst_22 : f32 to vector<11x1xf32>
    %56 = arith.select %54, %55, %52 : vector<11x1xi1>, vector<11x1xf32>
    %c5_i32 = arith.constant 5 : i32
    %57 = vector.broadcast %c5_i32 : i32 to vector<11x1xi32>
    %58 = arith.cmpi eq, %39, %57 : vector<11x1xi32>
    %cst_23 = arith.constant 0.752925872 : f32
    %59 = vector.broadcast %cst_23 : f32 to vector<11x1xf32>
    %60 = arith.select %58, %59, %56 : vector<11x1xi1>, vector<11x1xf32>
    %c6_i32 = arith.constant 6 : i32
    %61 = vector.broadcast %c6_i32 : i32 to vector<11x1xi32>
    %62 = arith.cmpi eq, %39, %61 : vector<11x1xi32>
    %cst_24 = arith.constant 2.0182054 : f32
    %63 = vector.broadcast %cst_24 : f32 to vector<11x1xf32>
    %64 = arith.select %62, %63, %60 : vector<11x1xi1>, vector<11x1xf32>
    %c7_i32 = arith.constant 7 : i32
    %65 = vector.broadcast %c7_i32 : i32 to vector<11x1xi32>
    %66 = arith.cmpi eq, %39, %65 : vector<11x1xi32>
    %cst_25 = arith.constant 0.785435616 : f32
    %67 = vector.broadcast %cst_25 : f32 to vector<11x1xf32>
    %68 = arith.select %66, %67, %64 : vector<11x1xi1>, vector<11x1xf32>
    %c8_i32 = arith.constant 8 : i32
    %69 = vector.broadcast %c8_i32 : i32 to vector<11x1xi32>
    %70 = arith.cmpi eq, %39, %69 : vector<11x1xi32>
    %cst_26 = arith.constant 1.44473338 : f32
    %71 = vector.broadcast %cst_26 : f32 to vector<11x1xf32>
    %72 = arith.select %70, %71, %68 : vector<11x1xi1>, vector<11x1xf32>
    %c9_i32 = arith.constant 9 : i32
    %73 = vector.broadcast %c9_i32 : i32 to vector<11x1xi32>
    %74 = arith.cmpi eq, %39, %73 : vector<11x1xi32>
    %cst_27 = arith.constant 2.04551363 : f32
    %75 = vector.broadcast %cst_27 : f32 to vector<11x1xf32>
    %76 = arith.select %74, %75, %72 : vector<11x1xi1>, vector<11x1xf32>
    %c10_i32 = arith.constant 10 : i32
    %77 = vector.broadcast %c10_i32 : i32 to vector<11x1xi32>
    %78 = arith.cmpi eq, %39, %77 : vector<11x1xi32>
    %cst_28 = arith.constant 0.972691833 : f32
    %79 = vector.broadcast %cst_28 : f32 to vector<11x1xf32>
    %80 = arith.select %78, %79, %76 : vector<11x1xi1>, vector<11x1xf32>
    %81 = vector.broadcast %80 : vector<11x1xf32> to vector<11x4096xf32>
    %82 = arith.mulf %9, %81 : vector<11x4096xf32>
    %83 = vector.broadcast %17 : vector<1x4096xf32> to vector<11x4096xf32>
    %84 = arith.subf %83, %13 : vector<11x4096xf32>
    %85 = arith.mulf %82, %84 : vector<11x4096xf32>
    %cst_29 = arith.constant dense<0.000000e+00> : vector<4096xf32>
    %86 = vector.multi_reduction <add>, %85, %cst_29 [0] : vector<11x4096xf32> to vector<4096xf32>
    %87 = vector.shape_cast %86 : vector<4096xf32> to vector<1x4096xf32>
    %cst_30 = arith.constant 0.000000e+00 : f32
    %88 = vector.broadcast %cst_30 : f32 to vector<1x4096xf32>
    %89 = arith.subf %88, %87 : vector<1x4096xf32>
    %90 = math.exp %89 : vector<1x4096xf32>
    %cst_31 = arith.constant 1.000000e+00 : f32
    %91 = vector.broadcast %cst_31 : f32 to vector<1x4096xf32>
    %92 = arith.subf %91, %90 : vector<1x4096xf32>
    %c0_32 = arith.constant 0 : index
    %c0_33 = arith.constant 0 : index
    %93 = vector.load %arg11[%c0_32, %c0_33] : memref<1x4096xf32, #tpu.memory_space<vmem>>, vector<1x4096xf32>
    %94 = arith.mulf %92, %92 : vector<1x4096xf32>
    %95 = arith.mulf %94, %87 : vector<1x4096xf32>
    %96 = arith.addf %93, %95 : vector<1x4096xf32>
    %c0_34 = arith.constant 0 : index
    %c0_35 = arith.constant 0 : index
    %97 = vector.load %arg11[%c0_34, %c0_35] : memref<1x4096xf32, #tpu.memory_space<vmem>>, vector<1x4096xf32>
    tpu.vector_store %arg11[%c0_34, %c0_35], %96 {strides = array<i32>} : memref<1x4096xf32, #tpu.memory_space<vmem>>, vector<1x4096xf32>,
    %c0_i32_36 = arith.constant 0 : i32
    %98 = arith.cmpi eq, %arg1, %c0_i32_36 : i32
    %99 = arith.extui %98 : i1 to i32
    %c0_i32_37 = arith.constant 0 : i32
    %100 = arith.cmpi ne, %99, %c0_i32_37 : i32
    scf.if %100 {
      %c0_38 = arith.constant 0 : index
      %c0_39 = arith.constant 0 : index
      %101 = vector.load %arg8[%c0_38, %c0_39] : memref<11x4096xf32, #tpu.memory_space<vmem>>, vector<11x4096xf32>
      %cst_40 = arith.constant dense<0.000000e+00> : vector<11xf32>
      %102 = vector.multi_reduction <add>, %101, %cst_40 [1] : vector<11x4096xf32> to vector<11xf32>
      %103 = vector.shape_cast %102 : vector<11xf32> to vector<11x1xf32>
      %c0_41 = arith.constant 0 : index
      %c0_42 = arith.constant 0 : index
      %c0_43 = arith.constant 0 : index
      %104 = vector.load %arg4[%c0_41, %c0_42, %c0_43] : memref<1x11x1xf32, #tpu.memory_space<vmem>>, vector<1x11x1xf32>
      %105 = vector.shape_cast %104 : vector<1x11x1xf32> to vector<11x1xf32>
      %106 = vector.shape_cast %103 : vector<11x1xf32> to vector<1x11x1xf32>
      tpu.vector_store %arg4[%c0_41, %c0_42, %c0_43], %106 {strides = array<i32>} : memref<1x11x1xf32, #tpu.memory_space<vmem>>, vector<1x11x1xf32>,
      %c0_44 = arith.constant 0 : index
      %c0_45 = arith.constant 0 : index
      %107 = vector.load %arg9[%c0_44, %c0_45] : memref<11x4096xf32, #tpu.memory_space<vmem>>, vector<11x4096xf32>
      %cst_46 = arith.constant dense<0.000000e+00> : vector<11xf32>
      %108 = vector.multi_reduction <add>, %107, %cst_46 [1] : vector<11x4096xf32> to vector<11xf32>
      %109 = vector.shape_cast %108 : vector<11xf32> to vector<11x1xf32>
      %c0_47 = arith.constant 0 : index
      %c0_48 = arith.constant 0 : index
      %c0_49 = arith.constant 0 : index
      %110 = vector.load %arg5[%c0_47, %c0_48, %c0_49] : memref<1x11x1xf32, #tpu.memory_space<vmem>>, vector<1x11x1xf32>
      %111 = vector.shape_cast %110 : vector<1x11x1xf32> to vector<11x1xf32>
      %112 = vector.shape_cast %109 : vector<11x1xf32> to vector<1x11x1xf32>
      tpu.vector_store %arg5[%c0_47, %c0_48, %c0_49], %112 {strides = array<i32>} : memref<1x11x1xf32, #tpu.memory_space<vmem>>, vector<1x11x1xf32>,
      %c0_50 = arith.constant 0 : index
      %c0_51 = arith.constant 0 : index
      %113 = vector.load %arg10[%c0_50, %c0_51] : memref<11x4096xf32, #tpu.memory_space<vmem>>, vector<11x4096xf32>
      %cst_52 = arith.constant dense<0.000000e+00> : vector<11xf32>
      %114 = vector.multi_reduction <add>, %113, %cst_52 [1] : vector<11x4096xf32> to vector<11xf32>
      %115 = vector.shape_cast %114 : vector<11xf32> to vector<11x1xf32>
      %c0_53 = arith.constant 0 : index
      %c0_54 = arith.constant 0 : index
      %c0_55 = arith.constant 0 : index
      %116 = vector.load %arg6[%c0_53, %c0_54, %c0_55] : memref<1x11x1xf32, #tpu.memory_space<vmem>>, vector<1x11x1xf32>
      %117 = vector.shape_cast %116 : vector<1x11x1xf32> to vector<11x1xf32>
      %118 = vector.shape_cast %115 : vector<11x1xf32> to vector<1x11x1xf32>
      tpu.vector_store %arg6[%c0_53, %c0_54, %c0_55], %118 {strides = array<i32>} : memref<1x11x1xf32, #tpu.memory_space<vmem>>, vector<1x11x1xf32>,
      %c0_56 = arith.constant 0 : index
      %c0_57 = arith.constant 0 : index
      %119 = vector.load %arg11[%c0_56, %c0_57] : memref<1x4096xf32, #tpu.memory_space<vmem>>, vector<1x4096xf32>
      %cst_58 = arith.constant dense<0.000000e+00> : vector<1xf32>
      %120 = vector.multi_reduction <add>, %119, %cst_58 [1] : vector<1x4096xf32> to vector<1xf32>
      %121 = vector.shape_cast %120 : vector<1xf32> to vector<1x1xf32>
      %c0_59 = arith.constant 0 : index
      %c0_60 = arith.constant 0 : index
      %c0_61 = arith.constant 0 : index
      %122 = vector.load %arg7[%c0_59, %c0_60, %c0_61] : memref<1x1x1xf32, #tpu.memory_space<vmem>>, vector<1x1x1xf32>
      %123 = vector.shape_cast %122 : vector<1x1x1xf32> to vector<1x1xf32>
      %124 = vector.shape_cast %121 : vector<1x1xf32> to vector<1x1x1xf32>
      tpu.vector_store %arg7[%c0_59, %c0_60, %c0_61], %124 {strides = array<i32>} : memref<1x1x1xf32, #tpu.memory_space<vmem>>, vector<1x1x1xf32>,
    } else {
    }
    return
  }
  func.func @transform_0(%arg0: i32, %arg1: i32) -> (i32, i32) {
    %c1_i32 = arith.constant 1 : i32
    %0 = arith.muli %arg0, %c1_i32 : i32
    %1 = arith.addi %0, %arg1 : i32
    %c0_i32 = arith.constant 0 : i32
    %c0_i32_0 = arith.constant 0 : i32
    return %c0_i32, %1 : i32, i32
  }
  func.func @transform_1(%arg0: i32, %arg1: i32) -> (i32, i32) {
    %c1_i32 = arith.constant 1 : i32
    %0 = arith.muli %arg0, %c1_i32 : i32
    %1 = arith.addi %0, %arg1 : i32
    %c0_i32 = arith.constant 0 : i32
    %c0_i32_0 = arith.constant 0 : i32
    return %c0_i32, %1 : i32, i32
  }
  func.func @transform_2(%arg0: i32, %arg1: i32) -> (i32, i32, i32) {
    %c0_i32 = arith.constant 0 : i32
    %c0_i32_0 = arith.constant 0 : i32
    %c0_i32_1 = arith.constant 0 : i32
    return %arg0, %c0_i32, %c0_i32_0 : i32, i32, i32
  }
  func.func @transform_3(%arg0: i32, %arg1: i32) -> (i32, i32, i32) {
    %c0_i32 = arith.constant 0 : i32
    %c0_i32_0 = arith.constant 0 : i32
    %c0_i32_1 = arith.constant 0 : i32
    return %arg0, %c0_i32, %c0_i32_0 : i32, i32, i32
  }
  func.func @transform_4(%arg0: i32, %arg1: i32) -> (i32, i32, i32) {
    %c0_i32 = arith.constant 0 : i32
    %c0_i32_0 = arith.constant 0 : i32
    %c0_i32_1 = arith.constant 0 : i32
    return %arg0, %c0_i32, %c0_i32_0 : i32, i32, i32
  }
  func.func @transform_5(%arg0: i32, %arg1: i32) -> (i32, i32, i32) {
    %c0_i32 = arith.constant 0 : i32
    %c0_i32_0 = arith.constant 0 : i32
    %c0_i32_1 = arith.constant 0 : i32
    return %arg0, %c0_i32, %c0_i32_0 : i32, i32, i32
  }
}

</mosaic_0001>

<llo_original>
// kernel: tpu_custom_call.1
$region0: #{tpu_custom_call.1}
  #allocation0 [shape = 'u32[]', space=smem, size = 0x4, offset = 0x4, fixed_abs, tag = 'smem constant byte address 0x4 - core index']
  #allocation1 [shape = 'u32[144,128]{1,0:T(1,128)}', space=vmem, size = 0x12000, scoped, tag = 'internal scratch']
  #allocation2 [shape = 'f32[11,4096]{1,0:T(8,128)}', space=vmem, size = 0x40000, scoped, tag = 'scratch operand']
  #allocation3 [shape = 'f32[11,4096]{1,0:T(8,128)}', space=vmem, size = 0x40000, scoped, tag = 'scratch operand']
  #allocation4 [shape = 'f32[11,4096]{1,0:T(8,128)}', space=vmem, size = 0x40000, scoped, tag = 'scratch operand']
  #allocation5 [shape = 'f32[1,4096]{1,0:T(1,128)}', space=vmem, size = 0x4000, scoped, tag = 'scratch operand']
  %s0 = inlined_call_operand.hbm [shape: f32[11,8192], index: 0, kind: input, shape index: {}]
  %s1 = inlined_call_operand.hbm [shape: s32[1,8192], index: 1, kind: input, shape index: {}]
  %s2 = inlined_call_operand.vmem [shape: f32[2,11,1], index: 2, kind: output, shape index: {0}]
  %s3 = inlined_call_operand.vmem [shape: f32[2,11,1], index: 3, kind: output, shape index: {1}]
  %s4 = inlined_call_operand.vmem [shape: f32[2,11,1], index: 4, kind: output, shape index: {2}]
  %s5 = inlined_call_operand.vmem [shape: f32[2,1,1], index: 5, kind: output, shape index: {3}]
  %6 = xla_tuple %s2, %s3, %s4, %s5
  %s7 = sld [smem:[#allocation0]]
  $region89: #{tpu_custom_call.1} parent=0
    _
  %s9 = ssub.s32 1, %s7
  %s10 = scalar_select 0, %s9, %s7
  $region1: #{tpu_custom_call.1} parent=0
    #allocation6 [shape = 'u8[524288]{0}', space=vmem, size = 0x80000, scoped, tag = 'input window, operand 0']
    #allocation7 [shape = 's32[2]{0}', space=sflag, size = 0x8, scoped, tag = 'scoped memory for tpu_custom_call.1']
    #allocation8 [shape = 'u8[32768]{0}', space=vmem, size = 0x8000, scoped, tag = 'input window, operand 1']
    #allocation9 [shape = 's32[2]{0}', space=sflag, size = 0x8, scoped, tag = 'scoped memory for tpu_custom_call.1']
    %11 = vsyncpa [#allocation7], 0
    %s12 = scalar_lea.sflag [#allocation7], 1
    %13 = vsyncpa %s12, 0
    %14 = vsyncpa [#allocation9], 0
    %s15 = scalar_lea.sflag [#allocation9], 1
    %16 = vsyncpa %s15, 0
    loop: start=0, step=1, limit=4
    $region2: #{tpu_custom_call.1} parent=1 // loop_pre_header
      _
    $region3: #{tpu_custom_call.1} parent=1 // loop_header
      %s18 = sphi 0, %s22
      %p19 = scmp.ge.s32.totalorder %s18, 4
      %s25 = sphi 0, %s37
      %s26 = sphi 0, %s33
      %s27 = sphi 0, %s25
      %s28 = sphi 0, %s26
      %s29 = sphi 0, %s27
      %s30 = sphi 0, %s28
      %s42 = sphi 0, %s44
      %s45 = sphi 0, %s42
      %s46 = sphi 0, %s45
      %s62 = sphi 0, %s46
      %s70 = sphi 0, %s72
      %s73 = sphi 0, %s70
      %s74 = sphi 0, %s73
      %s90 = sphi 0, %s74
      %s96 = sphi 0, %s98
      %s99 = sphi 0, %s96
      %s100 = sphi 0, %s99
      %s116 = sphi 0, %s100
      %s122 = sphi 0, %s124
      %s125 = sphi 0, %s122
      %s126 = sphi 0, %s125
      %s142 = sphi 0, %s126
      %s148 = sphi 0, %s150
      %s151 = sphi 0, %s148
      %s152 = sphi 0, %s151
      %s168 = sphi 0, %s152
      %s174 = sphi 0, %s176
      %s177 = sphi 0, %s174
      %s178 = sphi 0, %s177
      %s194 = sphi 0, %s178
    $region4: #{tpu_custom_call.1} parent=1 // loop_header_branch
      %21 = sbr.rel (%p19) target = $region8
    $region5: #{tpu_custom_call.1} parent=1 // loop_body
      %s23 = ssub.s32 %s18, 1
      %s24 = ssub.s32 %s18, 2
      %s31 = sadd.s32 1, %s26
      %p32 = scmp.ge.s32.totalorder %s31, 1
      %s33 = scalar_select %p32, 0, %s31
      %s34 = sadd.s32 1, %s25
      %s35 = scalar_select %p32, %s34, %s25
      %p36 = scmp.ge.s32.totalorder %s35, 2
      %s37 = scalar_select %p36, 0, %s35
      %s38 = sadd.s32 %s25, %s26
      %s39 = sadd.s32 %s37, %s33
      %s40 = ssub.s32 %s38, %s39
      %p41 = scmp.eq.s32.totalorder %s40, 0
      %s43 = sadd.s32 %s42, 1
      %s44 = scalar_select %p41, %s42, %s43
      %p47 = pneg %p41
      %p48 = scmp.eq.s32.totalorder %s18, 1
      %p49 = por %p47, %p48
      %p50 = scmp.ne.s32.totalorder %s42, %s45
      %p51 = scmp.eq.s32.totalorder %s18, 0
      %p52 = por %p50, %p51
      %p53 = scmp.ne.s32.totalorder %s42, %s45
      %p54 = scmp.eq.s32.totalorder %s23, 1
      %p55 = por %p53, %p54
      %p56 = scmp.ne.s32.totalorder %s45, %s46
      %p57 = scmp.eq.s32.totalorder %s23, 0
      %p58 = por %p56, %p57
      %p59 = scmp.ne.s32.totalorder %s45, %s46
      %p60 = scmp.eq.s32.totalorder %s24, 1
      %p61 = por %p59, %p60
      %p63 = scmp.ne.s32.totalorder %s46, %s62
      %p64 = scmp.eq.s32.totalorder %s24, 0
      %p65 = por %p63, %p64
      %s66 = sadd.s32 %s25, %s26
      %s67 = sadd.s32 %s37, %s33
      %s68 = ssub.s32 %s66, %s67
      %p69 = scmp.eq.s32.totalorder %s68, 0
      %s71 = sadd.s32 %s70, 1
      %s72 = scalar_select %p69, %s70, %s71
      %p75 = pneg %p69
      %p76 = scmp.eq.s32.totalorder %s18, 1
      %p77 = por %p75, %p76
      %p78 = scmp.ne.s32.totalorder %s70, %s73
      %p79 = scmp.eq.s32.totalorder %s18, 0
      %p80 = por %p78, %p79
      %p81 = scmp.ne.s32.totalorder %s70, %s73
      %p82 = scmp.eq.s32.totalorder %s23, 1
      %p83 = por %p81, %p82
      %p84 = scmp.ne.s32.totalorder %s73, %s74
      %p85 = scmp.eq.s32.totalorder %s23, 0
      %p86 = por %p84, %p85
      %p87 = scmp.ne.s32.totalorder %s73, %s74
      %p88 = scmp.eq.s32.totalorder %s24, 1
      %p89 = por %p87, %p88
      %p91 = scmp.ne.s32.totalorder %s74, %s90
      %p92 = scmp.eq.s32.totalorder %s24, 0
      %p93 = por %p91, %p92
      %s94 = ssub.s32 %s25, %s37
      %p95 = scmp.eq.s32.totalorder %s94, 0
      %s97 = sadd.s32 %s96, 1
      %s98 = scalar_select %p95, %s96, %s97
      %p101 = pneg %p95
      %p102 = scmp.eq.s32.totalorder %s18, 1
      %p103 = por %p101, %p102
      %p104 = scmp.ne.s32.totalorder %s96, %s99
      %p105 = scmp.eq.s32.totalorder %s18, 0
      %p106 = por %p104, %p105
      %p107 = scmp.ne.s32.totalorder %s96, %s99
      %p108 = scmp.eq.s32.totalorder %s23, 1
      %p109 = por %p107, %p108
      %p110 = scmp.ne.s32.totalorder %s99, %s100
      %p111 = scmp.eq.s32.totalorder %s23, 0
      %p112 = por %p110, %p111
      %p113 = scmp.ne.s32.totalorder %s99, %s100
      %p114 = scmp.eq.s32.totalorder %s24, 1
      %p115 = por %p113, %p114
      %p117 = scmp.ne.s32.totalorder %s100, %s116
      %p118 = scmp.eq.s32.totalorder %s24, 0
      %p119 = por %p117, %p118
      %s120 = ssub.s32 %s25, %s37
      %p121 = scmp.eq.s32.totalorder %s120, 0
      %s123 = sadd.s32 %s122, 1
      %s124 = scalar_select %p121, %s122, %s123
      %p127 = pneg %p121
      %p128 = scmp.eq.s32.totalorder %s18, 1
      %p129 = por %p127, %p128
      %p130 = scmp.ne.s32.totalorder %s122, %s125
      %p131 = scmp.eq.s32.totalorder %s18, 0
      %p132 = por %p130, %p131
      %p133 = scmp.ne.s32.totalorder %s122, %s125
      %p134 = scmp.eq.s32.totalorder %s23, 1
      %p135 = por %p133, %p134
      %p136 = scmp.ne.s32.totalorder %s125, %s126
      %p137 = scmp.eq.s32.totalorder %s23, 0
      %p138 = por %p136, %p137
      %p139 = scmp.ne.s32.totalorder %s125, %s126
      %p140 = scmp.eq.s32.totalorder %s24, 1
      %p141 = por %p139, %p140
      %p143 = scmp.ne.s32.totalorder %s126, %s142
      %p144 = scmp.eq.s32.totalorder %s24, 0
      %p145 = por %p143, %p144
      %s146 = ssub.s32 %s25, %s37
      %p147 = scmp.eq.s32.totalorder %s146, 0
      %s149 = sadd.s32 %s148, 1
      %s150 = scalar_select %p147, %s148, %s149
      %p153 = pneg %p147
      %p154 = scmp.eq.s32.totalorder %s18, 1
      %p155 = por %p153, %p154
      %p156 = scmp.ne.s32.totalorder %s148, %s151
      %p157 = scmp.eq.s32.totalorder %s18, 0
      %p158 = por %p156, %p157
      %p159 = scmp.ne.s32.totalorder %s148, %s151
      %p160 = scmp.eq.s32.totalorder %s23, 1
      %p161 = por %p159, %p160
      %p162 = scmp.ne.s32.totalorder %s151, %s152
      %p163 = scmp.eq.s32.totalorder %s23, 0
      %p164 = por %p162, %p163
      %p165 = scmp.ne.s32.totalorder %s151, %s152
      %p166 = scmp.eq.s32.totalorder %s24, 1
      %p167 = por %p165, %p166
      %p169 = scmp.ne.s32.totalorder %s152, %s168
      %p170 = scmp.eq.s32.totalorder %s24, 0
      %p171 = por %p169, %p170
      %s172 = ssub.s32 %s25, %s37
      %p173 = scmp.eq.s32.totalorder %s172, 0
      %s175 = sadd.s32 %s174, 1
      %s176 = scalar_select %p173, %s174, %s175
      %p179 = pneg %p173
      %p180 = scmp.eq.s32.totalorder %s18, 1
      %p181 = por %p179, %p180
      %p182 = scmp.ne.s32.totalorder %s174, %s177
      %p183 = scmp.eq.s32.totalorder %s18, 0
      %p184 = por %p182, %p183
      %p185 = scmp.ne.s32.totalorder %s174, %s177
      %p186 = scmp.eq.s32.totalorder %s23, 1
      %p187 = por %p185, %p186
      %p188 = scmp.ne.s32.totalorder %s177, %s178
      %p189 = scmp.eq.s32.totalorder %s23, 0
      %p190 = por %p188, %p189
      %p191 = scmp.ne.s32.totalorder %s177, %s178
      %p192 = scmp.eq.s32.totalorder %s24, 1
      %p193 = por %p191, %p192
      %p195 = scmp.ne.s32.totalorder %s178, %s194
      %p196 = scmp.eq.s32.totalorder %s24, 0
      %p197 = por %p195, %p196
      %p198 = scmp.le.s32.totalorder 1, %s18
      %p199 = scmp.lt.s32.totalorder %s18, 3
      %p200 = pnand %p198, %p199
      %p201 = pneg %p200
      // Predicated region
      $region9: #{tpu_custom_call.1} parent=5 // pred_check
        _
      $region10: #{tpu_custom_call.1} parent=5 // pred_check_branch
        %203 = sbr.rel (%p200) target = $region12
      $region11: #{tpu_custom_call.1} parent=5 // pred_region
        %s204 = ssub.s32 %s18, 1
      $region12: #{tpu_custom_call.1} parent=5 // pred_fallthru
        _
      %p205 = scmp.lt.s32.totalorder %s18, 2
      // Predicated region
      $region13: #{tpu_custom_call.1} parent=5 // pred_check
        %p206 = pneg %p205
      $region14: #{tpu_custom_call.1} parent=5 // pred_check_branch
        %208 = sbr.rel (%p206) target = $region16
      $region15: #{tpu_custom_call.1} parent=5 // pred_region
        // Predicated region
        $region17: #{tpu_custom_call.1} parent=15 // pred_check
          %p209 = pneg %p52
        $region18: #{tpu_custom_call.1} parent=15 // pred_check_branch
          %211 = sbr.rel (%p209) target = $region20
        $region19: #{tpu_custom_call.1} parent=15 // pred_region
          %s212 = sand.u32 %s42, 1
          %s213 = scalar_lea.sflag [#allocation7], %s212
          %s214 = sand.u32 %s42, 1
          %s215 = smul.addr %s214, 512
          %s216 = scalar_lea.vmem [#allocation6], %s215
          %s217 = sadd.s32 %s25, %s26
          %s218 = smul.u32 32, %s217
          %s220 = ssub.s32 8192, 8192
          %221 = vsyncadd %s213, %s220
          %s222 = smul.addr %s218, 128
          %s223 = scalar_lea.hbm %s0, %s222
          %s224 = sshll.u32 %s216, 4
          %s225 = int_to_ptr.vmem [resolvable:$true] %s224
          %230 = dma.hbm_to_vmem [thread:$0]  %s223, 8192, %s225, %s213, 8192, 4096, 256
        $region20: #{tpu_custom_call.1} parent=15 // pred_fallthru
          _
        // Predicated region
        $region21: #{tpu_custom_call.1} parent=15 // pred_check
          %p231 = pneg %p80
        $region22: #{tpu_custom_call.1} parent=15 // pred_check_branch
          %233 = sbr.rel (%p231) target = $region24
        $region23: #{tpu_custom_call.1} parent=15 // pred_region
          %s234 = sand.u32 %s70, 1
          %s235 = scalar_lea.sflag [#allocation9], %s234
          %s236 = sand.u32 %s70, 1
          %s237 = smul.addr %s236, 32
          %s238 = scalar_lea.vmem [#allocation8], %s237
          %s239 = sadd.s32 %s25, %s26
          %s240 = smul.u32 32, %s239
          %s242 = ssub.s32 512, 512
          %243 = vsyncadd %s235, %s242
          %s244 = smul.addr %s240, 16
          %s245 = scalar_lea.hbm %s1, %s244
          %s247 = sshll.u32 %s238, 4
          %s248 = int_to_ptr.vmem [resolvable:$true] %s247
          %250 = dma.hbm_to_vmem [thread:$0]  %s245, 512, %s248, %s235
        $region24: #{tpu_custom_call.1} parent=15 // pred_fallthru
          _
      $region16: #{tpu_custom_call.1} parent=5 // pred_fallthru
        _
      %p251 = scmp.le.s32.totalorder 1, %s18
      %p252 = scmp.lt.s32.totalorder %s18, 3
      %p253 = pnand %p251, %p252
      %p254 = pneg %p253
      // Predicated region
      $region25: #{tpu_custom_call.1} parent=5 // pred_check
        _
      $region26: #{tpu_custom_call.1} parent=5 // pred_check_branch
        %256 = sbr.rel (%p253) target = $region28
      $region27: #{tpu_custom_call.1} parent=5 // pred_region
        %s257 = ssub.s32 %s18, 1
        %s258 = sand.u32 %s45, 1
        %s259 = scalar_lea.sflag [#allocation7], %s258
        %s260 = sand.u32 %s45, 1
        %s261 = smul.addr %s260, 512
        %s262 = scalar_lea.vmem [#allocation6], %s261
        // Predicated region
        $region29: #{tpu_custom_call.1} parent=27 // pred_check
          %p263 = pneg %p58
        $region30: #{tpu_custom_call.1} parent=27 // pred_check_branch
          %265 = sbr.rel (%p263) target = $region32
        $region31: #{tpu_custom_call.1} parent=27 // pred_region
          %266 = dma.done %s259, 8192
        $region32: #{tpu_custom_call.1} parent=27 // pred_fallthru
          _
        %s267 = sand.u32 %s73, 1
        %s268 = scalar_lea.sflag [#allocation9], %s267
        %s269 = sand.u32 %s73, 1
        %s270 = smul.addr %s269, 32
        %s271 = scalar_lea.vmem [#allocation8], %s270
        // Predicated region
        $region33: #{tpu_custom_call.1} parent=27 // pred_check
          %p272 = pneg %p86
        $region34: #{tpu_custom_call.1} parent=27 // pred_check_branch
          %274 = sbr.rel (%p272) target = $region36
        $region35: #{tpu_custom_call.1} parent=27 // pred_region
          %275 = dma.done %s268, 512
        $region36: #{tpu_custom_call.1} parent=27 // pred_fallthru
          _
        %s276 = sand.u32 %s45, 1
        %s277 = scalar_lea.sflag [#allocation7], %s276
        %s278 = sand.u32 %s45, 1
        %s279 = smul.addr %s278, 512
        %s280 = scalar_lea.vmem [#allocation6], %s279
        %p281 = pneg %p58
        %p282 = pneg %p55
        %s283 = sand.u32 %s73, 1
        %s284 = scalar_lea.sflag [#allocation9], %s283
        %s285 = sand.u32 %s73, 1
        %s286 = smul.addr %s285, 32
        %s287 = scalar_lea.vmem [#allocation8], %s286
        %p288 = pneg %p86
        %p289 = pneg %p83
        %p290 = pneg %p112
        %p291 = pneg %p109
        %p292 = scmp.lt.s32.totalorder %s27, 1
        %s293 = scalar_select %p292, %s27, 1
        %s294 = smul.addr %s293, 2
        %s295 = smul.addr %s294, 8
        %s296 = scalar_lea.vmem %s2, %s295
        %p297 = pneg %p138
        %p298 = pneg %p135
        %p299 = scmp.lt.s32.totalorder %s27, 1
        %s300 = scalar_select %p299, %s27, 1
        %s301 = smul.addr %s300, 2
        %s302 = smul.addr %s301, 8
        %s303 = scalar_lea.vmem %s3, %s302
        %p304 = pneg %p164
        %p305 = pneg %p161
        %p306 = scmp.lt.s32.totalorder %s27, 1
        %s307 = scalar_select %p306, %s27, 1
        %s308 = smul.addr %s307, 2
        %s309 = smul.addr %s308, 8
        %s310 = scalar_lea.vmem %s4, %s309
        %p311 = pneg %p190
        %p312 = pneg %p187
        %p313 = scmp.lt.s32.totalorder %s27, 1
        %s314 = scalar_select %p313, %s27, 1
        %s315 = scalar_lea.vmem %s5, %s314
        %s316 = sadd.s32 %s27, %s28
        %s317 = smul.u32 32, %s316
        %s318 = sadd.s32 %s27, %s28
        %s319 = smul.u32 32, %s318
        %p320 = scmp.lt.s32.totalorder %s27, 1
        %s321 = scalar_select %p320, %s27, 1
        %s322 = smul.addr %s321, 2
        %s323 = smul.addr %s322, 8
        %s324 = scalar_lea.vmem %s2, %s323
        %p325 = scmp.lt.s32.totalorder %s27, 1
        %s326 = scalar_select %p325, %s27, 1
        %s327 = smul.addr %s326, 2
        %s328 = smul.addr %s327, 8
        %s329 = scalar_lea.vmem %s3, %s328
        %p330 = scmp.lt.s32.totalorder %s27, 1
        %s331 = scalar_select %p330, %s27, 1
        %s332 = smul.addr %s331, 2
        %s333 = smul.addr %s332, 8
        %s334 = scalar_lea.vmem %s4, %s333
        %p335 = scmp.lt.s32.totalorder %s27, 1
        %s336 = scalar_select %p335, %s27, 1
        %s337 = scalar_lea.vmem %s5, %s336
        %p338 = scmp.eq.s32.totalorder %s28, 0
        // Predicated region
        $region37: #{tpu_custom_call.1} parent=27 // pred_check
          %p339 = pneg %p338
        $region38: #{tpu_custom_call.1} parent=27 // pred_check_branch
          %341 = sbr.rel (%p339) target = $region40
        $region39: #{tpu_custom_call.1} parent=27 // pred_region
          %342 = vst [vmem:[#allocation2] sm:$0xff] 0.0
          %343 = vst [vmem:[#allocation2 + $0x8] sm:$0xff] 0.0
          %344 = vst [vmem:[#allocation2 + $0x10] sm:$0xff] 0.0
          %345 = vst [vmem:[#allocation2 + $0x18] sm:$0xff] 0.0
          %346 = vst [vmem:[#allocation2 + $0x20] sm:$0xff] 0.0
          %347 = vst [vmem:[#allocation2 + $0x28] sm:$0xff] 0.0
          %348 = vst [vmem:[#allocation2 + $0x30] sm:$0xff] 0.0
          %349 = vst [vmem:[#allocation2 + $0x38] sm:$0xff] 0.0
          %350 = vst [vmem:[#allocation2 + $0x40] sm:$0xff] 0.0
          %351 = vst [vmem:[#allocation2 + $0x48] sm:$0xff] 0.0
          %352 = vst [vmem:[#allocation2 + $0x50] sm:$0xff] 0.0
          %353 = vst [vmem:[#allocation2 + $0x58] sm:$0xff] 0.0
          %354 = vst [vmem:[#allocation2 + $0x60] sm:$0xff] 0.0
          %355 = vst [vmem:[#allocation2 + $0x68] sm:$0xff] 0.0
          %356 = vst [vmem:[#allocation2 + $0x70] sm:$0xff] 0.0
          %357 = vst [vmem:[#allocation2 + $0x78] sm:$0xff] 0.0
          %358 = vst [vmem:[#allocation2 + $0x80] sm:$0xff] 0.0
          %359 = vst [vmem:[#allocation2 + $0x88] sm:$0xff] 0.0
          %360 = vst [vmem:[#allocation2 + $0x90] sm:$0xff] 0.0
          %361 = vst [vmem:[#allocation2 + $0x98] sm:$0xff] 0.0
          %362 = vst [vmem:[#allocation2 + $0xa0] sm:$0xff] 0.0
          %363 = vst [vmem:[#allocation2 + $0xa8] sm:$0xff] 0.0
          %364 = vst [vmem:[#allocation2 + $0xb0] sm:$0xff] 0.0
          %365 = vst [vmem:[#allocation2 + $0xb8] sm:$0xff] 0.0
          %366 = vst [vmem:[#allocation2 + $0xc0] sm:$0xff] 0.0
          %367 = vst [vmem:[#allocation2 + $0xc8] sm:$0xff] 0.0
          %368 = vst [vmem:[#allocation2 + $0xd0] sm:$0xff] 0.0
          %369 = vst [vmem:[#allocation2 + $0xd8] sm:$0xff] 0.0
          %370 = vst [vmem:[#allocation2 + $0xe0] sm:$0xff] 0.0
          %371 = vst [vmem:[#allocation2 + $0xe8] sm:$0xff] 0.0
          %372 = vst [vmem:[#allocation2 + $0xf0] sm:$0xff] 0.0
          %373 = vst [vmem:[#allocation2 + $0xf8] sm:$0xff] 0.0
          %374 = vst [vmem:[#allocation2 + $0x100] sm:$0x7] 0.0
          %375 = vst [vmem:[#allocation2 + $0x108] sm:$0x7] 0.0
          %376 = vst [vmem:[#allocation2 + $0x110] sm:$0x7] 0.0
          %377 = vst [vmem:[#allocation2 + $0x118] sm:$0x7] 0.0
          %378 = vst [vmem:[#allocation2 + $0x120] sm:$0x7] 0.0
          %379 = vst [vmem:[#allocation2 + $0x128] sm:$0x7] 0.0
          %380 = vst [vmem:[#allocation2 + $0x130] sm:$0x7] 0.0
          %381 = vst [vmem:[#allocation2 + $0x138] sm:$0x7] 0.0
          %382 = vst [vmem:[#allocation2 + $0x140] sm:$0x7] 0.0
          %383 = vst [vmem:[#allocation2 + $0x148] sm:$0x7] 0.0
          %384 = vst [vmem:[#allocation2 + $0x150] sm:$0x7] 0.0
          %385 = vst [vmem:[#allocation2 + $0x158] sm:$0x7] 0.0
          %386 = vst [vmem:[#allocation2 + $0x160] sm:$0x7] 0.0
          %387 = vst [vmem:[#allocation2 + $0x168] sm:$0x7] 0.0
          %388 = vst [vmem:[#allocation2 + $0x170] sm:$0x7] 0.0
          %389 = vst [vmem:[#allocation2 + $0x178] sm:$0x7] 0.0
          %390 = vst [vmem:[#allocation2 + $0x180] sm:$0x7] 0.0
          %391 = vst [vmem:[#allocation2 + $0x188] sm:$0x7] 0.0
          %392 = vst [vmem:[#allocation2 + $0x190] sm:$0x7] 0.0
          %393 = vst [vmem:[#allocation2 + $0x198] sm:$0x7] 0.0
          %394 = vst [vmem:[#allocation2 + $0x1a0] sm:$0x7] 0.0
          %395 = vst [vmem:[#allocation2 + $0x1a8] sm:$0x7] 0.0
          %396 = vst [vmem:[#allocation2 + $0x1b0] sm:$0x7] 0.0
          %397 = vst [vmem:[#allocation2 + $0x1b8] sm:$0x7] 0.0
          %398 = vst [vmem:[#allocation2 + $0x1c0] sm:$0x7] 0.0
          %399 = vst [vmem:[#allocation2 + $0x1c8] sm:$0x7] 0.0
          %400 = vst [vmem:[#allocation2 + $0x1d0] sm:$0x7] 0.0
          %401 = vst [vmem:[#allocation2 + $0x1d8] sm:$0x7] 0.0
          %402 = vst [vmem:[#allocation2 + $0x1e0] sm:$0x7] 0.0
          %403 = vst [vmem:[#allocation2 + $0x1e8] sm:$0x7] 0.0
          %404 = vst [vmem:[#allocation2 + $0x1f0] sm:$0x7] 0.0
          %405 = vst [vmem:[#allocation2 + $0x1f8] sm:$0x7] 0.0
          %406 = vst [vmem:[#allocation3] sm:$0xff] 0.0
          %407 = vst [vmem:[#allocation3 + $0x8] sm:$0xff] 0.0
          %408 = vst [vmem:[#allocation3 + $0x10] sm:$0xff] 0.0
          %409 = vst [vmem:[#allocation3 + $0x18] sm:$0xff] 0.0
          %410 = vst [vmem:[#allocation3 + $0x20] sm:$0xff] 0.0
          %411 = vst [vmem:[#allocation3 + $0x28] sm:$0xff] 0.0
          %412 = vst [vmem:[#allocation3 + $0x30] sm:$0xff] 0.0
          %413 = vst [vmem:[#allocation3 + $0x38] sm:$0xff] 0.0
          %414 = vst [vmem:[#allocation3 + $0x40] sm:$0xff] 0.0
          %415 = vst [vmem:[#allocation3 + $0x48] sm:$0xff] 0.0
          %416 = vst [vmem:[#allocation3 + $0x50] sm:$0xff] 0.0
          %417 = vst [vmem:[#allocation3 + $0x58] sm:$0xff] 0.0
          %418 = vst [vmem:[#allocation3 + $0x60] sm:$0xff] 0.0
          %419 = vst [vmem:[#allocation3 + $0x68] sm:$0xff] 0.0
          %420 = vst [vmem:[#allocation3 + $0x70] sm:$0xff] 0.0
          %421 = vst [vmem:[#allocation3 + $0x78] sm:$0xff] 0.0
          %422 = vst [vmem:[#allocation3 + $0x80] sm:$0xff] 0.0
          %423 = vst [vmem:[#allocation3 + $0x88] sm:$0xff] 0.0
          %424 = vst [vmem:[#allocation3 + $0x90] sm:$0xff] 0.0
          %425 = vst [vmem:[#allocation3 + $0x98] sm:$0xff] 0.0
          %426 = vst [vmem:[#allocation3 + $0xa0] sm:$0xff] 0.0
          %427 = vst [vmem:[#allocation3 + $0xa8] sm:$0xff] 0.0
          %428 = vst [vmem:[#allocation3 + $0xb0] sm:$0xff] 0.0
          %429 = vst [vmem:[#allocation3 + $0xb8] sm:$0xff] 0.0
          %430 = vst [vmem:[#allocation3 + $0xc0] sm:$0xff] 0.0
          %431 = vst [vmem:[#allocation3 + $0xc8] sm:$0xff] 0.0
          %432 = vst [vmem:[#allocation3 + $0xd0] sm:$0xff] 0.0
          %433 = vst [vmem:[#allocation3 + $0xd8] sm:$0xff] 0.0
          %434 = vst [vmem:[#allocation3 + $0xe0] sm:$0xff] 0.0
          %435 = vst [vmem:[#allocation3 + $0xe8] sm:$0xff] 0.0
          %436 = vst [vmem:[#allocation3 + $0xf0] sm:$0xff] 0.0
          %437 = vst [vmem:[#allocation3 + $0xf8] sm:$0xff] 0.0
          %438 = vst [vmem:[#allocation3 + $0x100] sm:$0x7] 0.0
          %439 = vst [vmem:[#allocation3 + $0x108] sm:$0x7] 0.0
          %440 = vst [vmem:[#allocation3 + $0x110] sm:$0x7] 0.0
          %441 = vst [vmem:[#allocation3 + $0x118] sm:$0x7] 0.0
          %442 = vst [vmem:[#allocation3 + $0x120] sm:$0x7] 0.0
          %443 = vst [vmem:[#allocation3 + $0x128] sm:$0x7] 0.0
          %444 = vst [vmem:[#allocation3 + $0x130] sm:$0x7] 0.0
          %445 = vst [vmem:[#allocation3 + $0x138] sm:$0x7] 0.0
          %446 = vst [vmem:[#allocation3 + $0x140] sm:$0x7] 0.0
          %447 = vst [vmem:[#allocation3 + $0x148] sm:$0x7] 0.0
          %448 = vst [vmem:[#allocation3 + $0x150] sm:$0x7] 0.0
          %449 = vst [vmem:[#allocation3 + $0x158] sm:$0x7] 0.0
          %450 = vst [vmem:[#allocation3 + $0x160] sm:$0x7] 0.0
          %451 = vst [vmem:[#allocation3 + $0x168] sm:$0x7] 0.0
          %452 = vst [vmem:[#allocation3 + $0x170] sm:$0x7] 0.0
          %453 = vst [vmem:[#allocation3 + $0x178] sm:$0x7] 0.0
          %454 = vst [vmem:[#allocation3 + $0x180] sm:$0x7] 0.0
          %455 = vst [vmem:[#allocation3 + $0x188] sm:$0x7] 0.0
          %456 = vst [vmem:[#allocation3 + $0x190] sm:$0x7] 0.0
          %457 = vst [vmem:[#allocation3 + $0x198] sm:$0x7] 0.0
          %458 = vst [vmem:[#allocation3 + $0x1a0] sm:$0x7] 0.0
          %459 = vst [vmem:[#allocation3 + $0x1a8] sm:$0x7] 0.0
          %460 = vst [vmem:[#allocation3 + $0x1b0] sm:$0x7] 0.0
          %461 = vst [vmem:[#allocation3 + $0x1b8] sm:$0x7] 0.0
          %462 = vst [vmem:[#allocation3 + $0x1c0] sm:$0x7] 0.0
          %463 = vst [vmem:[#allocation3 + $0x1c8] sm:$0x7] 0.0
          %464 = vst [vmem:[#allocation3 + $0x1d0] sm:$0x7] 0.0
          %465 = vst [vmem:[#allocation3 + $0x1d8] sm:$0x7] 0.0
          %466 = vst [vmem:[#allocation3 + $0x1e0] sm:$0x7] 0.0
          %467 = vst [vmem:[#allocation3 + $0x1e8] sm:$0x7] 0.0
          %468 = vst [vmem:[#allocation3 + $0x1f0] sm:$0x7] 0.0
          %469 = vst [vmem:[#allocation3 + $0x1f8] sm:$0x7] 0.0
          %470 = vst [vmem:[#allocation4] sm:$0xff] 0.0
          %471 = vst [vmem:[#allocation4 + $0x8] sm:$0xff] 0.0
          %472 = vst [vmem:[#allocation4 + $0x10] sm:$0xff] 0.0
          %473 = vst [vmem:[#allocation4 + $0x18] sm:$0xff] 0.0
          %474 = vst [vmem:[#allocation4 + $0x20] sm:$0xff] 0.0
          %475 = vst [vmem:[#allocation4 + $0x28] sm:$0xff] 0.0
          %476 = vst [vmem:[#allocation4 + $0x30] sm:$0xff] 0.0
          %477 = vst [vmem:[#allocation4 + $0x38] sm:$0xff] 0.0
          %478 = vst [vmem:[#allocation4 + $0x40] sm:$0xff] 0.0
          %479 = vst [vmem:[#allocation4 + $0x48] sm:$0xff] 0.0
          %480 = vst [vmem:[#allocation4 + $0x50] sm:$0xff] 0.0
          %481 = vst [vmem:[#allocation4 + $0x58] sm:$0xff] 0.0
          %482 = vst [vmem:[#allocation4 + $0x60] sm:$0xff] 0.0
          %483 = vst [vmem:[#allocation4 + $0x68] sm:$0xff] 0.0
          %484 = vst [vmem:[#allocation4 + $0x70] sm:$0xff] 0.0
          %485 = vst [vmem:[#allocation4 + $0x78] sm:$0xff] 0.0
          %486 = vst [vmem:[#allocation4 + $0x80] sm:$0xff] 0.0
          %487 = vst [vmem:[#allocation4 + $0x88] sm:$0xff] 0.0
          %488 = vst [vmem:[#allocation4 + $0x90] sm:$0xff] 0.0
          %489 = vst [vmem:[#allocation4 + $0x98] sm:$0xff] 0.0
          %490 = vst [vmem:[#allocation4 + $0xa0] sm:$0xff] 0.0
          %491 = vst [vmem:[#allocation4 + $0xa8] sm:$0xff] 0.0
          %492 = vst [vmem:[#allocation4 + $0xb0] sm:$0xff] 0.0
          %493 = vst [vmem:[#allocation4 + $0xb8] sm:$0xff] 0.0
          %494 = vst [vmem:[#allocation4 + $0xc0] sm:$0xff] 0.0
          %495 = vst [vmem:[#allocation4 + $0xc8] sm:$0xff] 0.0
          %496 = vst [vmem:[#allocation4 + $0xd0] sm:$0xff] 0.0
          %497 = vst [vmem:[#allocation4 + $0xd8] sm:$0xff] 0.0
          %498 = vst [vmem:[#allocation4 + $0xe0] sm:$0xff] 0.0
          %499 = vst [vmem:[#allocation4 + $0xe8] sm:$0xff] 0.0
          %500 = vst [vmem:[#allocation4 + $0xf0] sm:$0xff] 0.0
          %501 = vst [vmem:[#allocation4 + $0xf8] sm:$0xff] 0.0
          %502 = vst [vmem:[#allocation4 + $0x100] sm:$0x7] 0.0
          %503 = vst [vmem:[#allocation4 + $0x108] sm:$0x7] 0.0
          %504 = vst [vmem:[#allocation4 + $0x110] sm:$0x7] 0.0
          %505 = vst [vmem:[#allocation4 + $0x118] sm:$0x7] 0.0
          %506 = vst [vmem:[#allocation4 + $0x120] sm:$0x7] 0.0
          %507 = vst [vmem:[#allocation4 + $0x128] sm:$0x7] 0.0
          %508 = vst [vmem:[#allocation4 + $0x130] sm:$0x7] 0.0
          %509 = vst [vmem:[#allocation4 + $0x138] sm:$0x7] 0.0
          %510 = vst [vmem:[#allocation4 + $0x140] sm:$0x7] 0.0
          %511 = vst [vmem:[#allocation4 + $0x148] sm:$0x7] 0.0
          %512 = vst [vmem:[#allocation4 + $0x150] sm:$0x7] 0.0
          %513 = vst [vmem:[#allocation4 + $0x158] sm:$0x7] 0.0
          %514 = vst [vmem:[#allocation4 + $0x160] sm:$0x7] 0.0
          %515 = vst [vmem:[#allocation4 + $0x168] sm:$0x7] 0.0
          %516 = vst [vmem:[#allocation4 + $0x170] sm:$0x7] 0.0
          %517 = vst [vmem:[#allocation4 + $0x178] sm:$0x7] 0.0
          %518 = vst [vmem:[#allocation4 + $0x180] sm:$0x7] 0.0
          %519 = vst [vmem:[#allocation4 + $0x188] sm:$0x7] 0.0
          %520 = vst [vmem:[#allocation4 + $0x190] sm:$0x7] 0.0
          %521 = vst [vmem:[#allocation4 + $0x198] sm:$0x7] 0.0
          %522 = vst [vmem:[#allocation4 + $0x1a0] sm:$0x7] 0.0
          %523 = vst [vmem:[#allocation4 + $0x1a8] sm:$0x7] 0.0
          %524 = vst [vmem:[#allocation4 + $0x1b0] sm:$0x7] 0.0
          %525 = vst [vmem:[#allocation4 + $0x1b8] sm:$0x7] 0.0
          %526 = vst [vmem:[#allocation4 + $0x1c0] sm:$0x7] 0.0
          %527 = vst [vmem:[#allocation4 + $0x1c8] sm:$0x7] 0.0
          %528 = vst [vmem:[#allocation4 + $0x1d0] sm:$0x7] 0.0
          %529 = vst [vmem:[#allocation4 + $0x1d8] sm:$0x7] 0.0
          %530 = vst [vmem:[#allocation4 + $0x1e0] sm:$0x7] 0.0
          %531 = vst [vmem:[#allocation4 + $0x1e8] sm:$0x7] 0.0
          %532 = vst [vmem:[#allocation4 + $0x1f0] sm:$0x7] 0.0
          %533 = vst [vmem:[#allocation4 + $0x1f8] sm:$0x7] 0.0
          %534 = vst [vmem:[#allocation5] sm:$0xff] 0.0
          %535 = vst [vmem:[#allocation5 + $0x8] sm:$0xff] 0.0
          %536 = vst [vmem:[#allocation5 + $0x10] sm:$0xff] 0.0
          %537 = vst [vmem:[#allocation5 + $0x18] sm:$0xff] 0.0
        $region40: #{tpu_custom_call.1} parent=27 // pred_fallthru
          _
        %v538 = vld [vmem:[%s262] sm:$0xff]
        %v539 = vld [vmem:[%s262 + $0x8] sm:$0xff]
        %v540 = vld [vmem:[%s262 + $0x10] sm:$0xff]
        %v541 = vld [vmem:[%s262 + $0x18] sm:$0xff]
        %v542 = vld [vmem:[%s262 + $0x20] sm:$0xff]
        %v543 = vld [vmem:[%s262 + $0x28] sm:$0xff]
        %v544 = vld [vmem:[%s262 + $0x30] sm:$0xff]
        %v545 = vld [vmem:[%s262 + $0x38] sm:$0xff]
        %v546 = vld [vmem:[%s262 + $0x40] sm:$0xff]
        %v547 = vld [vmem:[%s262 + $0x48] sm:$0xff]
        %v548 = vld [vmem:[%s262 + $0x50] sm:$0xff]
        %v549 = vld [vmem:[%s262 + $0x58] sm:$0xff]
        %v550 = vld [vmem:[%s262 + $0x60] sm:$0xff]
        %v551 = vld [vmem:[%s262 + $0x68] sm:$0xff]
        %v552 = vld [vmem:[%s262 + $0x70] sm:$0xff]
        %v553 = vld [vmem:[%s262 + $0x78] sm:$0xff]
        %v554 = vld [vmem:[%s262 + $0x80] sm:$0xff]
        %v555 = vld [vmem:[%s262 + $0x88] sm:$0xff]
        %v556 = vld [vmem:[%s262 + $0x90] sm:$0xff]
        %v557 = vld [vmem:[%s262 + $0x98] sm:$0xff]
        %v558 = vld [vmem:[%s262 + $0xa0] sm:$0xff]
        %v559 = vld [vmem:[%s262 + $0xa8] sm:$0xff]
        %v560 = vld [vmem:[%s262 + $0xb0] sm:$0xff]
        %v561 = vld [vmem:[%s262 + $0xb8] sm:$0xff]
        %v562 = vld [vmem:[%s262 + $0xc0] sm:$0xff]
        %v563 = vld [vmem:[%s262 + $0xc8] sm:$0xff]
        %v564 = vld [vmem:[%s262 + $0xd0] sm:$0xff]
        %v565 = vld [vmem:[%s262 + $0xd8] sm:$0xff]
        %v566 = vld [vmem:[%s262 + $0xe0] sm:$0xff]
        %v567 = vld [vmem:[%s262 + $0xe8] sm:$0xff]
        %v568 = vld [vmem:[%s262 + $0xf0] sm:$0xff]
        %v569 = vld [vmem:[%s262 + $0xf8] sm:$0xff]
        %v570 = vld [vmem:[%s262 + $0x100] sm:$0x7]
        %v571 = vld [vmem:[%s262 + $0x108] sm:$0x7]
        %v572 = vld [vmem:[%s262 + $0x110] sm:$0x7]
        %v573 = vld [vmem:[%s262 + $0x118] sm:$0x7]
        %v574 = vld [vmem:[%s262 + $0x120] sm:$0x7]
        %v575 = vld [vmem:[%s262 + $0x128] sm:$0x7]
        %v576 = vld [vmem:[%s262 + $0x130] sm:$0x7]
        %v577 = vld [vmem:[%s262 + $0x138] sm:$0x7]
        %v578 = vld [vmem:[%s262 + $0x140] sm:$0x7]
        %v579 = vld [vmem:[%s262 + $0x148] sm:$0x7]
        %v580 = vld [vmem:[%s262 + $0x150] sm:$0x7]
        %v581 = vld [vmem:[%s262 + $0x158] sm:$0x7]
        %v582 = vld [vmem:[%s262 + $0x160] sm:$0x7]
        %v583 = vld [vmem:[%s262 + $0x168] sm:$0x7]
        %v584 = vld [vmem:[%s262 + $0x170] sm:$0x7]
        %v585 = vld [vmem:[%s262 + $0x178] sm:$0x7]
        %v586 = vld [vmem:[%s262 + $0x180] sm:$0x7]
        %v587 = vld [vmem:[%s262 + $0x188] sm:$0x7]
        %v588 = vld [vmem:[%s262 + $0x190] sm:$0x7]
        %v589 = vld [vmem:[%s262 + $0x198] sm:$0x7]
        %v590 = vld [vmem:[%s262 + $0x1a0] sm:$0x7]
        %v591 = vld [vmem:[%s262 + $0x1a8] sm:$0x7]
        %v592 = vld [vmem:[%s262 + $0x1b0] sm:$0x7]
        %v593 = vld [vmem:[%s262 + $0x1b8] sm:$0x7]
        %v594 = vld [vmem:[%s262 + $0x1c0] sm:$0x7]
        %v595 = vld [vmem:[%s262 + $0x1c8] sm:$0x7]
        %v596 = vld [vmem:[%s262 + $0x1d0] sm:$0x7]
        %v597 = vld [vmem:[%s262 + $0x1d8] sm:$0x7]
        %v598 = vld [vmem:[%s262 + $0x1e0] sm:$0x7]
        %v599 = vld [vmem:[%s262 + $0x1e8] sm:$0x7]
        %v600 = vld [vmem:[%s262 + $0x1f0] sm:$0x7]
        %v601 = vld [vmem:[%s262 + $0x1f8] sm:$0x7]
        %v602 = vld [vmem:[%s271] sm:$0xff]
        %v603 = vld [vmem:[%s271 + $0x8] sm:$0xff]
        %v604 = vld [vmem:[%s271 + $0x10] sm:$0xff]
        %v605 = vld [vmem:[%s271 + $0x18] sm:$0xff]
        %v606 = vlaneseq
        %v607 = vshrl.u32 %v606, 7
        %v608 = vadd.s32 %v607, 8
        %v609 = vlaneseq
        %v610 = vshrl.u32 %v609, 7
        %v611 = vsub.s32 0, %v610
        %v612 = vrot.slane %v602, %v611
        %v613 = vlaneseq
        %v614 = vshrl.u32 %v613, 7
        %v615 = vsub.s32 1, %v614
        %v616 = vrot.slane %v602, %v615
        %v617 = vlaneseq
        %v618 = vshrl.u32 %v617, 7
        %v619 = vsub.s32 2, %v618
        %v620 = vrot.slane %v602, %v619
        %v621 = vlaneseq
        %v622 = vshrl.u32 %v621, 7
        %v623 = vsub.s32 3, %v622
        %v624 = vrot.slane %v602, %v623
        %v625 = vlaneseq
        %v626 = vshrl.u32 %v625, 7
        %v627 = vsub.s32 4, %v626
        %v628 = vrot.slane %v602, %v627
        %v629 = vlaneseq
        %v630 = vshrl.u32 %v629, 7
        %v631 = vsub.s32 5, %v630
        %v632 = vrot.slane %v602, %v631
        %v633 = vlaneseq
        %v634 = vshrl.u32 %v633, 7
        %v635 = vsub.s32 6, %v634
        %v636 = vrot.slane %v602, %v635
        %v637 = vlaneseq
        %v638 = vshrl.u32 %v637, 7
        %v639 = vsub.s32 7, %v638
        %v640 = vrot.slane %v602, %v639
        %v641 = vlaneseq
        %v642 = vshrl.u32 %v641, 7
        %v643 = vsub.s32 0, %v642
        %v644 = vrot.slane %v603, %v643
        %v645 = vlaneseq
        %v646 = vshrl.u32 %v645, 7
        %v647 = vsub.s32 1, %v646
        %v648 = vrot.slane %v603, %v647
        %v649 = vlaneseq
        %v650 = vshrl.u32 %v649, 7
        %v651 = vsub.s32 2, %v650
        %v652 = vrot.slane %v603, %v651
        %v653 = vlaneseq
        %v654 = vshrl.u32 %v653, 7
        %v655 = vsub.s32 3, %v654
        %v656 = vrot.slane %v603, %v655
        %v657 = vlaneseq
        %v658 = vshrl.u32 %v657, 7
        %v659 = vsub.s32 4, %v658
        %v660 = vrot.slane %v603, %v659
        %v661 = vlaneseq
        %v662 = vshrl.u32 %v661, 7
        %v663 = vsub.s32 5, %v662
        %v664 = vrot.slane %v603, %v663
        %v665 = vlaneseq
        %v666 = vshrl.u32 %v665, 7
        %v667 = vsub.s32 6, %v666
        %v668 = vrot.slane %v603, %v667
        %v669 = vlaneseq
        %v670 = vshrl.u32 %v669, 7
        %v671 = vsub.s32 7, %v670
        %v672 = vrot.slane %v603, %v671
        %v673 = vlaneseq
        %v674 = vshrl.u32 %v673, 7
        %v675 = vsub.s32 0, %v674
        %v676 = vrot.slane %v604, %v675
        %v677 = vlaneseq
        %v678 = vshrl.u32 %v677, 7
        %v679 = vsub.s32 1, %v678
        %v680 = vrot.slane %v604, %v679
        %v681 = vlaneseq
        %v682 = vshrl.u32 %v681, 7
        %v683 = vsub.s32 2, %v682
        %v684 = vrot.slane %v604, %v683
        %v685 = vlaneseq
        %v686 = vshrl.u32 %v685, 7
        %v687 = vsub.s32 3, %v686
        %v688 = vrot.slane %v604, %v687
        %v689 = vlaneseq
        %v690 = vshrl.u32 %v689, 7
        %v691 = vsub.s32 4, %v690
        %v692 = vrot.slane %v604, %v691
        %v693 = vlaneseq
        %v694 = vshrl.u32 %v693, 7
        %v695 = vsub.s32 5, %v694
        %v696 = vrot.slane %v604, %v695
        %v697 = vlaneseq
        %v698 = vshrl.u32 %v697, 7
        %v699 = vsub.s32 6, %v698
        %v700 = vrot.slane %v604, %v699
        %v701 = vlaneseq
        %v702 = vshrl.u32 %v701, 7
        %v703 = vsub.s32 7, %v702
        %v704 = vrot.slane %v604, %v703
        %v705 = vlaneseq
        %v706 = vshrl.u32 %v705, 7
        %v707 = vsub.s32 0, %v706
        %v708 = vrot.slane %v605, %v707
        %v709 = vlaneseq
        %v710 = vshrl.u32 %v709, 7
        %v711 = vsub.s32 1, %v710
        %v712 = vrot.slane %v605, %v711
        %v713 = vlaneseq
        %v714 = vshrl.u32 %v713, 7
        %v715 = vsub.s32 2, %v714
        %v716 = vrot.slane %v605, %v715
        %v717 = vlaneseq
        %v718 = vshrl.u32 %v717, 7
        %v719 = vsub.s32 3, %v718
        %v720 = vrot.slane %v605, %v719
        %v721 = vlaneseq
        %v722 = vshrl.u32 %v721, 7
        %v723 = vsub.s32 4, %v722
        %v724 = vrot.slane %v605, %v723
        %v725 = vlaneseq
        %v726 = vshrl.u32 %v725, 7
        %v727 = vsub.s32 5, %v726
        %v728 = vrot.slane %v605, %v727
        %v729 = vlaneseq
        %v730 = vshrl.u32 %v729, 7
        %v731 = vsub.s32 6, %v730
        %v732 = vrot.slane %v605, %v731
        %v733 = vlaneseq
        %v734 = vshrl.u32 %v733, 7
        %v735 = vsub.s32 7, %v734
        %v736 = vrot.slane %v605, %v735
        %vm737 = vcmp.eq.s32.totalorder %v607, %v612
        %vm738 = vcmp.eq.s32.totalorder %v607, %v616
        %vm739 = vcmp.eq.s32.totalorder %v607, %v620
        %vm740 = vcmp.eq.s32.totalorder %v607, %v624
        %vm741 = vcmp.eq.s32.totalorder %v607, %v628
        %vm742 = vcmp.eq.s32.totalorder %v607, %v632
        %vm743 = vcmp.eq.s32.totalorder %v607, %v636
        %vm744 = vcmp.eq.s32.totalorder %v607, %v640
        %vm745 = vcmp.eq.s32.totalorder %v607, %v644
        %vm746 = vcmp.eq.s32.totalorder %v607, %v648
        %vm747 = vcmp.eq.s32.totalorder %v607, %v652
        %vm748 = vcmp.eq.s32.totalorder %v607, %v656
        %vm749 = vcmp.eq.s32.totalorder %v607, %v660
        %vm750 = vcmp.eq.s32.totalorder %v607, %v664
        %vm751 = vcmp.eq.s32.totalorder %v607, %v668
        %vm752 = vcmp.eq.s32.totalorder %v607, %v672
        %vm753 = vcmp.eq.s32.totalorder %v607, %v676
        %vm754 = vcmp.eq.s32.totalorder %v607, %v680
        %vm755 = vcmp.eq.s32.totalorder %v607, %v684
        %vm756 = vcmp.eq.s32.totalorder %v607, %v688
        %vm757 = vcmp.eq.s32.totalorder %v607, %v692
        %vm758 = vcmp.eq.s32.totalorder %v607, %v696
        %vm759 = vcmp.eq.s32.totalorder %v607, %v700
        %vm760 = vcmp.eq.s32.totalorder %v607, %v704
        %vm761 = vcmp.eq.s32.totalorder %v607, %v708
        %vm762 = vcmp.eq.s32.totalorder %v607, %v712
        %vm763 = vcmp.eq.s32.totalorder %v607, %v716
        %vm764 = vcmp.eq.s32.totalorder %v607, %v720
        %vm765 = vcmp.eq.s32.totalorder %v607, %v724
        %vm766 = vcmp.eq.s32.totalorder %v607, %v728
        %vm767 = vcmp.eq.s32.totalorder %v607, %v732
        %vm768 = vcmp.eq.s32.totalorder %v607, %v736
        %vm769 = vcmp.eq.s32.totalorder %v608, %v612
        %vm770 = vcmp.eq.s32.totalorder %v608, %v616
        %vm771 = vcmp.eq.s32.totalorder %v608, %v620
        %vm772 = vcmp.eq.s32.totalorder %v608, %v624
        %vm773 = vcmp.eq.s32.totalorder %v608, %v628
        %vm774 = vcmp.eq.s32.totalorder %v608, %v632
        %vm775 = vcmp.eq.s32.totalorder %v608, %v636
        %vm776 = vcmp.eq.s32.totalorder %v608, %v640
        %vm777 = vcmp.eq.s32.totalorder %v608, %v644
        %vm778 = vcmp.eq.s32.totalorder %v608, %v648
        %vm779 = vcmp.eq.s32.totalorder %v608, %v652
        %vm780 = vcmp.eq.s32.totalorder %v608, %v656
        %vm781 = vcmp.eq.s32.totalorder %v608, %v660
        %vm782 = vcmp.eq.s32.totalorder %v608, %v664
        %vm783 = vcmp.eq.s32.totalorder %v608, %v668
        %vm784 = vcmp.eq.s32.totalorder %v608, %v672
        %vm785 = vcmp.eq.s32.totalorder %v608, %v676
        %vm786 = vcmp.eq.s32.totalorder %v608, %v680
        %vm787 = vcmp.eq.s32.totalorder %v608, %v684
        %vm788 = vcmp.eq.s32.totalorder %v608, %v688
        %vm789 = vcmp.eq.s32.totalorder %v608, %v692
        %vm790 = vcmp.eq.s32.totalorder %v608, %v696
        %vm791 = vcmp.eq.s32.totalorder %v608, %v700
        %vm792 = vcmp.eq.s32.totalorder %v608, %v704
        %vm793 = vcmp.eq.s32.totalorder %v608, %v708
        %vm794 = vcmp.eq.s32.totalorder %v608, %v712
        %vm795 = vcmp.eq.s32.totalorder %v608, %v716
        %vm796 = vcmp.eq.s32.totalorder %v608, %v720
        %vm797 = vcmp.eq.s32.totalorder %v608, %v724
        %vm798 = vcmp.eq.s32.totalorder %v608, %v728
        %vm799 = vcmp.eq.s32.totalorder %v608, %v732
        %vm800 = vcmp.eq.s32.totalorder %v608, %v736
        %v801 = vsel %vm737, 1, 0
        %v802 = vsel %vm738, 1, 0
        %v803 = vsel %vm739, 1, 0
        %v804 = vsel %vm740, 1, 0
        %v805 = vsel %vm741, 1, 0
        %v806 = vsel %vm742, 1, 0
        %v807 = vsel %vm743, 1, 0
        %v808 = vsel %vm744, 1, 0
        %v809 = vsel %vm745, 1, 0
        %v810 = vsel %vm746, 1, 0
        %v811 = vsel %vm747, 1, 0
        %v812 = vsel %vm748, 1, 0
        %v813 = vsel %vm749, 1, 0
        %v814 = vsel %vm750, 1, 0
        %v815 = vsel %vm751, 1, 0
        %v816 = vsel %vm752, 1, 0
        %v817 = vsel %vm753, 1, 0
        %v818 = vsel %vm754, 1, 0
        %v819 = vsel %vm755, 1, 0
        %v820 = vsel %vm756, 1, 0
        %v821 = vsel %vm757, 1, 0
        %v822 = vsel %vm758, 1, 0
        %v823 = vsel %vm759, 1, 0
        %v824 = vsel %vm760, 1, 0
        %v825 = vsel %vm761, 1, 0
        %v826 = vsel %vm762, 1, 0
        %v827 = vsel %vm763, 1, 0
        %v828 = vsel %vm764, 1, 0
        %v829 = vsel %vm765, 1, 0
        %v830 = vsel %vm766, 1, 0
        %v831 = vsel %vm767, 1, 0
        %v832 = vsel %vm768, 1, 0
        %v833 = vsel %vm769, 1, 0
        %v834 = vsel %vm770, 1, 0
        %v835 = vsel %vm771, 1, 0
        %v836 = vsel %vm772, 1, 0
        %v837 = vsel %vm773, 1, 0
        %v838 = vsel %vm774, 1, 0
        %v839 = vsel %vm775, 1, 0
        %v840 = vsel %vm776, 1, 0
        %v841 = vsel %vm777, 1, 0
        %v842 = vsel %vm778, 1, 0
        %v843 = vsel %vm779, 1, 0
        %v844 = vsel %vm780, 1, 0
        %v845 = vsel %vm781, 1, 0
        %v846 = vsel %vm782, 1, 0
        %v847 = vsel %vm783, 1, 0
        %v848 = vsel %vm784, 1, 0
        %v849 = vsel %vm785, 1, 0
        %v850 = vsel %vm786, 1, 0
        %v851 = vsel %vm787, 1, 0
        %v852 = vsel %vm788, 1, 0
        %v853 = vsel %vm789, 1, 0
        %v854 = vsel %vm790, 1, 0
        %v855 = vsel %vm791, 1, 0
        %v856 = vsel %vm792, 1, 0
        %v857 = vsel %vm793, 1, 0
        %v858 = vsel %vm794, 1, 0
        %v859 = vsel %vm795, 1, 0
        %v860 = vsel %vm796, 1, 0
        %v861 = vsel %vm797, 1, 0
        %v862 = vsel %vm798, 1, 0
        %v863 = vsel %vm799, 1, 0
        %v864 = vsel %vm800, 1, 0
        %v865 = vcvt.s32.f32 %v801
        %v866 = vcvt.s32.f32 %v802
        %v867 = vcvt.s32.f32 %v803
        %v868 = vcvt.s32.f32 %v804
        %v869 = vcvt.s32.f32 %v805
        %v870 = vcvt.s32.f32 %v806
        %v871 = vcvt.s32.f32 %v807
        %v872 = vcvt.s32.f32 %v808
        %v873 = vcvt.s32.f32 %v809
        %v874 = vcvt.s32.f32 %v810
        %v875 = vcvt.s32.f32 %v811
        %v876 = vcvt.s32.f32 %v812
        %v877 = vcvt.s32.f32 %v813
        %v878 = vcvt.s32.f32 %v814
        %v879 = vcvt.s32.f32 %v815
        %v880 = vcvt.s32.f32 %v816
        %v881 = vcvt.s32.f32 %v817
        %v882 = vcvt.s32.f32 %v818
        %v883 = vcvt.s32.f32 %v819
        %v884 = vcvt.s32.f32 %v820
        %v885 = vcvt.s32.f32 %v821
        %v886 = vcvt.s32.f32 %v822
        %v887 = vcvt.s32.f32 %v823
        %v888 = vcvt.s32.f32 %v824
        %v889 = vcvt.s32.f32 %v825
        %v890 = vcvt.s32.f32 %v826
        %v891 = vcvt.s32.f32 %v827
        %v892 = vcvt.s32.f32 %v828
        %v893 = vcvt.s32.f32 %v829
        %v894 = vcvt.s32.f32 %v830
        %v895 = vcvt.s32.f32 %v831
        %v896 = vcvt.s32.f32 %v832
        %v897 = vcvt.s32.f32 %v833
        %v898 = vcvt.s32.f32 %v834
        %v899 = vcvt.s32.f32 %v835
        %v900 = vcvt.s32.f32 %v836
        %v901 = vcvt.s32.f32 %v837
        %v902 = vcvt.s32.f32 %v838
        %v903 = vcvt.s32.f32 %v839
        %v904 = vcvt.s32.f32 %v840
        %v905 = vcvt.s32.f32 %v841
        %v906 = vcvt.s32.f32 %v842
        %v907 = vcvt.s32.f32 %v843
        %v908 = vcvt.s32.f32 %v844
        %v909 = vcvt.s32.f32 %v845
        %v910 = vcvt.s32.f32 %v846
        %v911 = vcvt.s32.f32 %v847
        %v912 = vcvt.s32.f32 %v848
        %v913 = vcvt.s32.f32 %v849
        %v914 = vcvt.s32.f32 %v850
        %v915 = vcvt.s32.f32 %v851
        %v916 = vcvt.s32.f32 %v852
        %v917 = vcvt.s32.f32 %v853
        %v918 = vcvt.s32.f32 %v854
        %v919 = vcvt.s32.f32 %v855
        %v920 = vcvt.s32.f32 %v856
        %v921 = vcvt.s32.f32 %v857
        %v922 = vcvt.s32.f32 %v858
        %v923 = vcvt.s32.f32 %v859
        %v924 = vcvt.s32.f32 %v860
        %v925 = vcvt.s32.f32 %v861
        %v926 = vcvt.s32.f32 %v862
        %v927 = vcvt.s32.f32 %v863
        %v928 = vcvt.s32.f32 %v864
        %vm929 = vcmask 1042432
        %v930 = vsel %vm929, %v570, -inf
        %v931 = vmax.f32 %v538, %v930
        %v932 = vrot.slane %v931, 4
        %v933 = vmax.f32 %v931, %v932
        %v934 = vrot.slane %v933, 2
        %v935 = vmax.f32 %v933, %v934
        %v936 = vrot.slane %v935, 1
        %v937 = vmax.f32 %v935, %v936
        %v938 = vsel %vm929, %v571, -inf
        %v939 = vmax.f32 %v539, %v938
        %v940 = vrot.slane %v939, 4
        %v941 = vmax.f32 %v939, %v940
        %v942 = vrot.slane %v941, 2
        %v943 = vmax.f32 %v941, %v942
        %v944 = vrot.slane %v943, 1
        %v945 = vmax.f32 %v943, %v944
        %v946 = vsel %vm929, %v572, -inf
        %v947 = vmax.f32 %v540, %v946
        %v948 = vrot.slane %v947, 4
        %v949 = vmax.f32 %v947, %v948
        %v950 = vrot.slane %v949, 2
        %v951 = vmax.f32 %v949, %v950
        %v952 = vrot.slane %v951, 1
        %v953 = vmax.f32 %v951, %v952
        %v954 = vsel %vm929, %v573, -inf
        %v955 = vmax.f32 %v541, %v954
        %v956 = vrot.slane %v955, 4
        %v957 = vmax.f32 %v955, %v956
        %v958 = vrot.slane %v957, 2
        %v959 = vmax.f32 %v957, %v958
        %v960 = vrot.slane %v959, 1
        %v961 = vmax.f32 %v959, %v960
        %v962 = vsel %vm929, %v574, -inf
        %v963 = vmax.f32 %v542, %v962
        %v964 = vrot.slane %v963, 4
        %v965 = vmax.f32 %v963, %v964
        %v966 = vrot.slane %v965, 2
        %v967 = vmax.f32 %v965, %v966
        %v968 = vrot.slane %v967, 1
        %v969 = vmax.f32 %v967, %v968
        %v970 = vsel %vm929, %v575, -inf
        %v971 = vmax.f32 %v543, %v970
        %v972 = vrot.slane %v971, 4
        %v973 = vmax.f32 %v971, %v972
        %v974 = vrot.slane %v973, 2
        %v975 = vmax.f32 %v973, %v974
        %v976 = vrot.slane %v975, 1
        %v977 = vmax.f32 %v975, %v976
        %v978 = vsel %vm929, %v576, -inf
        %v979 = vmax.f32 %v544, %v978
        %v980 = vrot.slane %v979, 4
        %v981 = vmax.f32 %v979, %v980
        %v982 = vrot.slane %v981, 2
        %v983 = vmax.f32 %v981, %v982
        %v984 = vrot.slane %v983, 1
        %v985 = vmax.f32 %v983, %v984
        %v986 = vsel %vm929, %v577, -inf
        %v987 = vmax.f32 %v545, %v986
        %v988 = vrot.slane %v987, 4
        %v989 = vmax.f32 %v987, %v988
        %v990 = vrot.slane %v989, 2
        %v991 = vmax.f32 %v989, %v990
        %v992 = vrot.slane %v991, 1
        %v993 = vmax.f32 %v991, %v992
        %v994 = vsel %vm929, %v578, -inf
        %v995 = vmax.f32 %v546, %v994
        %v996 = vrot.slane %v995, 4
        %v997 = vmax.f32 %v995, %v996
        %v998 = vrot.slane %v997, 2
        %v999 = vmax.f32 %v997, %v998
        %v1000 = vrot.slane %v999, 1
        %v1001 = vmax.f32 %v999, %v1000
        %v1002 = vsel %vm929, %v579, -inf
        %v1003 = vmax.f32 %v547, %v1002
        %v1004 = vrot.slane %v1003, 4
        %v1005 = vmax.f32 %v1003, %v1004
        %v1006 = vrot.slane %v1005, 2
        %v1007 = vmax.f32 %v1005, %v1006
        %v1008 = vrot.slane %v1007, 1
        %v1009 = vmax.f32 %v1007, %v1008
        %v1010 = vsel %vm929, %v580, -inf
        %v1011 = vmax.f32 %v548, %v1010
        %v1012 = vrot.slane %v1011, 4
        %v1013 = vmax.f32 %v1011, %v1012
        %v1014 = vrot.slane %v1013, 2
        %v1015 = vmax.f32 %v1013, %v1014
        %v1016 = vrot.slane %v1015, 1
        %v1017 = vmax.f32 %v1015, %v1016
        %v1018 = vsel %vm929, %v581, -inf
        %v1019 = vmax.f32 %v549, %v1018
        %v1020 = vrot.slane %v1019, 4
        %v1021 = vmax.f32 %v1019, %v1020
        %v1022 = vrot.slane %v1021, 2
        %v1023 = vmax.f32 %v1021, %v1022
        %v1024 = vrot.slane %v1023, 1
        %v1025 = vmax.f32 %v1023, %v1024
        %v1026 = vsel %vm929, %v582, -inf
        %v1027 = vmax.f32 %v550, %v1026
        %v1028 = vrot.slane %v1027, 4
        %v1029 = vmax.f32 %v1027, %v1028
        %v1030 = vrot.slane %v1029, 2
        %v1031 = vmax.f32 %v1029, %v1030
        %v1032 = vrot.slane %v1031, 1
        %v1033 = vmax.f32 %v1031, %v1032
        %v1034 = vsel %vm929, %v583, -inf
        %v1035 = vmax.f32 %v551, %v1034
        %v1036 = vrot.slane %v1035, 4
        %v1037 = vmax.f32 %v1035, %v1036
        %v1038 = vrot.slane %v1037, 2
        %v1039 = vmax.f32 %v1037, %v1038
        %v1040 = vrot.slane %v1039, 1
        %v1041 = vmax.f32 %v1039, %v1040
        %v1042 = vsel %vm929, %v584, -inf
        %v1043 = vmax.f32 %v552, %v1042
        %v1044 = vrot.slane %v1043, 4
        %v1045 = vmax.f32 %v1043, %v1044
        %v1046 = vrot.slane %v1045, 2
        %v1047 = vmax.f32 %v1045, %v1046
        %v1048 = vrot.slane %v1047, 1
        %v1049 = vmax.f32 %v1047, %v1048
        %v1050 = vsel %vm929, %v585, -inf
        %v1051 = vmax.f32 %v553, %v1050
        %v1052 = vrot.slane %v1051, 4
        %v1053 = vmax.f32 %v1051, %v1052
        %v1054 = vrot.slane %v1053, 2
        %v1055 = vmax.f32 %v1053, %v1054
        %v1056 = vrot.slane %v1055, 1
        %v1057 = vmax.f32 %v1055, %v1056
        %v1058 = vsel %vm929, %v586, -inf
        %v1059 = vmax.f32 %v554, %v1058
        %v1060 = vrot.slane %v1059, 4
        %v1061 = vmax.f32 %v1059, %v1060
        %v1062 = vrot.slane %v1061, 2
        %v1063 = vmax.f32 %v1061, %v1062
        %v1064 = vrot.slane %v1063, 1
        %v1065 = vmax.f32 %v1063, %v1064
        %v1066 = vsel %vm929, %v587, -inf
        %v1067 = vmax.f32 %v555, %v1066
        %v1068 = vrot.slane %v1067, 4
        %v1069 = vmax.f32 %v1067, %v1068
        %v1070 = vrot.slane %v1069, 2
        %v1071 = vmax.f32 %v1069, %v1070
        %v1072 = vrot.slane %v1071, 1
        %v1073 = vmax.f32 %v1071, %v1072
        %v1074 = vsel %vm929, %v588, -inf
        %v1075 = vmax.f32 %v556, %v1074
        %v1076 = vrot.slane %v1075, 4
        %v1077 = vmax.f32 %v1075, %v1076
        %v1078 = vrot.slane %v1077, 2
        %v1079 = vmax.f32 %v1077, %v1078
        %v1080 = vrot.slane %v1079, 1
        %v1081 = vmax.f32 %v1079, %v1080
        %v1082 = vsel %vm929, %v589, -inf
        %v1083 = vmax.f32 %v557, %v1082
        %v1084 = vrot.slane %v1083, 4
        %v1085 = vmax.f32 %v1083, %v1084
        %v1086 = vrot.slane %v1085, 2
        %v1087 = vmax.f32 %v1085, %v1086
        %v1088 = vrot.slane %v1087, 1
        %v1089 = vmax.f32 %v1087, %v1088
        %v1090 = vsel %vm929, %v590, -inf
        %v1091 = vmax.f32 %v558, %v1090
        %v1092 = vrot.slane %v1091, 4
        %v1093 = vmax.f32 %v1091, %v1092
        %v1094 = vrot.slane %v1093, 2
        %v1095 = vmax.f32 %v1093, %v1094
        %v1096 = vrot.slane %v1095, 1
        %v1097 = vmax.f32 %v1095, %v1096
        %v1098 = vsel %vm929, %v591, -inf
        %v1099 = vmax.f32 %v559, %v1098
        %v1100 = vrot.slane %v1099, 4
        %v1101 = vmax.f32 %v1099, %v1100
        %v1102 = vrot.slane %v1101, 2
        %v1103 = vmax.f32 %v1101, %v1102
        %v1104 = vrot.slane %v1103, 1
        %v1105 = vmax.f32 %v1103, %v1104
        %v1106 = vsel %vm929, %v592, -inf
        %v1107 = vmax.f32 %v560, %v1106
        %v1108 = vrot.slane %v1107, 4
        %v1109 = vmax.f32 %v1107, %v1108
        %v1110 = vrot.slane %v1109, 2
        %v1111 = vmax.f32 %v1109, %v1110
        %v1112 = vrot.slane %v1111, 1
        %v1113 = vmax.f32 %v1111, %v1112
        %v1114 = vsel %vm929, %v593, -inf
        %v1115 = vmax.f32 %v561, %v1114
        %v1116 = vrot.slane %v1115, 4
        %v1117 = vmax.f32 %v1115, %v1116
        %v1118 = vrot.slane %v1117, 2
        %v1119 = vmax.f32 %v1117, %v1118
        %v1120 = vrot.slane %v1119, 1
        %v1121 = vmax.f32 %v1119, %v1120
        %v1122 = vsel %vm929, %v594, -inf
        %v1123 = vmax.f32 %v562, %v1122
        %v1124 = vrot.slane %v1123, 4
        %v1125 = vmax.f32 %v1123, %v1124
        %v1126 = vrot.slane %v1125, 2
        %v1127 = vmax.f32 %v1125, %v1126
        %v1128 = vrot.slane %v1127, 1
        %v1129 = vmax.f32 %v1127, %v1128
        %v1130 = vsel %vm929, %v595, -inf
        %v1131 = vmax.f32 %v563, %v1130
        %v1132 = vrot.slane %v1131, 4
        %v1133 = vmax.f32 %v1131, %v1132
        %v1134 = vrot.slane %v1133, 2
        %v1135 = vmax.f32 %v1133, %v1134
        %v1136 = vrot.slane %v1135, 1
        %v1137 = vmax.f32 %v1135, %v1136
        %v1138 = vsel %vm929, %v596, -inf
        %v1139 = vmax.f32 %v564, %v1138
        %v1140 = vrot.slane %v1139, 4
        %v1141 = vmax.f32 %v1139, %v1140
        %v1142 = vrot.slane %v1141, 2
        %v1143 = vmax.f32 %v1141, %v1142
        %v1144 = vrot.slane %v1143, 1
        %v1145 = vmax.f32 %v1143, %v1144
        %v1146 = vsel %vm929, %v597, -inf
        %v1147 = vmax.f32 %v565, %v1146
        %v1148 = vrot.slane %v1147, 4
        %v1149 = vmax.f32 %v1147, %v1148
        %v1150 = vrot.slane %v1149, 2
        %v1151 = vmax.f32 %v1149, %v1150
        %v1152 = vrot.slane %v1151, 1
        %v1153 = vmax.f32 %v1151, %v1152
        %v1154 = vsel %vm929, %v598, -inf
        %v1155 = vmax.f32 %v566, %v1154
        %v1156 = vrot.slane %v1155, 4
        %v1157 = vmax.f32 %v1155, %v1156
        %v1158 = vrot.slane %v1157, 2
        %v1159 = vmax.f32 %v1157, %v1158
        %v1160 = vrot.slane %v1159, 1
        %v1161 = vmax.f32 %v1159, %v1160
        %v1162 = vsel %vm929, %v599, -inf
        %v1163 = vmax.f32 %v567, %v1162
        %v1164 = vrot.slane %v1163, 4
        %v1165 = vmax.f32 %v1163, %v1164
        %v1166 = vrot.slane %v1165, 2
        %v1167 = vmax.f32 %v1165, %v1166
        %v1168 = vrot.slane %v1167, 1
        %v1169 = vmax.f32 %v1167, %v1168
        %v1170 = vsel %vm929, %v600, -inf
        %v1171 = vmax.f32 %v568, %v1170
        %v1172 = vrot.slane %v1171, 4
        %v1173 = vmax.f32 %v1171, %v1172
        %v1174 = vrot.slane %v1173, 2
        %v1175 = vmax.f32 %v1173, %v1174
        %v1176 = vrot.slane %v1175, 1
        %v1177 = vmax.f32 %v1175, %v1176
        %v1178 = vsel %vm929, %v601, -inf
        %v1179 = vmax.f32 %v569, %v1178
        %v1180 = vrot.slane %v1179, 4
        %v1181 = vmax.f32 %v1179, %v1180
        %v1182 = vrot.slane %v1181, 2
        %v1183 = vmax.f32 %v1181, %v1182
        %v1184 = vrot.slane %v1183, 1
        %v1185 = vmax.f32 %v1183, %v1184
        %v1186 = vsub.f32 %v538, %v937
        %v1187 = vsub.f32 %v539, %v945
        %v1188 = vsub.f32 %v540, %v953
        %v1189 = vsub.f32 %v541, %v961
        %v1190 = vsub.f32 %v542, %v969
        %v1191 = vsub.f32 %v543, %v977
        %v1192 = vsub.f32 %v544, %v985
        %v1193 = vsub.f32 %v545, %v993
        %v1194 = vsub.f32 %v546, %v1001
        %v1195 = vsub.f32 %v547, %v1009
        %v1196 = vsub.f32 %v548, %v1017
        %v1197 = vsub.f32 %v549, %v1025
        %v1198 = vsub.f32 %v550, %v1033
        %v1199 = vsub.f32 %v551, %v1041
        %v1200 = vsub.f32 %v552, %v1049
        %v1201 = vsub.f32 %v553, %v1057
        %v1202 = vsub.f32 %v554, %v1065
        %v1203 = vsub.f32 %v555, %v1073
        %v1204 = vsub.f32 %v556, %v1081
        %v1205 = vsub.f32 %v557, %v1089
        %v1206 = vsub.f32 %v558, %v1097
        %v1207 = vsub.f32 %v559, %v1105
        %v1208 = vsub.f32 %v560, %v1113
        %v1209 = vsub.f32 %v561, %v1121
        %v1210 = vsub.f32 %v562, %v1129
        %v1211 = vsub.f32 %v563, %v1137
        %v1212 = vsub.f32 %v564, %v1145
        %v1213 = vsub.f32 %v565, %v1153
        %v1214 = vsub.f32 %v566, %v1161
        %v1215 = vsub.f32 %v567, %v1169
        %v1216 = vsub.f32 %v568, %v1177
        %v1217 = vsub.f32 %v569, %v1185
        %v1218 = vsub.f32 %v570, %v937
        %v1219 = vsub.f32 %v571, %v945
        %v1220 = vsub.f32 %v572, %v953
        %v1221 = vsub.f32 %v573, %v961
        %v1222 = vsub.f32 %v574, %v969
        %v1223 = vsub.f32 %v575, %v977
        %v1224 = vsub.f32 %v576, %v985
        %v1225 = vsub.f32 %v577, %v993
        %v1226 = vsub.f32 %v578, %v1001
        %v1227 = vsub.f32 %v579, %v1009
        %v1228 = vsub.f32 %v580, %v1017
        %v1229 = vsub.f32 %v581, %v1025
        %v1230 = vsub.f32 %v582, %v1033
        %v1231 = vsub.f32 %v583, %v1041
        %v1232 = vsub.f32 %v584, %v1049
        %v1233 = vsub.f32 %v585, %v1057
        %v1234 = vsub.f32 %v586, %v1065
        %v1235 = vsub.f32 %v587, %v1073
        %v1236 = vsub.f32 %v588, %v1081
        %v1237 = vsub.f32 %v589, %v1089
        %v1238 = vsub.f32 %v590, %v1097
        %v1239 = vsub.f32 %v591, %v1105
        %v1240 = vsub.f32 %v592, %v1113
        %v1241 = vsub.f32 %v593, %v1121
        %v1242 = vsub.f32 %v594, %v1129
        %v1243 = vsub.f32 %v595, %v1137
        %v1244 = vsub.f32 %v596, %v1145
        %v1245 = vsub.f32 %v597, %v1153
        %v1246 = vsub.f32 %v598, %v1161
        %v1247 = vsub.f32 %v599, %v1169
        %v1248 = vsub.f32 %v600, %v1177
        %v1249 = vsub.f32 %v601, %v1185
        %v1250 = vmul.f32 %v1186, 1.442695
        %v1251 = vpow.pop %v1250
        %v1252 = vmul.f32 %v1187, 1.442695
        %v1253 = vpow.pop %v1252
        %v1254 = vmul.f32 %v1188, 1.442695
        %v1255 = vpow.pop %v1254
        %v1256 = vmul.f32 %v1189, 1.442695
        %v1257 = vpow.pop %v1256
        %v1258 = vmul.f32 %v1190, 1.442695
        %v1259 = vpow.pop %v1258
        %v1260 = vmul.f32 %v1191, 1.442695
        %v1261 = vpow.pop %v1260
        %v1262 = vmul.f32 %v1192, 1.442695
        %v1263 = vpow.pop %v1262
        %v1264 = vmul.f32 %v1193, 1.442695
        %v1265 = vpow.pop %v1264
        %v1266 = vmul.f32 %v1194, 1.442695
        %v1267 = vpow.pop %v1266
        %v1268 = vmul.f32 %v1195, 1.442695
        %v1269 = vpow.pop %v1268
        %v1270 = vmul.f32 %v1196, 1.442695
        %v1271 = vpow.pop %v1270
        %v1272 = vmul.f32 %v1197, 1.442695
        %v1273 = vpow.pop %v1272
        %v1274 = vmul.f32 %v1198, 1.442695
        %v1275 = vpow.pop %v1274
        %v1276 = vmul.f32 %v1199, 1.442695
        %v1277 = vpow.pop %v1276
        %v1278 = vmul.f32 %v1200, 1.442695
        %v1279 = vpow.pop %v1278
        %v1280 = vmul.f32 %v1201, 1.442695
        %v1281 = vpow.pop %v1280
        %v1282 = vmul.f32 %v1202, 1.442695
        %v1283 = vpow.pop %v1282
        %v1284 = vmul.f32 %v1203, 1.442695
        %v1285 = vpow.pop %v1284
        %v1286 = vmul.f32 %v1204, 1.442695
        %v1287 = vpow.pop %v1286
        %v1288 = vmul.f32 %v1205, 1.442695
        %v1289 = vpow.pop %v1288
        %v1290 = vmul.f32 %v1206, 1.442695
        %v1291 = vpow.pop %v1290
        %v1292 = vmul.f32 %v1207, 1.442695
        %v1293 = vpow.pop %v1292
        %v1294 = vmul.f32 %v1208, 1.442695
        %v1295 = vpow.pop %v1294
        %v1296 = vmul.f32 %v1209, 1.442695
        %v1297 = vpow.pop %v1296
        %v1298 = vmul.f32 %v1210, 1.442695
        %v1299 = vpow.pop %v1298
        %v1300 = vmul.f32 %v1211, 1.442695
        %v1301 = vpow.pop %v1300
        %v1302 = vmul.f32 %v1212, 1.442695
        %v1303 = vpow.pop %v1302
        %v1304 = vmul.f32 %v1213, 1.442695
        %v1305 = vpow.pop %v1304
        %v1306 = vmul.f32 %v1214, 1.442695
        %v1307 = vpow.pop %v1306
        %v1308 = vmul.f32 %v1215, 1.442695
        %v1309 = vpow.pop %v1308
        %v1310 = vmul.f32 %v1216, 1.442695
        %v1311 = vpow.pop %v1310
        %v1312 = vmul.f32 %v1217, 1.442695
        %v1313 = vpow.pop %v1312
        %v1314 = vmul.f32 %v1218, 1.442695
        %v1315 = vpow.pop %v1314
        %v1316 = vmul.f32 %v1219, 1.442695
        %v1317 = vpow.pop %v1316
        %v1318 = vmul.f32 %v1220, 1.442695
        %v1319 = vpow.pop %v1318
        %v1320 = vmul.f32 %v1221, 1.442695
        %v1321 = vpow.pop %v1320
        %v1322 = vmul.f32 %v1222, 1.442695
        %v1323 = vpow.pop %v1322
        %v1324 = vmul.f32 %v1223, 1.442695
        %v1325 = vpow.pop %v1324
        %v1326 = vmul.f32 %v1224, 1.442695
        %v1327 = vpow.pop %v1326
        %v1328 = vmul.f32 %v1225, 1.442695
        %v1329 = vpow.pop %v1328
        %v1330 = vmul.f32 %v1226, 1.442695
        %v1331 = vpow.pop %v1330
        %v1332 = vmul.f32 %v1227, 1.442695
        %v1333 = vpow.pop %v1332
        %v1334 = vmul.f32 %v1228, 1.442695
        %v1335 = vpow.pop %v1334
        %v1336 = vmul.f32 %v1229, 1.442695
        %v1337 = vpow.pop %v1336
        %v1338 = vmul.f32 %v1230, 1.442695
        %v1339 = vpow.pop %v1338
        %v1340 = vmul.f32 %v1231, 1.442695
        %v1341 = vpow.pop %v1340
        %v1342 = vmul.f32 %v1232, 1.442695
        %v1343 = vpow.pop %v1342
        %v1344 = vmul.f32 %v1233, 1.442695
        %v1345 = vpow.pop %v1344
        %v1346 = vmul.f32 %v1234, 1.442695
        %v1347 = vpow.pop %v1346
        %v1348 = vmul.f32 %v1235, 1.442695
        %v1349 = vpow.pop %v1348
        %v1350 = vmul.f32 %v1236, 1.442695
        %v1351 = vpow.pop %v1350
        %v1352 = vmul.f32 %v1237, 1.442695
        %v1353 = vpow.pop %v1352
        %v1354 = vmul.f32 %v1238, 1.442695
        %v1355 = vpow.pop %v1354
        %v1356 = vmul.f32 %v1239, 1.442695
        %v1357 = vpow.pop %v1356
        %v1358 = vmul.f32 %v1240, 1.442695
        %v1359 = vpow.pop %v1358
        %v1360 = vmul.f32 %v1241, 1.442695
        %v1361 = vpow.pop %v1360
        %v1362 = vmul.f32 %v1242, 1.442695
        %v1363 = vpow.pop %v1362
        %v1364 = vmul.f32 %v1243, 1.442695
        %v1365 = vpow.pop %v1364
        %v1366 = vmul.f32 %v1244, 1.442695
        %v1367 = vpow.pop %v1366
        %v1368 = vmul.f32 %v1245, 1.442695
        %v1369 = vpow.pop %v1368
        %v1370 = vmul.f32 %v1246, 1.442695
        %v1371 = vpow.pop %v1370
        %v1372 = vmul.f32 %v1247, 1.442695
        %v1373 = vpow.pop %v1372
        %v1374 = vmul.f32 %v1248, 1.442695
        %v1375 = vpow.pop %v1374
        %v1376 = vmul.f32 %v1249, 1.442695
        %v1377 = vpow.pop %v1376
        %v1378 = vsel %vm929, %v1315, 0.0
        %v1379 = vadd.f32 %v1251, %v1378
        %v1380 = vrot.slane %v1379, 4
        %v1381 = vadd.f32 %v1379, %v1380
        %v1382 = vrot.slane %v1381, 2
        %v1383 = vadd.f32 %v1381, %v1382
        %v1384 = vrot.slane %v1383, 1
        %v1385 = vadd.f32 %v1383, %v1384
        %v1386 = vsel %vm929, %v1317, 0.0
        %v1387 = vadd.f32 %v1253, %v1386
        %v1388 = vrot.slane %v1387, 4
        %v1389 = vadd.f32 %v1387, %v1388
        %v1390 = vrot.slane %v1389, 2
        %v1391 = vadd.f32 %v1389, %v1390
        %v1392 = vrot.slane %v1391, 1
        %v1393 = vadd.f32 %v1391, %v1392
        %v1394 = vsel %vm929, %v1319, 0.0
        %v1395 = vadd.f32 %v1255, %v1394
        %v1396 = vrot.slane %v1395, 4
        %v1397 = vadd.f32 %v1395, %v1396
        %v1398 = vrot.slane %v1397, 2
        %v1399 = vadd.f32 %v1397, %v1398
        %v1400 = vrot.slane %v1399, 1
        %v1401 = vadd.f32 %v1399, %v1400
        %v1402 = vsel %vm929, %v1321, 0.0
        %v1403 = vadd.f32 %v1257, %v1402
        %v1404 = vrot.slane %v1403, 4
        %v1405 = vadd.f32 %v1403, %v1404
        %v1406 = vrot.slane %v1405, 2
        %v1407 = vadd.f32 %v1405, %v1406
        %v1408 = vrot.slane %v1407, 1
        %v1409 = vadd.f32 %v1407, %v1408
        %v1410 = vsel %vm929, %v1323, 0.0
        %v1411 = vadd.f32 %v1259, %v1410
        %v1412 = vrot.slane %v1411, 4
        %v1413 = vadd.f32 %v1411, %v1412
        %v1414 = vrot.slane %v1413, 2
        %v1415 = vadd.f32 %v1413, %v1414
        %v1416 = vrot.slane %v1415, 1
        %v1417 = vadd.f32 %v1415, %v1416
        %v1418 = vsel %vm929, %v1325, 0.0
        %v1419 = vadd.f32 %v1261, %v1418
        %v1420 = vrot.slane %v1419, 4
        %v1421 = vadd.f32 %v1419, %v1420
        %v1422 = vrot.slane %v1421, 2
        %v1423 = vadd.f32 %v1421, %v1422
        %v1424 = vrot.slane %v1423, 1
        %v1425 = vadd.f32 %v1423, %v1424
        %v1426 = vsel %vm929, %v1327, 0.0
        %v1427 = vadd.f32 %v1263, %v1426
        %v1428 = vrot.slane %v1427, 4
        %v1429 = vadd.f32 %v1427, %v1428
        %v1430 = vrot.slane %v1429, 2
        %v1431 = vadd.f32 %v1429, %v1430
        %v1432 = vrot.slane %v1431, 1
        %v1433 = vadd.f32 %v1431, %v1432
        %v1434 = vsel %vm929, %v1329, 0.0
        %v1435 = vadd.f32 %v1265, %v1434
        %v1436 = vrot.slane %v1435, 4
        %v1437 = vadd.f32 %v1435, %v1436
        %v1438 = vrot.slane %v1437, 2
        %v1439 = vadd.f32 %v1437, %v1438
        %v1440 = vrot.slane %v1439, 1
        %v1441 = vadd.f32 %v1439, %v1440
        %v1442 = vsel %vm929, %v1331, 0.0
        %v1443 = vadd.f32 %v1267, %v1442
        %v1444 = vrot.slane %v1443, 4
        %v1445 = vadd.f32 %v1443, %v1444
        %v1446 = vrot.slane %v1445, 2
        %v1447 = vadd.f32 %v1445, %v1446
        %v1448 = vrot.slane %v1447, 1
        %v1449 = vadd.f32 %v1447, %v1448
        %v1450 = vsel %vm929, %v1333, 0.0
        %v1451 = vadd.f32 %v1269, %v1450
        %v1452 = vrot.slane %v1451, 4
        %v1453 = vadd.f32 %v1451, %v1452
        %v1454 = vrot.slane %v1453, 2
        %v1455 = vadd.f32 %v1453, %v1454
        %v1456 = vrot.slane %v1455, 1
        %v1457 = vadd.f32 %v1455, %v1456
        %v1458 = vsel %vm929, %v1335, 0.0
        %v1459 = vadd.f32 %v1271, %v1458
        %v1460 = vrot.slane %v1459, 4
        %v1461 = vadd.f32 %v1459, %v1460
        %v1462 = vrot.slane %v1461, 2
        %v1463 = vadd.f32 %v1461, %v1462
        %v1464 = vrot.slane %v1463, 1
        %v1465 = vadd.f32 %v1463, %v1464
        %v1466 = vsel %vm929, %v1337, 0.0
        %v1467 = vadd.f32 %v1273, %v1466
        %v1468 = vrot.slane %v1467, 4
        %v1469 = vadd.f32 %v1467, %v1468
        %v1470 = vrot.slane %v1469, 2
        %v1471 = vadd.f32 %v1469, %v1470
        %v1472 = vrot.slane %v1471, 1
        %v1473 = vadd.f32 %v1471, %v1472
        %v1474 = vsel %vm929, %v1339, 0.0
        %v1475 = vadd.f32 %v1275, %v1474
        %v1476 = vrot.slane %v1475, 4
        %v1477 = vadd.f32 %v1475, %v1476
        %v1478 = vrot.slane %v1477, 2
        %v1479 = vadd.f32 %v1477, %v1478
        %v1480 = vrot.slane %v1479, 1
        %v1481 = vadd.f32 %v1479, %v1480
        %v1482 = vsel %vm929, %v1341, 0.0
        %v1483 = vadd.f32 %v1277, %v1482
        %v1484 = vrot.slane %v1483, 4
        %v1485 = vadd.f32 %v1483, %v1484
        %v1486 = vrot.slane %v1485, 2
        %v1487 = vadd.f32 %v1485, %v1486
        %v1488 = vrot.slane %v1487, 1
        %v1489 = vadd.f32 %v1487, %v1488
        %v1490 = vsel %vm929, %v1343, 0.0
        %v1491 = vadd.f32 %v1279, %v1490
        %v1492 = vrot.slane %v1491, 4
        %v1493 = vadd.f32 %v1491, %v1492
        %v1494 = vrot.slane %v1493, 2
        %v1495 = vadd.f32 %v1493, %v1494
        %v1496 = vrot.slane %v1495, 1
        %v1497 = vadd.f32 %v1495, %v1496
        %v1498 = vsel %vm929, %v1345, 0.0
        %v1499 = vadd.f32 %v1281, %v1498
        %v1500 = vrot.slane %v1499, 4
        %v1501 = vadd.f32 %v1499, %v1500
        %v1502 = vrot.slane %v1501, 2
        %v1503 = vadd.f32 %v1501, %v1502
        %v1504 = vrot.slane %v1503, 1
        %v1505 = vadd.f32 %v1503, %v1504
        %v1506 = vsel %vm929, %v1347, 0.0
        %v1507 = vadd.f32 %v1283, %v1506
        %v1508 = vrot.slane %v1507, 4
        %v1509 = vadd.f32 %v1507, %v1508
        %v1510 = vrot.slane %v1509, 2
        %v1511 = vadd.f32 %v1509, %v1510
        %v1512 = vrot.slane %v1511, 1
        %v1513 = vadd.f32 %v1511, %v1512
        %v1514 = vsel %vm929, %v1349, 0.0
        %v1515 = vadd.f32 %v1285, %v1514
        %v1516 = vrot.slane %v1515, 4
        %v1517 = vadd.f32 %v1515, %v1516
        %v1518 = vrot.slane %v1517, 2
        %v1519 = vadd.f32 %v1517, %v1518
        %v1520 = vrot.slane %v1519, 1
        %v1521 = vadd.f32 %v1519, %v1520
        %v1522 = vsel %vm929, %v1351, 0.0
        %v1523 = vadd.f32 %v1287, %v1522
        %v1524 = vrot.slane %v1523, 4
        %v1525 = vadd.f32 %v1523, %v1524
        %v1526 = vrot.slane %v1525, 2
        %v1527 = vadd.f32 %v1525, %v1526
        %v1528 = vrot.slane %v1527, 1
        %v1529 = vadd.f32 %v1527, %v1528
        %v1530 = vsel %vm929, %v1353, 0.0
        %v1531 = vadd.f32 %v1289, %v1530
        %v1532 = vrot.slane %v1531, 4
        %v1533 = vadd.f32 %v1531, %v1532
        %v1534 = vrot.slane %v1533, 2
        %v1535 = vadd.f32 %v1533, %v1534
        %v1536 = vrot.slane %v1535, 1
        %v1537 = vadd.f32 %v1535, %v1536
        %v1538 = vsel %vm929, %v1355, 0.0
        %v1539 = vadd.f32 %v1291, %v1538
        %v1540 = vrot.slane %v1539, 4
        %v1541 = vadd.f32 %v1539, %v1540
        %v1542 = vrot.slane %v1541, 2
        %v1543 = vadd.f32 %v1541, %v1542
        %v1544 = vrot.slane %v1543, 1
        %v1545 = vadd.f32 %v1543, %v1544
        %v1546 = vsel %vm929, %v1357, 0.0
        %v1547 = vadd.f32 %v1293, %v1546
        %v1548 = vrot.slane %v1547, 4
        %v1549 = vadd.f32 %v1547, %v1548
        %v1550 = vrot.slane %v1549, 2
        %v1551 = vadd.f32 %v1549, %v1550
        %v1552 = vrot.slane %v1551, 1
        %v1553 = vadd.f32 %v1551, %v1552
        %v1554 = vsel %vm929, %v1359, 0.0
        %v1555 = vadd.f32 %v1295, %v1554
        %v1556 = vrot.slane %v1555, 4
        %v1557 = vadd.f32 %v1555, %v1556
        %v1558 = vrot.slane %v1557, 2
        %v1559 = vadd.f32 %v1557, %v1558
        %v1560 = vrot.slane %v1559, 1
        %v1561 = vadd.f32 %v1559, %v1560
        %v1562 = vsel %vm929, %v1361, 0.0
        %v1563 = vadd.f32 %v1297, %v1562
        %v1564 = vrot.slane %v1563, 4
        %v1565 = vadd.f32 %v1563, %v1564
        %v1566 = vrot.slane %v1565, 2
        %v1567 = vadd.f32 %v1565, %v1566
        %v1568 = vrot.slane %v1567, 1
        %v1569 = vadd.f32 %v1567, %v1568
        %v1570 = vsel %vm929, %v1363, 0.0
        %v1571 = vadd.f32 %v1299, %v1570
        %v1572 = vrot.slane %v1571, 4
        %v1573 = vadd.f32 %v1571, %v1572
        %v1574 = vrot.slane %v1573, 2
        %v1575 = vadd.f32 %v1573, %v1574
        %v1576 = vrot.slane %v1575, 1
        %v1577 = vadd.f32 %v1575, %v1576
        %v1578 = vsel %vm929, %v1365, 0.0
        %v1579 = vadd.f32 %v1301, %v1578
        %v1580 = vrot.slane %v1579, 4
        %v1581 = vadd.f32 %v1579, %v1580
        %v1582 = vrot.slane %v1581, 2
        %v1583 = vadd.f32 %v1581, %v1582
        %v1584 = vrot.slane %v1583, 1
        %v1585 = vadd.f32 %v1583, %v1584
        %v1586 = vsel %vm929, %v1367, 0.0
        %v1587 = vadd.f32 %v1303, %v1586
        %v1588 = vrot.slane %v1587, 4
        %v1589 = vadd.f32 %v1587, %v1588
        %v1590 = vrot.slane %v1589, 2
        %v1591 = vadd.f32 %v1589, %v1590
        %v1592 = vrot.slane %v1591, 1
        %v1593 = vadd.f32 %v1591, %v1592
        %v1594 = vsel %vm929, %v1369, 0.0
        %v1595 = vadd.f32 %v1305, %v1594
        %v1596 = vrot.slane %v1595, 4
        %v1597 = vadd.f32 %v1595, %v1596
        %v1598 = vrot.slane %v1597, 2
        %v1599 = vadd.f32 %v1597, %v1598
        %v1600 = vrot.slane %v1599, 1
        %v1601 = vadd.f32 %v1599, %v1600
        %v1602 = vsel %vm929, %v1371, 0.0
        %v1603 = vadd.f32 %v1307, %v1602
        %v1604 = vrot.slane %v1603, 4
        %v1605 = vadd.f32 %v1603, %v1604
        %v1606 = vrot.slane %v1605, 2
        %v1607 = vadd.f32 %v1605, %v1606
        %v1608 = vrot.slane %v1607, 1
        %v1609 = vadd.f32 %v1607, %v1608
        %v1610 = vsel %vm929, %v1373, 0.0
        %v1611 = vadd.f32 %v1309, %v1610
        %v1612 = vrot.slane %v1611, 4
        %v1613 = vadd.f32 %v1611, %v1612
        %v1614 = vrot.slane %v1613, 2
        %v1615 = vadd.f32 %v1613, %v1614
        %v1616 = vrot.slane %v1615, 1
        %v1617 = vadd.f32 %v1615, %v1616
        %v1618 = vsel %vm929, %v1375, 0.0
        %v1619 = vadd.f32 %v1311, %v1618
        %v1620 = vrot.slane %v1619, 4
        %v1621 = vadd.f32 %v1619, %v1620
        %v1622 = vrot.slane %v1621, 2
        %v1623 = vadd.f32 %v1621, %v1622
        %v1624 = vrot.slane %v1623, 1
        %v1625 = vadd.f32 %v1623, %v1624
        %v1626 = vsel %vm929, %v1377, 0.0
        %v1627 = vadd.f32 %v1313, %v1626
        %v1628 = vrot.slane %v1627, 4
        %v1629 = vadd.f32 %v1627, %v1628
        %v1630 = vrot.slane %v1629, 2
        %v1631 = vadd.f32 %v1629, %v1630
        %v1632 = vrot.slane %v1631, 1
        %v1633 = vadd.f32 %v1631, %v1632
        %v1634 = vlog2.pop %v1385
        %v1635 = vmul.f32 %v1634, 0.6931472
        %v1636 = vlog2.pop %v1393
        %v1637 = vmul.f32 %v1636, 0.6931472
        %v1638 = vlog2.pop %v1401
        %v1639 = vmul.f32 %v1638, 0.6931472
        %v1640 = vlog2.pop %v1409
        %v1641 = vmul.f32 %v1640, 0.6931472
        %v1642 = vlog2.pop %v1417
        %v1643 = vmul.f32 %v1642, 0.6931472
        %v1644 = vlog2.pop %v1425
        %v1645 = vmul.f32 %v1644, 0.6931472
        %v1646 = vlog2.pop %v1433
        %v1647 = vmul.f32 %v1646, 0.6931472
        %v1648 = vlog2.pop %v1441
        %v1649 = vmul.f32 %v1648, 0.6931472
        %v1650 = vlog2.pop %v1449
        %v1651 = vmul.f32 %v1650, 0.6931472
        %v1652 = vlog2.pop %v1457
        %v1653 = vmul.f32 %v1652, 0.6931472
        %v1654 = vlog2.pop %v1465
        %v1655 = vmul.f32 %v1654, 0.6931472
        %v1656 = vlog2.pop %v1473
        %v1657 = vmul.f32 %v1656, 0.6931472
        %v1658 = vlog2.pop %v1481
        %v1659 = vmul.f32 %v1658, 0.6931472
        %v1660 = vlog2.pop %v1489
        %v1661 = vmul.f32 %v1660, 0.6931472
        %v1662 = vlog2.pop %v1497
        %v1663 = vmul.f32 %v1662, 0.6931472
        %v1664 = vlog2.pop %v1505
        %v1665 = vmul.f32 %v1664, 0.6931472
        %v1666 = vlog2.pop %v1513
        %v1667 = vmul.f32 %v1666, 0.6931472
        %v1668 = vlog2.pop %v1521
        %v1669 = vmul.f32 %v1668, 0.6931472
        %v1670 = vlog2.pop %v1529
        %v1671 = vmul.f32 %v1670, 0.6931472
        %v1672 = vlog2.pop %v1537
        %v1673 = vmul.f32 %v1672, 0.6931472
        %v1674 = vlog2.pop %v1545
        %v1675 = vmul.f32 %v1674, 0.6931472
        %v1676 = vlog2.pop %v1553
        %v1677 = vmul.f32 %v1676, 0.6931472
        %v1678 = vlog2.pop %v1561
        %v1679 = vmul.f32 %v1678, 0.6931472
        %v1680 = vlog2.pop %v1569
        %v1681 = vmul.f32 %v1680, 0.6931472
        %v1682 = vlog2.pop %v1577
        %v1683 = vmul.f32 %v1682, 0.6931472
        %v1684 = vlog2.pop %v1585
        %v1685 = vmul.f32 %v1684, 0.6931472
        %v1686 = vlog2.pop %v1593
        %v1687 = vmul.f32 %v1686, 0.6931472
        %v1688 = vlog2.pop %v1601
        %v1689 = vmul.f32 %v1688, 0.6931472
        %v1690 = vlog2.pop %v1609
        %v1691 = vmul.f32 %v1690, 0.6931472
        %v1692 = vlog2.pop %v1617
        %v1693 = vmul.f32 %v1692, 0.6931472
        %v1694 = vlog2.pop %v1625
        %v1695 = vmul.f32 %v1694, 0.6931472
        %v1696 = vlog2.pop %v1633
        %v1697 = vmul.f32 %v1696, 0.6931472
        %v1698 = vrcp.pop %v1385
        %v1699 = vmul.f32 1.0, %v1698
        %v1700 = vrcp.pop %v1393
        %v1701 = vmul.f32 1.0, %v1700
        %v1702 = vrcp.pop %v1401
        %v1703 = vmul.f32 1.0, %v1702
        %v1704 = vrcp.pop %v1409
        %v1705 = vmul.f32 1.0, %v1704
        %v1706 = vrcp.pop %v1417
        %v1707 = vmul.f32 1.0, %v1706
        %v1708 = vrcp.pop %v1425
        %v1709 = vmul.f32 1.0, %v1708
        %v1710 = vrcp.pop %v1433
        %v1711 = vmul.f32 1.0, %v1710
        %v1712 = vrcp.pop %v1441
        %v1713 = vmul.f32 1.0, %v1712
        %v1714 = vrcp.pop %v1449
        %v1715 = vmul.f32 1.0, %v1714
        %v1716 = vrcp.pop %v1457
        %v1717 = vmul.f32 1.0, %v1716
        %v1718 = vrcp.pop %v1465
        %v1719 = vmul.f32 1.0, %v1718
        %v1720 = vrcp.pop %v1473
        %v1721 = vmul.f32 1.0, %v1720
        %v1722 = vrcp.pop %v1481
        %v1723 = vmul.f32 1.0, %v1722
        %v1724 = vrcp.pop %v1489
        %v1725 = vmul.f32 1.0, %v1724
        %v1726 = vrcp.pop %v1497
        %v1727 = vmul.f32 1.0, %v1726
        %v1728 = vrcp.pop %v1505
        %v1729 = vmul.f32 1.0, %v1728
        %v1730 = vrcp.pop %v1513
        %v1731 = vmul.f32 1.0, %v1730
        %v1732 = vrcp.pop %v1521
        %v1733 = vmul.f32 1.0, %v1732
        %v1734 = vrcp.pop %v1529
        %v1735 = vmul.f32 1.0, %v1734
        %v1736 = vrcp.pop %v1537
        %v1737 = vmul.f32 1.0, %v1736
        %v1738 = vrcp.pop %v1545
        %v1739 = vmul.f32 1.0, %v1738
        %v1740 = vrcp.pop %v1553
        %v1741 = vmul.f32 1.0, %v1740
        %v1742 = vrcp.pop %v1561
        %v1743 = vmul.f32 1.0, %v1742
        %v1744 = vrcp.pop %v1569
        %v1745 = vmul.f32 1.0, %v1744
        %v1746 = vrcp.pop %v1577
        %v1747 = vmul.f32 1.0, %v1746
        %v1748 = vrcp.pop %v1585
        %v1749 = vmul.f32 1.0, %v1748
        %v1750 = vrcp.pop %v1593
        %v1751 = vmul.f32 1.0, %v1750
        %v1752 = vrcp.pop %v1601
        %v1753 = vmul.f32 1.0, %v1752
        %v1754 = vrcp.pop %v1609
        %v1755 = vmul.f32 1.0, %v1754
        %v1756 = vrcp.pop %v1617
        %v1757 = vmul.f32 1.0, %v1756
        %v1758 = vrcp.pop %v1625
        %v1759 = vmul.f32 1.0, %v1758
        %v1760 = vrcp.pop %v1633
        %v1761 = vmul.f32 1.0, %v1760
        %v1762 = vmul.f32 %v1251, %v1699
        %v1763 = vmul.f32 %v1253, %v1701
        %v1764 = vmul.f32 %v1255, %v1703
        %v1765 = vmul.f32 %v1257, %v1705
        %v1766 = vmul.f32 %v1259, %v1707
        %v1767 = vmul.f32 %v1261, %v1709
        %v1768 = vmul.f32 %v1263, %v1711
        %v1769 = vmul.f32 %v1265, %v1713
        %v1770 = vmul.f32 %v1267, %v1715
        %v1771 = vmul.f32 %v1269, %v1717
        %v1772 = vmul.f32 %v1271, %v1719
        %v1773 = vmul.f32 %v1273, %v1721
        %v1774 = vmul.f32 %v1275, %v1723
        %v1775 = vmul.f32 %v1277, %v1725
        %v1776 = vmul.f32 %v1279, %v1727
        %v1777 = vmul.f32 %v1281, %v1729
        %v1778 = vmul.f32 %v1283, %v1731
        %v1779 = vmul.f32 %v1285, %v1733
        %v1780 = vmul.f32 %v1287, %v1735
        %v1781 = vmul.f32 %v1289, %v1737
        %v1782 = vmul.f32 %v1291, %v1739
        %v1783 = vmul.f32 %v1293, %v1741
        %v1784 = vmul.f32 %v1295, %v1743
        %v1785 = vmul.f32 %v1297, %v1745
        %v1786 = vmul.f32 %v1299, %v1747
        %v1787 = vmul.f32 %v1301, %v1749
        %v1788 = vmul.f32 %v1303, %v1751
        %v1789 = vmul.f32 %v1305, %v1753
        %v1790 = vmul.f32 %v1307, %v1755
        %v1791 = vmul.f32 %v1309, %v1757
        %v1792 = vmul.f32 %v1311, %v1759
        %v1793 = vmul.f32 %v1313, %v1761
        %v1794 = vmul.f32 %v1315, %v1699
        %v1795 = vmul.f32 %v1317, %v1701
        %v1796 = vmul.f32 %v1319, %v1703
        %v1797 = vmul.f32 %v1321, %v1705
        %v1798 = vmul.f32 %v1323, %v1707
        %v1799 = vmul.f32 %v1325, %v1709
        %v1800 = vmul.f32 %v1327, %v1711
        %v1801 = vmul.f32 %v1329, %v1713
        %v1802 = vmul.f32 %v1331, %v1715
        %v1803 = vmul.f32 %v1333, %v1717
        %v1804 = vmul.f32 %v1335, %v1719
        %v1805 = vmul.f32 %v1337, %v1721
        %v1806 = vmul.f32 %v1339, %v1723
        %v1807 = vmul.f32 %v1341, %v1725
        %v1808 = vmul.f32 %v1343, %v1727
        %v1809 = vmul.f32 %v1345, %v1729
        %v1810 = vmul.f32 %v1347, %v1731
        %v1811 = vmul.f32 %v1349, %v1733
        %v1812 = vmul.f32 %v1351, %v1735
        %v1813 = vmul.f32 %v1353, %v1737
        %v1814 = vmul.f32 %v1355, %v1739
        %v1815 = vmul.f32 %v1357, %v1741
        %v1816 = vmul.f32 %v1359, %v1743
        %v1817 = vmul.f32 %v1361, %v1745
        %v1818 = vmul.f32 %v1363, %v1747
        %v1819 = vmul.f32 %v1365, %v1749
        %v1820 = vmul.f32 %v1367, %v1751
        %v1821 = vmul.f32 %v1369, %v1753
        %v1822 = vmul.f32 %v1371, %v1755
        %v1823 = vmul.f32 %v1373, %v1757
        %v1824 = vmul.f32 %v1375, %v1759
        %v1825 = vmul.f32 %v1377, %v1761
        %v1826 = vld [vmem:[#allocation4] sm:$0xff]
        %v1827 = vld [vmem:[#allocation4 + $0x8] sm:$0xff]
        %v1828 = vld [vmem:[#allocation4 + $0x10] sm:$0xff]
        %v1829 = vld [vmem:[#allocation4 + $0x18] sm:$0xff]
        %v1830 = vld [vmem:[#allocation4 + $0x20] sm:$0xff]
        %v1831 = vld [vmem:[#allocation4 + $0x28] sm:$0xff]
        %v1832 = vld [vmem:[#allocation4 + $0x30] sm:$0xff]
        %v1833 = vld [vmem:[#allocation4 + $0x38] sm:$0xff]
        %v1834 = vld [vmem:[#allocation4 + $0x40] sm:$0xff]
        %v1835 = vld [vmem:[#allocation4 + $0x48] sm:$0xff]
        %v1836 = vld [vmem:[#allocation4 + $0x50] sm:$0xff]
        %v1837 = vld [vmem:[#allocation4 + $0x58] sm:$0xff]
        %v1838 = vld [vmem:[#allocation4 + $0x60] sm:$0xff]
        %v1839 = vld [vmem:[#allocation4 + $0x68] sm:$0xff]
        %v1840 = vld [vmem:[#allocation4 + $0x70] sm:$0xff]
        %v1841 = vld [vmem:[#allocation4 + $0x78] sm:$0xff]
        %v1842 = vld [vmem:[#allocation4 + $0x80] sm:$0xff]
        %v1843 = vld [vmem:[#allocation4 + $0x88] sm:$0xff]
        %v1844 = vld [vmem:[#allocation4 + $0x90] sm:$0xff]
        %v1845 = vld [vmem:[#allocation4 + $0x98] sm:$0xff]
        %v1846 = vld [vmem:[#allocation4 + $0xa0] sm:$0xff]
        %v1847 = vld [vmem:[#allocation4 + $0xa8] sm:$0xff]
        %v1848 = vld [vmem:[#allocation4 + $0xb0] sm:$0xff]
        %v1849 = vld [vmem:[#allocation4 + $0xb8] sm:$0xff]
        %v1850 = vld [vmem:[#allocation4 + $0xc0] sm:$0xff]
        %v1851 = vld [vmem:[#allocation4 + $0xc8] sm:$0xff]
        %v1852 = vld [vmem:[#allocation4 + $0xd0] sm:$0xff]
        %v1853 = vld [vmem:[#allocation4 + $0xd8] sm:$0xff]
        %v1854 = vld [vmem:[#allocation4 + $0xe0] sm:$0xff]
        %v1855 = vld [vmem:[#allocation4 + $0xe8] sm:$0xff]
        %v1856 = vld [vmem:[#allocation4 + $0xf0] sm:$0xff]
        %v1857 = vld [vmem:[#allocation4 + $0xf8] sm:$0xff]
        %v1858 = vld [vmem:[#allocation4 + $0x100] sm:$0x7]
        %v1859 = vld [vmem:[#allocation4 + $0x108] sm:$0x7]
        %v1860 = vld [vmem:[#allocation4 + $0x110] sm:$0x7]
        %v1861 = vld [vmem:[#allocation4 + $0x118] sm:$0x7]
        %v1862 = vld [vmem:[#allocation4 + $0x120] sm:$0x7]
        %v1863 = vld [vmem:[#allocation4 + $0x128] sm:$0x7]
        %v1864 = vld [vmem:[#allocation4 + $0x130] sm:$0x7]
        %v1865 = vld [vmem:[#allocation4 + $0x138] sm:$0x7]
        %v1866 = vld [vmem:[#allocation4 + $0x140] sm:$0x7]
        %v1867 = vld [vmem:[#allocation4 + $0x148] sm:$0x7]
        %v1868 = vld [vmem:[#allocation4 + $0x150] sm:$0x7]
        %v1869 = vld [vmem:[#allocation4 + $0x158] sm:$0x7]
        %v1870 = vld [vmem:[#allocation4 + $0x160] sm:$0x7]
        %v1871 = vld [vmem:[#allocation4 + $0x168] sm:$0x7]
        %v1872 = vld [vmem:[#allocation4 + $0x170] sm:$0x7]
        %v1873 = vld [vmem:[#allocation4 + $0x178] sm:$0x7]
        %v1874 = vld [vmem:[#allocation4 + $0x180] sm:$0x7]
        %v1875 = vld [vmem:[#allocation4 + $0x188] sm:$0x7]
        %v1876 = vld [vmem:[#allocation4 + $0x190] sm:$0x7]
        %v1877 = vld [vmem:[#allocation4 + $0x198] sm:$0x7]
        %v1878 = vld [vmem:[#allocation4 + $0x1a0] sm:$0x7]
        %v1879 = vld [vmem:[#allocation4 + $0x1a8] sm:$0x7]
        %v1880 = vld [vmem:[#allocation4 + $0x1b0] sm:$0x7]
        %v1881 = vld [vmem:[#allocation4 + $0x1b8] sm:$0x7]
        %v1882 = vld [vmem:[#allocation4 + $0x1c0] sm:$0x7]
        %v1883 = vld [vmem:[#allocation4 + $0x1c8] sm:$0x7]
        %v1884 = vld [vmem:[#allocation4 + $0x1d0] sm:$0x7]
        %v1885 = vld [vmem:[#allocation4 + $0x1d8] sm:$0x7]
        %v1886 = vld [vmem:[#allocation4 + $0x1e0] sm:$0x7]
        %v1887 = vld [vmem:[#allocation4 + $0x1e8] sm:$0x7]
        %v1888 = vld [vmem:[#allocation4 + $0x1f0] sm:$0x7]
        %v1889 = vld [vmem:[#allocation4 + $0x1f8] sm:$0x7]
        %v1890 = vadd.f32 %v1826, %v865
        %v1891 = vadd.f32 %v1827, %v866
        %v1892 = vadd.f32 %v1828, %v867
        %v1893 = vadd.f32 %v1829, %v868
        %v1894 = vadd.f32 %v1830, %v869
        %v1895 = vadd.f32 %v1831, %v870
        %v1896 = vadd.f32 %v1832, %v871
        %v1897 = vadd.f32 %v1833, %v872
        %v1898 = vadd.f32 %v1834, %v873
        %v1899 = vadd.f32 %v1835, %v874
        %v1900 = vadd.f32 %v1836, %v875
        %v1901 = vadd.f32 %v1837, %v876
        %v1902 = vadd.f32 %v1838, %v877
        %v1903 = vadd.f32 %v1839, %v878
        %v1904 = vadd.f32 %v1840, %v879
        %v1905 = vadd.f32 %v1841, %v880
        %v1906 = vadd.f32 %v1842, %v881
        %v1907 = vadd.f32 %v1843, %v882
        %v1908 = vadd.f32 %v1844, %v883
        %v1909 = vadd.f32 %v1845, %v884
        %v1910 = vadd.f32 %v1846, %v885
        %v1911 = vadd.f32 %v1847, %v886
        %v1912 = vadd.f32 %v1848, %v887
        %v1913 = vadd.f32 %v1849, %v888
        %v1914 = vadd.f32 %v1850, %v889
        %v1915 = vadd.f32 %v1851, %v890
        %v1916 = vadd.f32 %v1852, %v891
        %v1917 = vadd.f32 %v1853, %v892
        %v1918 = vadd.f32 %v1854, %v893
        %v1919 = vadd.f32 %v1855, %v894
        %v1920 = vadd.f32 %v1856, %v895
        %v1921 = vadd.f32 %v1857, %v896
        %v1922 = vadd.f32 %v1858, %v897
        %v1923 = vadd.f32 %v1859, %v898
        %v1924 = vadd.f32 %v1860, %v899
        %v1925 = vadd.f32 %v1861, %v900
        %v1926 = vadd.f32 %v1862, %v901
        %v1927 = vadd.f32 %v1863, %v902
        %v1928 = vadd.f32 %v1864, %v903
        %v1929 = vadd.f32 %v1865, %v904
        %v1930 = vadd.f32 %v1866, %v905
        %v1931 = vadd.f32 %v1867, %v906
        %v1932 = vadd.f32 %v1868, %v907
        %v1933 = vadd.f32 %v1869, %v908
        %v1934 = vadd.f32 %v1870, %v909
        %v1935 = vadd.f32 %v1871, %v910
        %v1936 = vadd.f32 %v1872, %v911
        %v1937 = vadd.f32 %v1873, %v912
        %v1938 = vadd.f32 %v1874, %v913
        %v1939 = vadd.f32 %v1875, %v914
        %v1940 = vadd.f32 %v1876, %v915
        %v1941 = vadd.f32 %v1877, %v916
        %v1942 = vadd.f32 %v1878, %v917
        %v1943 = vadd.f32 %v1879, %v918
        %v1944 = vadd.f32 %v1880, %v919
        %v1945 = vadd.f32 %v1881, %v920
        %v1946 = vadd.f32 %v1882, %v921
        %v1947 = vadd.f32 %v1883, %v922
        %v1948 = vadd.f32 %v1884, %v923
        %v1949 = vadd.f32 %v1885, %v924
        %v1950 = vadd.f32 %v1886, %v925
        %v1951 = vadd.f32 %v1887, %v926
        %v1952 = vadd.f32 %v1888, %v927
        %v1953 = vadd.f32 %v1889, %v928
        %1954 = vst [vmem:[#allocation4] sm:$0xff] %v1890
        %1955 = vst [vmem:[#allocation4 + $0x8] sm:$0xff] %v1891
        %1956 = vst [vmem:[#allocation4 + $0x10] sm:$0xff] %v1892
        %1957 = vst [vmem:[#allocation4 + $0x18] sm:$0xff] %v1893
        %1958 = vst [vmem:[#allocation4 + $0x20] sm:$0xff] %v1894
        %1959 = vst [vmem:[#allocation4 + $0x28] sm:$0xff] %v1895
        %1960 = vst [vmem:[#allocation4 + $0x30] sm:$0xff] %v1896
        %1961 = vst [vmem:[#allocation4 + $0x38] sm:$0xff] %v1897
        %1962 = vst [vmem:[#allocation4 + $0x40] sm:$0xff] %v1898
        %1963 = vst [vmem:[#allocation4 + $0x48] sm:$0xff] %v1899
        %1964 = vst [vmem:[#allocation4 + $0x50] sm:$0xff] %v1900
        %1965 = vst [vmem:[#allocation4 + $0x58] sm:$0xff] %v1901
        %1966 = vst [vmem:[#allocation4 + $0x60] sm:$0xff] %v1902
        %1967 = vst [vmem:[#allocation4 + $0x68] sm:$0xff] %v1903
        %1968 = vst [vmem:[#allocation4 + $0x70] sm:$0xff] %v1904
        %1969 = vst [vmem:[#allocation4 + $0x78] sm:$0xff] %v1905
        %1970 = vst [vmem:[#allocation4 + $0x80] sm:$0xff] %v1906
        %1971 = vst [vmem:[#allocation4 + $0x88] sm:$0xff] %v1907
        %1972 = vst [vmem:[#allocation4 + $0x90] sm:$0xff] %v1908
        %1973 = vst [vmem:[#allocation4 + $0x98] sm:$0xff] %v1909
        %1974 = vst [vmem:[#allocation4 + $0xa0] sm:$0xff] %v1910
        %1975 = vst [vmem:[#allocation4 + $0xa8] sm:$0xff] %v1911
        %1976 = vst [vmem:[#allocation4 + $0xb0] sm:$0xff] %v1912
        %1977 = vst [vmem:[#allocation4 + $0xb8] sm:$0xff] %v1913
        %1978 = vst [vmem:[#allocation4 + $0xc0] sm:$0xff] %v1914
        %1979 = vst [vmem:[#allocation4 + $0xc8] sm:$0xff] %v1915
        %1980 = vst [vmem:[#allocation4 + $0xd0] sm:$0xff] %v1916
        %1981 = vst [vmem:[#allocation4 + $0xd8] sm:$0xff] %v1917
        %1982 = vst [vmem:[#allocation4 + $0xe0] sm:$0xff] %v1918
        %1983 = vst [vmem:[#allocation4 + $0xe8] sm:$0xff] %v1919
        %1984 = vst [vmem:[#allocation4 + $0xf0] sm:$0xff] %v1920
        %1985 = vst [vmem:[#allocation4 + $0xf8] sm:$0xff] %v1921
        %1986 = vst [vmem:[#allocation4 + $0x100] sm:$0x7] %v1922
        %1987 = vst [vmem:[#allocation4 + $0x108] sm:$0x7] %v1923
        %1988 = vst [vmem:[#allocation4 + $0x110] sm:$0x7] %v1924
        %1989 = vst [vmem:[#allocation4 + $0x118] sm:$0x7] %v1925
        %1990 = vst [vmem:[#allocation4 + $0x120] sm:$0x7] %v1926
        %1991 = vst [vmem:[#allocation4 + $0x128] sm:$0x7] %v1927
        %1992 = vst [vmem:[#allocation4 + $0x130] sm:$0x7] %v1928
        %1993 = vst [vmem:[#allocation4 + $0x138] sm:$0x7] %v1929
        %1994 = vst [vmem:[#allocation4 + $0x140] sm:$0x7] %v1930
        %1995 = vst [vmem:[#allocation4 + $0x148] sm:$0x7] %v1931
        %1996 = vst [vmem:[#allocation4 + $0x150] sm:$0x7] %v1932
        %1997 = vst [vmem:[#allocation4 + $0x158] sm:$0x7] %v1933
        %1998 = vst [vmem:[#allocation4 + $0x160] sm:$0x7] %v1934
        %1999 = vst [vmem:[#allocation4 + $0x168] sm:$0x7] %v1935
        %2000 = vst [vmem:[#allocation4 + $0x170] sm:$0x7] %v1936
        %2001 = vst [vmem:[#allocation4 + $0x178] sm:$0x7] %v1937
        %2002 = vst [vmem:[#allocation4 + $0x180] sm:$0x7] %v1938
        %2003 = vst [vmem:[#allocation4 + $0x188] sm:$0x7] %v1939
        %2004 = vst [vmem:[#allocation4 + $0x190] sm:$0x7] %v1940
        %2005 = vst [vmem:[#allocation4 + $0x198] sm:$0x7] %v1941
        %2006 = vst [vmem:[#allocation4 + $0x1a0] sm:$0x7] %v1942
        %2007 = vst [vmem:[#allocation4 + $0x1a8] sm:$0x7] %v1943
        %2008 = vst [vmem:[#allocation4 + $0x1b0] sm:$0x7] %v1944
        %2009 = vst [vmem:[#allocation4 + $0x1b8] sm:$0x7] %v1945
        %2010 = vst [vmem:[#allocation4 + $0x1c0] sm:$0x7] %v1946
        %2011 = vst [vmem:[#allocation4 + $0x1c8] sm:$0x7] %v1947
        %2012 = vst [vmem:[#allocation4 + $0x1d0] sm:$0x7] %v1948
        %2013 = vst [vmem:[#allocation4 + $0x1d8] sm:$0x7] %v1949
        %2014 = vst [vmem:[#allocation4 + $0x1e0] sm:$0x7] %v1950
        %2015 = vst [vmem:[#allocation4 + $0x1e8] sm:$0x7] %v1951
        %2016 = vst [vmem:[#allocation4 + $0x1f0] sm:$0x7] %v1952
        %2017 = vst [vmem:[#allocation4 + $0x1f8] sm:$0x7] %v1953
        %v2018 = vld [vmem:[#allocation2] sm:$0xff]
        %v2019 = vld [vmem:[#allocation2 + $0x8] sm:$0xff]
        %v2020 = vld [vmem:[#allocation2 + $0x10] sm:$0xff]
        %v2021 = vld [vmem:[#allocation2 + $0x18] sm:$0xff]
        %v2022 = vld [vmem:[#allocation2 + $0x20] sm:$0xff]
        %v2023 = vld [vmem:[#allocation2 + $0x28] sm:$0xff]
        %v2024 = vld [vmem:[#allocation2 + $0x30] sm:$0xff]
        %v2025 = vld [vmem:[#allocation2 + $0x38] sm:$0xff]
        %v2026 = vld [vmem:[#allocation2 + $0x40] sm:$0xff]
        %v2027 = vld [vmem:[#allocation2 + $0x48] sm:$0xff]
        %v2028 = vld [vmem:[#allocation2 + $0x50] sm:$0xff]
        %v2029 = vld [vmem:[#allocation2 + $0x58] sm:$0xff]
        %v2030 = vld [vmem:[#allocation2 + $0x60] sm:$0xff]
        %v2031 = vld [vmem:[#allocation2 + $0x68] sm:$0xff]
        %v2032 = vld [vmem:[#allocation2 + $0x70] sm:$0xff]
        %v2033 = vld [vmem:[#allocation2 + $0x78] sm:$0xff]
        %v2034 = vld [vmem:[#allocation2 + $0x80] sm:$0xff]
        %v2035 = vld [vmem:[#allocation2 + $0x88] sm:$0xff]
        %v2036 = vld [vmem:[#allocation2 + $0x90] sm:$0xff]
        %v2037 = vld [vmem:[#allocation2 + $0x98] sm:$0xff]
        %v2038 = vld [vmem:[#allocation2 + $0xa0] sm:$0xff]
        %v2039 = vld [vmem:[#allocation2 + $0xa8] sm:$0xff]
        %v2040 = vld [vmem:[#allocation2 + $0xb0] sm:$0xff]
        %v2041 = vld [vmem:[#allocation2 + $0xb8] sm:$0xff]
        %v2042 = vld [vmem:[#allocation2 + $0xc0] sm:$0xff]
        %v2043 = vld [vmem:[#allocation2 + $0xc8] sm:$0xff]
        %v2044 = vld [vmem:[#allocation2 + $0xd0] sm:$0xff]
        %v2045 = vld [vmem:[#allocation2 + $0xd8] sm:$0xff]
        %v2046 = vld [vmem:[#allocation2 + $0xe0] sm:$0xff]
        %v2047 = vld [vmem:[#allocation2 + $0xe8] sm:$0xff]
        %v2048 = vld [vmem:[#allocation2 + $0xf0] sm:$0xff]
        %v2049 = vld [vmem:[#allocation2 + $0xf8] sm:$0xff]
        %v2050 = vld [vmem:[#allocation2 + $0x100] sm:$0x7]
        %v2051 = vld [vmem:[#allocation2 + $0x108] sm:$0x7]
        %v2052 = vld [vmem:[#allocation2 + $0x110] sm:$0x7]
        %v2053 = vld [vmem:[#allocation2 + $0x118] sm:$0x7]
        %v2054 = vld [vmem:[#allocation2 + $0x120] sm:$0x7]
        %v2055 = vld [vmem:[#allocation2 + $0x128] sm:$0x7]
        %v2056 = vld [vmem:[#allocation2 + $0x130] sm:$0x7]
        %v2057 = vld [vmem:[#allocation2 + $0x138] sm:$0x7]
        %v2058 = vld [vmem:[#allocation2 + $0x140] sm:$0x7]
        %v2059 = vld [vmem:[#allocation2 + $0x148] sm:$0x7]
        %v2060 = vld [vmem:[#allocation2 + $0x150] sm:$0x7]
        %v2061 = vld [vmem:[#allocation2 + $0x158] sm:$0x7]
        %v2062 = vld [vmem:[#allocation2 + $0x160] sm:$0x7]
        %v2063 = vld [vmem:[#allocation2 + $0x168] sm:$0x7]
        %v2064 = vld [vmem:[#allocation2 + $0x170] sm:$0x7]
        %v2065 = vld [vmem:[#allocation2 + $0x178] sm:$0x7]
        %v2066 = vld [vmem:[#allocation2 + $0x180] sm:$0x7]
        %v2067 = vld [vmem:[#allocation2 + $0x188] sm:$0x7]
        %v2068 = vld [vmem:[#allocation2 + $0x190] sm:$0x7]
        %v2069 = vld [vmem:[#allocation2 + $0x198] sm:$0x7]
        %v2070 = vld [vmem:[#allocation2 + $0x1a0] sm:$0x7]
        %v2071 = vld [vmem:[#allocation2 + $0x1a8] sm:$0x7]
        %v2072 = vld [vmem:[#allocation2 + $0x1b0] sm:$0x7]
        %v2073 = vld [vmem:[#allocation2 + $0x1b8] sm:$0x7]
        %v2074 = vld [vmem:[#allocation2 + $0x1c0] sm:$0x7]
        %v2075 = vld [vmem:[#allocation2 + $0x1c8] sm:$0x7]
        %v2076 = vld [vmem:[#allocation2 + $0x1d0] sm:$0x7]
        %v2077 = vld [vmem:[#allocation2 + $0x1d8] sm:$0x7]
        %v2078 = vld [vmem:[#allocation2 + $0x1e0] sm:$0x7]
        %v2079 = vld [vmem:[#allocation2 + $0x1e8] sm:$0x7]
        %v2080 = vld [vmem:[#allocation2 + $0x1f0] sm:$0x7]
        %v2081 = vld [vmem:[#allocation2 + $0x1f8] sm:$0x7]
        %v2082 = vmul.f32 %v1762, %v865
        %v2083 = vmul.f32 %v1763, %v866
        %v2084 = vmul.f32 %v1764, %v867
        %v2085 = vmul.f32 %v1765, %v868
        %v2086 = vmul.f32 %v1766, %v869
        %v2087 = vmul.f32 %v1767, %v870
        %v2088 = vmul.f32 %v1768, %v871
        %v2089 = vmul.f32 %v1769, %v872
        %v2090 = vmul.f32 %v1770, %v873
        %v2091 = vmul.f32 %v1771, %v874
        %v2092 = vmul.f32 %v1772, %v875
        %v2093 = vmul.f32 %v1773, %v876
        %v2094 = vmul.f32 %v1774, %v877
        %v2095 = vmul.f32 %v1775, %v878
        %v2096 = vmul.f32 %v1776, %v879
        %v2097 = vmul.f32 %v1777, %v880
        %v2098 = vmul.f32 %v1778, %v881
        %v2099 = vmul.f32 %v1779, %v882
        %v2100 = vmul.f32 %v1780, %v883
        %v2101 = vmul.f32 %v1781, %v884
        %v2102 = vmul.f32 %v1782, %v885
        %v2103 = vmul.f32 %v1783, %v886
        %v2104 = vmul.f32 %v1784, %v887
        %v2105 = vmul.f32 %v1785, %v888
        %v2106 = vmul.f32 %v1786, %v889
        %v2107 = vmul.f32 %v1787, %v890
        %v2108 = vmul.f32 %v1788, %v891
        %v2109 = vmul.f32 %v1789, %v892
        %v2110 = vmul.f32 %v1790, %v893
        %v2111 = vmul.f32 %v1791, %v894
        %v2112 = vmul.f32 %v1792, %v895
        %v2113 = vmul.f32 %v1793, %v896
        %v2114 = vmul.f32 %v1794, %v897
        %v2115 = vmul.f32 %v1795, %v898
        %v2116 = vmul.f32 %v1796, %v899
        %v2117 = vmul.f32 %v1797, %v900
        %v2118 = vmul.f32 %v1798, %v901
        %v2119 = vmul.f32 %v1799, %v902
        %v2120 = vmul.f32 %v1800, %v903
        %v2121 = vmul.f32 %v1801, %v904
        %v2122 = vmul.f32 %v1802, %v905
        %v2123 = vmul.f32 %v1803, %v906
        %v2124 = vmul.f32 %v1804, %v907
        %v2125 = vmul.f32 %v1805, %v908
        %v2126 = vmul.f32 %v1806, %v909
        %v2127 = vmul.f32 %v1807, %v910
        %v2128 = vmul.f32 %v1808, %v911
        %v2129 = vmul.f32 %v1809, %v912
        %v2130 = vmul.f32 %v1810, %v913
        %v2131 = vmul.f32 %v1811, %v914
        %v2132 = vmul.f32 %v1812, %v915
        %v2133 = vmul.f32 %v1813, %v916
        %v2134 = vmul.f32 %v1814, %v917
        %v2135 = vmul.f32 %v1815, %v918
        %v2136 = vmul.f32 %v1816, %v919
        %v2137 = vmul.f32 %v1817, %v920
        %v2138 = vmul.f32 %v1818, %v921
        %v2139 = vmul.f32 %v1819, %v922
        %v2140 = vmul.f32 %v1820, %v923
        %v2141 = vmul.f32 %v1821, %v924
        %v2142 = vmul.f32 %v1822, %v925
        %v2143 = vmul.f32 %v1823, %v926
        %v2144 = vmul.f32 %v1824, %v927
        %v2145 = vmul.f32 %v1825, %v928
        %v2146 = vadd.f32 %v2018, %v2082
        %v2147 = vadd.f32 %v2019, %v2083
        %v2148 = vadd.f32 %v2020, %v2084
        %v2149 = vadd.f32 %v2021, %v2085
        %v2150 = vadd.f32 %v2022, %v2086
        %v2151 = vadd.f32 %v2023, %v2087
        %v2152 = vadd.f32 %v2024, %v2088
        %v2153 = vadd.f32 %v2025, %v2089
        %v2154 = vadd.f32 %v2026, %v2090
        %v2155 = vadd.f32 %v2027, %v2091
        %v2156 = vadd.f32 %v2028, %v2092
        %v2157 = vadd.f32 %v2029, %v2093
        %v2158 = vadd.f32 %v2030, %v2094
        %v2159 = vadd.f32 %v2031, %v2095
        %v2160 = vadd.f32 %v2032, %v2096
        %v2161 = vadd.f32 %v2033, %v2097
        %v2162 = vadd.f32 %v2034, %v2098
        %v2163 = vadd.f32 %v2035, %v2099
        %v2164 = vadd.f32 %v2036, %v2100
        %v2165 = vadd.f32 %v2037, %v2101
        %v2166 = vadd.f32 %v2038, %v2102
        %v2167 = vadd.f32 %v2039, %v2103
        %v2168 = vadd.f32 %v2040, %v2104
        %v2169 = vadd.f32 %v2041, %v2105
        %v2170 = vadd.f32 %v2042, %v2106
        %v2171 = vadd.f32 %v2043, %v2107
        %v2172 = vadd.f32 %v2044, %v2108
        %v2173 = vadd.f32 %v2045, %v2109
        %v2174 = vadd.f32 %v2046, %v2110
        %v2175 = vadd.f32 %v2047, %v2111
        %v2176 = vadd.f32 %v2048, %v2112
        %v2177 = vadd.f32 %v2049, %v2113
        %v2178 = vadd.f32 %v2050, %v2114
        %v2179 = vadd.f32 %v2051, %v2115
        %v2180 = vadd.f32 %v2052, %v2116
        %v2181 = vadd.f32 %v2053, %v2117
        %v2182 = vadd.f32 %v2054, %v2118
        %v2183 = vadd.f32 %v2055, %v2119
        %v2184 = vadd.f32 %v2056, %v2120
        %v2185 = vadd.f32 %v2057, %v2121
        %v2186 = vadd.f32 %v2058, %v2122
        %v2187 = vadd.f32 %v2059, %v2123
        %v2188 = vadd.f32 %v2060, %v2124
        %v2189 = vadd.f32 %v2061, %v2125
        %v2190 = vadd.f32 %v2062, %v2126
        %v2191 = vadd.f32 %v2063, %v2127
        %v2192 = vadd.f32 %v2064, %v2128
        %v2193 = vadd.f32 %v2065, %v2129
        %v2194 = vadd.f32 %v2066, %v2130
        %v2195 = vadd.f32 %v2067, %v2131
        %v2196 = vadd.f32 %v2068, %v2132
        %v2197 = vadd.f32 %v2069, %v2133
        %v2198 = vadd.f32 %v2070, %v2134
        %v2199 = vadd.f32 %v2071, %v2135
        %v2200 = vadd.f32 %v2072, %v2136
        %v2201 = vadd.f32 %v2073, %v2137
        %v2202 = vadd.f32 %v2074, %v2138
        %v2203 = vadd.f32 %v2075, %v2139
        %v2204 = vadd.f32 %v2076, %v2140
        %v2205 = vadd.f32 %v2077, %v2141
        %v2206 = vadd.f32 %v2078, %v2142
        %v2207 = vadd.f32 %v2079, %v2143
        %v2208 = vadd.f32 %v2080, %v2144
        %v2209 = vadd.f32 %v2081, %v2145
        %2210 = vst [vmem:[#allocation2] sm:$0xff] %v2146
        %2211 = vst [vmem:[#allocation2 + $0x8] sm:$0xff] %v2147
        %2212 = vst [vmem:[#allocation2 + $0x10] sm:$0xff] %v2148
        %2213 = vst [vmem:[#allocation2 + $0x18] sm:$0xff] %v2149
        %2214 = vst [vmem:[#allocation2 + $0x20] sm:$0xff] %v2150
        %2215 = vst [vmem:[#allocation2 + $0x28] sm:$0xff] %v2151
        %2216 = vst [vmem:[#allocation2 + $0x30] sm:$0xff] %v2152
        %2217 = vst [vmem:[#allocation2 + $0x38] sm:$0xff] %v2153
        %2218 = vst [vmem:[#allocation2 + $0x40] sm:$0xff] %v2154
        %2219 = vst [vmem:[#allocation2 + $0x48] sm:$0xff] %v2155
        %2220 = vst [vmem:[#allocation2 + $0x50] sm:$0xff] %v2156
        %2221 = vst [vmem:[#allocation2 + $0x58] sm:$0xff] %v2157
        %2222 = vst [vmem:[#allocation2 + $0x60] sm:$0xff] %v2158
        %2223 = vst [vmem:[#allocation2 + $0x68] sm:$0xff] %v2159
        %2224 = vst [vmem:[#allocation2 + $0x70] sm:$0xff] %v2160
        %2225 = vst [vmem:[#allocation2 + $0x78] sm:$0xff] %v2161
        %2226 = vst [vmem:[#allocation2 + $0x80] sm:$0xff] %v2162
        %2227 = vst [vmem:[#allocation2 + $0x88] sm:$0xff] %v2163
        %2228 = vst [vmem:[#allocation2 + $0x90] sm:$0xff] %v2164
        %2229 = vst [vmem:[#allocation2 + $0x98] sm:$0xff] %v2165
        %2230 = vst [vmem:[#allocation2 + $0xa0] sm:$0xff] %v2166
        %2231 = vst [vmem:[#allocation2 + $0xa8] sm:$0xff] %v2167
        %2232 = vst [vmem:[#allocation2 + $0xb0] sm:$0xff] %v2168
        %2233 = vst [vmem:[#allocation2 + $0xb8] sm:$0xff] %v2169
        %2234 = vst [vmem:[#allocation2 + $0xc0] sm:$0xff] %v2170
        %2235 = vst [vmem:[#allocation2 + $0xc8] sm:$0xff] %v2171
        %2236 = vst [vmem:[#allocation2 + $0xd0] sm:$0xff] %v2172
        %2237 = vst [vmem:[#allocation2 + $0xd8] sm:$0xff] %v2173
        %2238 = vst [vmem:[#allocation2 + $0xe0] sm:$0xff] %v2174
        %2239 = vst [vmem:[#allocation2 + $0xe8] sm:$0xff] %v2175
        %2240 = vst [vmem:[#allocation2 + $0xf0] sm:$0xff] %v2176
        %2241 = vst [vmem:[#allocation2 + $0xf8] sm:$0xff] %v2177
        %2242 = vst [vmem:[#allocation2 + $0x100] sm:$0x7] %v2178
        %2243 = vst [vmem:[#allocation2 + $0x108] sm:$0x7] %v2179
        %2244 = vst [vmem:[#allocation2 + $0x110] sm:$0x7] %v2180
        %2245 = vst [vmem:[#allocation2 + $0x118] sm:$0x7] %v2181
        %2246 = vst [vmem:[#allocation2 + $0x120] sm:$0x7] %v2182
        %2247 = vst [vmem:[#allocation2 + $0x128] sm:$0x7] %v2183
        %2248 = vst [vmem:[#allocation2 + $0x130] sm:$0x7] %v2184
        %2249 = vst [vmem:[#allocation2 + $0x138] sm:$0x7] %v2185
        %2250 = vst [vmem:[#allocation2 + $0x140] sm:$0x7] %v2186
        %2251 = vst [vmem:[#allocation2 + $0x148] sm:$0x7] %v2187
        %2252 = vst [vmem:[#allocation2 + $0x150] sm:$0x7] %v2188
        %2253 = vst [vmem:[#allocation2 + $0x158] sm:$0x7] %v2189
        %2254 = vst [vmem:[#allocation2 + $0x160] sm:$0x7] %v2190
        %2255 = vst [vmem:[#allocation2 + $0x168] sm:$0x7] %v2191
        %2256 = vst [vmem:[#allocation2 + $0x170] sm:$0x7] %v2192
        %2257 = vst [vmem:[#allocation2 + $0x178] sm:$0x7] %v2193
        %2258 = vst [vmem:[#allocation2 + $0x180] sm:$0x7] %v2194
        %2259 = vst [vmem:[#allocation2 + $0x188] sm:$0x7] %v2195
        %2260 = vst [vmem:[#allocation2 + $0x190] sm:$0x7] %v2196
        %2261 = vst [vmem:[#allocation2 + $0x198] sm:$0x7] %v2197
        %2262 = vst [vmem:[#allocation2 + $0x1a0] sm:$0x7] %v2198
        %2263 = vst [vmem:[#allocation2 + $0x1a8] sm:$0x7] %v2199
        %2264 = vst [vmem:[#allocation2 + $0x1b0] sm:$0x7] %v2200
        %2265 = vst [vmem:[#allocation2 + $0x1b8] sm:$0x7] %v2201
        %2266 = vst [vmem:[#allocation2 + $0x1c0] sm:$0x7] %v2202
        %2267 = vst [vmem:[#allocation2 + $0x1c8] sm:$0x7] %v2203
        %2268 = vst [vmem:[#allocation2 + $0x1d0] sm:$0x7] %v2204
        %2269 = vst [vmem:[#allocation2 + $0x1d8] sm:$0x7] %v2205
        %2270 = vst [vmem:[#allocation2 + $0x1e0] sm:$0x7] %v2206
        %2271 = vst [vmem:[#allocation2 + $0x1e8] sm:$0x7] %v2207
        %2272 = vst [vmem:[#allocation2 + $0x1f0] sm:$0x7] %v2208
        %2273 = vst [vmem:[#allocation2 + $0x1f8] sm:$0x7] %v2209
        %s2274 = sadd.s32 %s27, %s28
        %s2275 = smul.u32 %s2274, 4096
        %s2276 = sadd.s32 %s2275, 4096
        %p2277 = scmp.le.s32.totalorder %s2276, 512
        // Predicated region
        $region41: #{tpu_custom_call.1} parent=27 // pred_check
          %p2278 = pneg %p2277
        $region42: #{tpu_custom_call.1} parent=27 // pred_check_branch
          %2280 = sbr.rel (%p2278) target = $region44
        $region43: #{tpu_custom_call.1} parent=27 // pred_region
          %v2281 = vld [vmem:[#allocation3] sm:$0xff]
          %v2282 = vld [vmem:[#allocation3 + $0x8] sm:$0xff]
          %v2283 = vld [vmem:[#allocation3 + $0x10] sm:$0xff]
          %v2284 = vld [vmem:[#allocation3 + $0x18] sm:$0xff]
          %v2285 = vld [vmem:[#allocation3 + $0x20] sm:$0xff]
          %v2286 = vld [vmem:[#allocation3 + $0x28] sm:$0xff]
          %v2287 = vld [vmem:[#allocation3 + $0x30] sm:$0xff]
          %v2288 = vld [vmem:[#allocation3 + $0x38] sm:$0xff]
          %v2289 = vld [vmem:[#allocation3 + $0x40] sm:$0xff]
          %v2290 = vld [vmem:[#allocation3 + $0x48] sm:$0xff]
          %v2291 = vld [vmem:[#allocation3 + $0x50] sm:$0xff]
          %v2292 = vld [vmem:[#allocation3 + $0x58] sm:$0xff]
          %v2293 = vld [vmem:[#allocation3 + $0x60] sm:$0xff]
          %v2294 = vld [vmem:[#allocation3 + $0x68] sm:$0xff]
          %v2295 = vld [vmem:[#allocation3 + $0x70] sm:$0xff]
          %v2296 = vld [vmem:[#allocation3 + $0x78] sm:$0xff]
          %v2297 = vld [vmem:[#allocation3 + $0x80] sm:$0xff]
          %v2298 = vld [vmem:[#allocation3 + $0x88] sm:$0xff]
          %v2299 = vld [vmem:[#allocation3 + $0x90] sm:$0xff]
          %v2300 = vld [vmem:[#allocation3 + $0x98] sm:$0xff]
          %v2301 = vld [vmem:[#allocation3 + $0xa0] sm:$0xff]
          %v2302 = vld [vmem:[#allocation3 + $0xa8] sm:$0xff]
          %v2303 = vld [vmem:[#allocation3 + $0xb0] sm:$0xff]
          %v2304 = vld [vmem:[#allocation3 + $0xb8] sm:$0xff]
          %v2305 = vld [vmem:[#allocation3 + $0xc0] sm:$0xff]
          %v2306 = vld [vmem:[#allocation3 + $0xc8] sm:$0xff]
          %v2307 = vld [vmem:[#allocation3 + $0xd0] sm:$0xff]
          %v2308 = vld [vmem:[#allocation3 + $0xd8] sm:$0xff]
          %v2309 = vld [vmem:[#allocation3 + $0xe0] sm:$0xff]
          %v2310 = vld [vmem:[#allocation3 + $0xe8] sm:$0xff]
          %v2311 = vld [vmem:[#allocation3 + $0xf0] sm:$0xff]
          %v2312 = vld [vmem:[#allocation3 + $0xf8] sm:$0xff]
          %v2313 = vld [vmem:[#allocation3 + $0x100] sm:$0x7]
          %v2314 = vld [vmem:[#allocation3 + $0x108] sm:$0x7]
          %v2315 = vld [vmem:[#allocation3 + $0x110] sm:$0x7]
          %v2316 = vld [vmem:[#allocation3 + $0x118] sm:$0x7]
          %v2317 = vld [vmem:[#allocation3 + $0x120] sm:$0x7]
          %v2318 = vld [vmem:[#allocation3 + $0x128] sm:$0x7]
          %v2319 = vld [vmem:[#allocation3 + $0x130] sm:$0x7]
          %v2320 = vld [vmem:[#allocation3 + $0x138] sm:$0x7]
          %v2321 = vld [vmem:[#allocation3 + $0x140] sm:$0x7]
          %v2322 = vld [vmem:[#allocation3 + $0x148] sm:$0x7]
          %v2323 = vld [vmem:[#allocation3 + $0x150] sm:$0x7]
          %v2324 = vld [vmem:[#allocation3 + $0x158] sm:$0x7]
          %v2325 = vld [vmem:[#allocation3 + $0x160] sm:$0x7]
          %v2326 = vld [vmem:[#allocation3 + $0x168] sm:$0x7]
          %v2327 = vld [vmem:[#allocation3 + $0x170] sm:$0x7]
          %v2328 = vld [vmem:[#allocation3 + $0x178] sm:$0x7]
          %v2329 = vld [vmem:[#allocation3 + $0x180] sm:$0x7]
          %v2330 = vld [vmem:[#allocation3 + $0x188] sm:$0x7]
          %v2331 = vld [vmem:[#allocation3 + $0x190] sm:$0x7]
          %v2332 = vld [vmem:[#allocation3 + $0x198] sm:$0x7]
          %v2333 = vld [vmem:[#allocation3 + $0x1a0] sm:$0x7]
          %v2334 = vld [vmem:[#allocation3 + $0x1a8] sm:$0x7]
          %v2335 = vld [vmem:[#allocation3 + $0x1b0] sm:$0x7]
          %v2336 = vld [vmem:[#allocation3 + $0x1b8] sm:$0x7]
          %v2337 = vld [vmem:[#allocation3 + $0x1c0] sm:$0x7]
          %v2338 = vld [vmem:[#allocation3 + $0x1c8] sm:$0x7]
          %v2339 = vld [vmem:[#allocation3 + $0x1d0] sm:$0x7]
          %v2340 = vld [vmem:[#allocation3 + $0x1d8] sm:$0x7]
          %v2341 = vld [vmem:[#allocation3 + $0x1e0] sm:$0x7]
          %v2342 = vld [vmem:[#allocation3 + $0x1e8] sm:$0x7]
          %v2343 = vld [vmem:[#allocation3 + $0x1f0] sm:$0x7]
          %v2344 = vld [vmem:[#allocation3 + $0x1f8] sm:$0x7]
          %v2345 = vadd.f32 %v2281, %v1762
          %v2346 = vadd.f32 %v2282, %v1763
          %v2347 = vadd.f32 %v2283, %v1764
          %v2348 = vadd.f32 %v2284, %v1765
          %v2349 = vadd.f32 %v2285, %v1766
          %v2350 = vadd.f32 %v2286, %v1767
          %v2351 = vadd.f32 %v2287, %v1768
          %v2352 = vadd.f32 %v2288, %v1769
          %v2353 = vadd.f32 %v2289, %v1770
          %v2354 = vadd.f32 %v2290, %v1771
          %v2355 = vadd.f32 %v2291, %v1772
          %v2356 = vadd.f32 %v2292, %v1773
          %v2357 = vadd.f32 %v2293, %v1774
          %v2358 = vadd.f32 %v2294, %v1775
          %v2359 = vadd.f32 %v2295, %v1776
          %v2360 = vadd.f32 %v2296, %v1777
          %v2361 = vadd.f32 %v2297, %v1778
          %v2362 = vadd.f32 %v2298, %v1779
          %v2363 = vadd.f32 %v2299, %v1780
          %v2364 = vadd.f32 %v2300, %v1781
          %v2365 = vadd.f32 %v2301, %v1782
          %v2366 = vadd.f32 %v2302, %v1783
          %v2367 = vadd.f32 %v2303, %v1784
          %v2368 = vadd.f32 %v2304, %v1785
          %v2369 = vadd.f32 %v2305, %v1786
          %v2370 = vadd.f32 %v2306, %v1787
          %v2371 = vadd.f32 %v2307, %v1788
          %v2372 = vadd.f32 %v2308, %v1789
          %v2373 = vadd.f32 %v2309, %v1790
          %v2374 = vadd.f32 %v2310, %v1791
          %v2375 = vadd.f32 %v2311, %v1792
          %v2376 = vadd.f32 %v2312, %v1793
          %v2377 = vadd.f32 %v2313, %v1794
          %v2378 = vadd.f32 %v2314, %v1795
          %v2379 = vadd.f32 %v2315, %v1796
          %v2380 = vadd.f32 %v2316, %v1797
          %v2381 = vadd.f32 %v2317, %v1798
          %v2382 = vadd.f32 %v2318, %v1799
          %v2383 = vadd.f32 %v2319, %v1800
          %v2384 = vadd.f32 %v2320, %v1801
          %v2385 = vadd.f32 %v2321, %v1802
          %v2386 = vadd.f32 %v2322, %v1803
          %v2387 = vadd.f32 %v2323, %v1804
          %v2388 = vadd.f32 %v2324, %v1805
          %v2389 = vadd.f32 %v2325, %v1806
          %v2390 = vadd.f32 %v2326, %v1807
          %v2391 = vadd.f32 %v2327, %v1808
          %v2392 = vadd.f32 %v2328, %v1809
          %v2393 = vadd.f32 %v2329, %v1810
          %v2394 = vadd.f32 %v2330, %v1811
          %v2395 = vadd.f32 %v2331, %v1812
          %v2396 = vadd.f32 %v2332, %v1813
          %v2397 = vadd.f32 %v2333, %v1814
          %v2398 = vadd.f32 %v2334, %v1815
          %v2399 = vadd.f32 %v2335, %v1816
          %v2400 = vadd.f32 %v2336, %v1817
          %v2401 = vadd.f32 %v2337, %v1818
          %v2402 = vadd.f32 %v2338, %v1819
          %v2403 = vadd.f32 %v2339, %v1820
          %v2404 = vadd.f32 %v2340, %v1821
          %v2405 = vadd.f32 %v2341, %v1822
          %v2406 = vadd.f32 %v2342, %v1823
          %v2407 = vadd.f32 %v2343, %v1824
          %v2408 = vadd.f32 %v2344, %v1825
          %2409 = vst [vmem:[#allocation3] sm:$0xff] %v2345
          %2410 = vst [vmem:[#allocation3 + $0x8] sm:$0xff] %v2346
          %2411 = vst [vmem:[#allocation3 + $0x10] sm:$0xff] %v2347
          %2412 = vst [vmem:[#allocation3 + $0x18] sm:$0xff] %v2348
          %2413 = vst [vmem:[#allocation3 + $0x20] sm:$0xff] %v2349
          %2414 = vst [vmem:[#allocation3 + $0x28] sm:$0xff] %v2350
          %2415 = vst [vmem:[#allocation3 + $0x30] sm:$0xff] %v2351
          %2416 = vst [vmem:[#allocation3 + $0x38] sm:$0xff] %v2352
          %2417 = vst [vmem:[#allocation3 + $0x40] sm:$0xff] %v2353
          %2418 = vst [vmem:[#allocation3 + $0x48] sm:$0xff] %v2354
          %2419 = vst [vmem:[#allocation3 + $0x50] sm:$0xff] %v2355
          %2420 = vst [vmem:[#allocation3 + $0x58] sm:$0xff] %v2356
          %2421 = vst [vmem:[#allocation3 + $0x60] sm:$0xff] %v2357
          %2422 = vst [vmem:[#allocation3 + $0x68] sm:$0xff] %v2358
          %2423 = vst [vmem:[#allocation3 + $0x70] sm:$0xff] %v2359
          %2424 = vst [vmem:[#allocation3 + $0x78] sm:$0xff] %v2360
          %2425 = vst [vmem:[#allocation3 + $0x80] sm:$0xff] %v2361
          %2426 = vst [vmem:[#allocation3 + $0x88] sm:$0xff] %v2362
          %2427 = vst [vmem:[#allocation3 + $0x90] sm:$0xff] %v2363
          %2428 = vst [vmem:[#allocation3 + $0x98] sm:$0xff] %v2364
          %2429 = vst [vmem:[#allocation3 + $0xa0] sm:$0xff] %v2365
          %2430 = vst [vmem:[#allocation3 + $0xa8] sm:$0xff] %v2366
          %2431 = vst [vmem:[#allocation3 + $0xb0] sm:$0xff] %v2367
          %2432 = vst [vmem:[#allocation3 + $0xb8] sm:$0xff] %v2368
          %2433 = vst [vmem:[#allocation3 + $0xc0] sm:$0xff] %v2369
          %2434 = vst [vmem:[#allocation3 + $0xc8] sm:$0xff] %v2370
          %2435 = vst [vmem:[#allocation3 + $0xd0] sm:$0xff] %v2371
          %2436 = vst [vmem:[#allocation3 + $0xd8] sm:$0xff] %v2372
          %2437 = vst [vmem:[#allocation3 + $0xe0] sm:$0xff] %v2373
          %2438 = vst [vmem:[#allocation3 + $0xe8] sm:$0xff] %v2374
          %2439 = vst [vmem:[#allocation3 + $0xf0] sm:$0xff] %v2375
          %2440 = vst [vmem:[#allocation3 + $0xf8] sm:$0xff] %v2376
          %2441 = vst [vmem:[#allocation3 + $0x100] sm:$0x7] %v2377
          %2442 = vst [vmem:[#allocation3 + $0x108] sm:$0x7] %v2378
          %2443 = vst [vmem:[#allocation3 + $0x110] sm:$0x7] %v2379
          %2444 = vst [vmem:[#allocation3 + $0x118] sm:$0x7] %v2380
          %2445 = vst [vmem:[#allocation3 + $0x120] sm:$0x7] %v2381
          %2446 = vst [vmem:[#allocation3 + $0x128] sm:$0x7] %v2382
          %2447 = vst [vmem:[#allocation3 + $0x130] sm:$0x7] %v2383
          %2448 = vst [vmem:[#allocation3 + $0x138] sm:$0x7] %v2384
          %2449 = vst [vmem:[#allocation3 + $0x140] sm:$0x7] %v2385
          %2450 = vst [vmem:[#allocation3 + $0x148] sm:$0x7] %v2386
          %2451 = vst [vmem:[#allocation3 + $0x150] sm:$0x7] %v2387
          %2452 = vst [vmem:[#allocation3 + $0x158] sm:$0x7] %v2388
          %2453 = vst [vmem:[#allocation3 + $0x160] sm:$0x7] %v2389
          %2454 = vst [vmem:[#allocation3 + $0x168] sm:$0x7] %v2390
          %2455 = vst [vmem:[#allocation3 + $0x170] sm:$0x7] %v2391
          %2456 = vst [vmem:[#allocation3 + $0x178] sm:$0x7] %v2392
          %2457 = vst [vmem:[#allocation3 + $0x180] sm:$0x7] %v2393
          %2458 = vst [vmem:[#allocation3 + $0x188] sm:$0x7] %v2394
          %2459 = vst [vmem:[#allocation3 + $0x190] sm:$0x7] %v2395
          %2460 = vst [vmem:[#allocation3 + $0x198] sm:$0x7] %v2396
          %2461 = vst [vmem:[#allocation3 + $0x1a0] sm:$0x7] %v2397
          %2462 = vst [vmem:[#allocation3 + $0x1a8] sm:$0x7] %v2398
          %2463 = vst [vmem:[#allocation3 + $0x1b0] sm:$0x7] %v2399
          %2464 = vst [vmem:[#allocation3 + $0x1b8] sm:$0x7] %v2400
          %2465 = vst [vmem:[#allocation3 + $0x1c0] sm:$0x7] %v2401
          %2466 = vst [vmem:[#allocation3 + $0x1c8] sm:$0x7] %v2402
          %2467 = vst [vmem:[#allocation3 + $0x1d0] sm:$0x7] %v2403
          %2468 = vst [vmem:[#allocation3 + $0x1d8] sm:$0x7] %v2404
          %2469 = vst [vmem:[#allocation3 + $0x1e0] sm:$0x7] %v2405
          %2470 = vst [vmem:[#allocation3 + $0x1e8] sm:$0x7] %v2406
          %2471 = vst [vmem:[#allocation3 + $0x1f0] sm:$0x7] %v2407
          %2472 = vst [vmem:[#allocation3 + $0x1f8] sm:$0x7] %v2408
        $region44: #{tpu_custom_call.1} parent=27 // pred_fallthru
          _
        %p2473 = scmp.gt.s32.totalorder %s2276, 512
        // Predicated region
        $region45: #{tpu_custom_call.1} parent=27 // pred_check
          %p2474 = pneg %p2473
        $region46: #{tpu_custom_call.1} parent=27 // pred_check_branch
          %2476 = sbr.rel (%p2474) target = $region48
        $region47: #{tpu_custom_call.1} parent=27 // pred_region
          %v2477 = vlaneseq
          %v2478 = vand.u32 %v2477, 127
          %v2479 = vadd.s32 %v2478, 128
          %v2480 = vadd.s32 %v2478, 256
          %v2481 = vadd.s32 %v2478, 384
          %v2482 = vadd.s32 %v2478, 512
          %v2483 = vadd.s32 %v2478, 640
          %v2484 = vadd.s32 %v2478, 768
          %v2485 = vadd.s32 %v2478, 896
          %v2486 = vadd.s32 %v2478, 1024
          %v2487 = vadd.s32 %v2478, 1152
          %v2488 = vadd.s32 %v2478, 1280
          %v2489 = vadd.s32 %v2478, 1408
          %v2490 = vadd.s32 %v2478, 1536
          %v2491 = vadd.s32 %v2478, 1664
          %v2492 = vadd.s32 %v2478, 1792
          %v2493 = vadd.s32 %v2478, 1920
          %v2494 = vadd.s32 %v2478, 2048
          %v2495 = vadd.s32 %v2478, 2176
          %v2496 = vadd.s32 %v2478, 2304
          %v2497 = vadd.s32 %v2478, 2432
          %v2498 = vadd.s32 %v2478, 2560
          %v2499 = vadd.s32 %v2478, 2688
          %v2500 = vadd.s32 %v2478, 2816
          %v2501 = vadd.s32 %v2478, 2944
          %v2502 = vadd.s32 %v2478, 3072
          %v2503 = vadd.s32 %v2478, 3200
          %v2504 = vadd.s32 %v2478, 3328
          %v2505 = vadd.s32 %v2478, 3456
          %v2506 = vadd.s32 %v2478, 3584
          %v2507 = vadd.s32 %v2478, 3712
          %v2508 = vadd.s32 %v2478, 3840
          %v2509 = vadd.s32 %v2478, 3968
          %v2510 = vstv %s2275
          %v2511 = vadd.s32 %v2510, %v2478
          %v2512 = vadd.s32 %v2510, %v2479
          %v2513 = vadd.s32 %v2510, %v2480
          %v2514 = vadd.s32 %v2510, %v2481
          %v2515 = vadd.s32 %v2510, %v2482
          %v2516 = vadd.s32 %v2510, %v2483
          %v2517 = vadd.s32 %v2510, %v2484
          %v2518 = vadd.s32 %v2510, %v2485
          %v2519 = vadd.s32 %v2510, %v2486
          %v2520 = vadd.s32 %v2510, %v2487
          %v2521 = vadd.s32 %v2510, %v2488
          %v2522 = vadd.s32 %v2510, %v2489
          %v2523 = vadd.s32 %v2510, %v2490
          %v2524 = vadd.s32 %v2510, %v2491
          %v2525 = vadd.s32 %v2510, %v2492
          %v2526 = vadd.s32 %v2510, %v2493
          %v2527 = vadd.s32 %v2510, %v2494
          %v2528 = vadd.s32 %v2510, %v2495
          %v2529 = vadd.s32 %v2510, %v2496
          %v2530 = vadd.s32 %v2510, %v2497
          %v2531 = vadd.s32 %v2510, %v2498
          %v2532 = vadd.s32 %v2510, %v2499
          %v2533 = vadd.s32 %v2510, %v2500
          %v2534 = vadd.s32 %v2510, %v2501
          %v2535 = vadd.s32 %v2510, %v2502
          %v2536 = vadd.s32 %v2510, %v2503
          %v2537 = vadd.s32 %v2510, %v2504
          %v2538 = vadd.s32 %v2510, %v2505
          %v2539 = vadd.s32 %v2510, %v2506
          %v2540 = vadd.s32 %v2510, %v2507
          %v2541 = vadd.s32 %v2510, %v2508
          %v2542 = vadd.s32 %v2510, %v2509
          %vm2543 = vcmp.lt.s32.totalorder %v2511, 512
          %vm2544 = vcmp.lt.s32.totalorder %v2512, 512
          %vm2545 = vcmp.lt.s32.totalorder %v2513, 512
          %vm2546 = vcmp.lt.s32.totalorder %v2514, 512
          %vm2547 = vcmp.lt.s32.totalorder %v2515, 512
          %vm2548 = vcmp.lt.s32.totalorder %v2516, 512
          %vm2549 = vcmp.lt.s32.totalorder %v2517, 512
          %vm2550 = vcmp.lt.s32.totalorder %v2518, 512
          %vm2551 = vcmp.lt.s32.totalorder %v2519, 512
          %vm2552 = vcmp.lt.s32.totalorder %v2520, 512
          %vm2553 = vcmp.lt.s32.totalorder %v2521, 512
          %vm2554 = vcmp.lt.s32.totalorder %v2522, 512
          %vm2555 = vcmp.lt.s32.totalorder %v2523, 512
          %vm2556 = vcmp.lt.s32.totalorder %v2524, 512
          %vm2557 = vcmp.lt.s32.totalorder %v2525, 512
          %vm2558 = vcmp.lt.s32.totalorder %v2526, 512
          %vm2559 = vcmp.lt.s32.totalorder %v2527, 512
          %vm2560 = vcmp.lt.s32.totalorder %v2528, 512
          %vm2561 = vcmp.lt.s32.totalorder %v2529, 512
          %vm2562 = vcmp.lt.s32.totalorder %v2530, 512
          %vm2563 = vcmp.lt.s32.totalorder %v2531, 512
          %vm2564 = vcmp.lt.s32.totalorder %v2532, 512
          %vm2565 = vcmp.lt.s32.totalorder %v2533, 512
          %vm2566 = vcmp.lt.s32.totalorder %v2534, 512
          %vm2567 = vcmp.lt.s32.totalorder %v2535, 512
          %vm2568 = vcmp.lt.s32.totalorder %v2536, 512
          %vm2569 = vcmp.lt.s32.totalorder %v2537, 512
          %vm2570 = vcmp.lt.s32.totalorder %v2538, 512
          %vm2571 = vcmp.lt.s32.totalorder %v2539, 512
          %vm2572 = vcmp.lt.s32.totalorder %v2540, 512
          %vm2573 = vcmp.lt.s32.totalorder %v2541, 512
          %vm2574 = vcmp.lt.s32.totalorder %v2542, 512
          %v2575 = vld [vmem:[#allocation3] sm:$0xff]
          %v2576 = vld [vmem:[#allocation3 + $0x8] sm:$0xff]
          %v2577 = vld [vmem:[#allocation3 + $0x10] sm:$0xff]
          %v2578 = vld [vmem:[#allocation3 + $0x18] sm:$0xff]
          %v2579 = vld [vmem:[#allocation3 + $0x20] sm:$0xff]
          %v2580 = vld [vmem:[#allocation3 + $0x28] sm:$0xff]
          %v2581 = vld [vmem:[#allocation3 + $0x30] sm:$0xff]
          %v2582 = vld [vmem:[#allocation3 + $0x38] sm:$0xff]
          %v2583 = vld [vmem:[#allocation3 + $0x40] sm:$0xff]
          %v2584 = vld [vmem:[#allocation3 + $0x48] sm:$0xff]
          %v2585 = vld [vmem:[#allocation3 + $0x50] sm:$0xff]
          %v2586 = vld [vmem:[#allocation3 + $0x58] sm:$0xff]
          %v2587 = vld [vmem:[#allocation3 + $0x60] sm:$0xff]
          %v2588 = vld [vmem:[#allocation3 + $0x68] sm:$0xff]
          %v2589 = vld [vmem:[#allocation3 + $0x70] sm:$0xff]
          %v2590 = vld [vmem:[#allocation3 + $0x78] sm:$0xff]
          %v2591 = vld [vmem:[#allocation3 + $0x80] sm:$0xff]
          %v2592 = vld [vmem:[#allocation3 + $0x88] sm:$0xff]
          %v2593 = vld [vmem:[#allocation3 + $0x90] sm:$0xff]
          %v2594 = vld [vmem:[#allocation3 + $0x98] sm:$0xff]
          %v2595 = vld [vmem:[#allocation3 + $0xa0] sm:$0xff]
          %v2596 = vld [vmem:[#allocation3 + $0xa8] sm:$0xff]
          %v2597 = vld [vmem:[#allocation3 + $0xb0] sm:$0xff]
          %v2598 = vld [vmem:[#allocation3 + $0xb8] sm:$0xff]
          %v2599 = vld [vmem:[#allocation3 + $0xc0] sm:$0xff]
          %v2600 = vld [vmem:[#allocation3 + $0xc8] sm:$0xff]
          %v2601 = vld [vmem:[#allocation3 + $0xd0] sm:$0xff]
          %v2602 = vld [vmem:[#allocation3 + $0xd8] sm:$0xff]
          %v2603 = vld [vmem:[#allocation3 + $0xe0] sm:$0xff]
          %v2604 = vld [vmem:[#allocation3 + $0xe8] sm:$0xff]
          %v2605 = vld [vmem:[#allocation3 + $0xf0] sm:$0xff]
          %v2606 = vld [vmem:[#allocation3 + $0xf8] sm:$0xff]
          %v2607 = vld [vmem:[#allocation3 + $0x100] sm:$0x7]
          %v2608 = vld [vmem:[#allocation3 + $0x108] sm:$0x7]
          %v2609 = vld [vmem:[#allocation3 + $0x110] sm:$0x7]
          %v2610 = vld [vmem:[#allocation3 + $0x118] sm:$0x7]
          %v2611 = vld [vmem:[#allocation3 + $0x120] sm:$0x7]
          %v2612 = vld [vmem:[#allocation3 + $0x128] sm:$0x7]
          %v2613 = vld [vmem:[#allocation3 + $0x130] sm:$0x7]
          %v2614 = vld [vmem:[#allocation3 + $0x138] sm:$0x7]
          %v2615 = vld [vmem:[#allocation3 + $0x140] sm:$0x7]
          %v2616 = vld [vmem:[#allocation3 + $0x148] sm:$0x7]
          %v2617 = vld [vmem:[#allocation3 + $0x150] sm:$0x7]
          %v2618 = vld [vmem:[#allocation3 + $0x158] sm:$0x7]
          %v2619 = vld [vmem:[#allocation3 + $0x160] sm:$0x7]
          %v2620 = vld [vmem:[#allocation3 + $0x168] sm:$0x7]
          %v2621 = vld [vmem:[#allocation3 + $0x170] sm:$0x7]
          %v2622 = vld [vmem:[#allocation3 + $0x178] sm:$0x7]
          %v2623 = vld [vmem:[#allocation3 + $0x180] sm:$0x7]
          %v2624 = vld [vmem:[#allocation3 + $0x188] sm:$0x7]
          %v2625 = vld [vmem:[#allocation3 + $0x190] sm:$0x7]
          %v2626 = vld [vmem:[#allocation3 + $0x198] sm:$0x7]
          %v2627 = vld [vmem:[#allocation3 + $0x1a0] sm:$0x7]
          %v2628 = vld [vmem:[#allocation3 + $0x1a8] sm:$0x7]
          %v2629 = vld [vmem:[#allocation3 + $0x1b0] sm:$0x7]
          %v2630 = vld [vmem:[#allocation3 + $0x1b8] sm:$0x7]
          %v2631 = vld [vmem:[#allocation3 + $0x1c0] sm:$0x7]
          %v2632 = vld [vmem:[#allocation3 + $0x1c8] sm:$0x7]
          %v2633 = vld [vmem:[#allocation3 + $0x1d0] sm:$0x7]
          %v2634 = vld [vmem:[#allocation3 + $0x1d8] sm:$0x7]
          %v2635 = vld [vmem:[#allocation3 + $0x1e0] sm:$0x7]
          %v2636 = vld [vmem:[#allocation3 + $0x1e8] sm:$0x7]
          %v2637 = vld [vmem:[#allocation3 + $0x1f0] sm:$0x7]
          %v2638 = vld [vmem:[#allocation3 + $0x1f8] sm:$0x7]
          %v2639 = vsel %vm2543, 1, 0
          %v2640 = vsel %vm2544, 1, 0
          %v2641 = vsel %vm2545, 1, 0
          %v2642 = vsel %vm2546, 1, 0
          %v2643 = vsel %vm2547, 1, 0
          %v2644 = vsel %vm2548, 1, 0
          %v2645 = vsel %vm2549, 1, 0
          %v2646 = vsel %vm2550, 1, 0
          %v2647 = vsel %vm2551, 1, 0
          %v2648 = vsel %vm2552, 1, 0
          %v2649 = vsel %vm2553, 1, 0
          %v2650 = vsel %vm2554, 1, 0
          %v2651 = vsel %vm2555, 1, 0
          %v2652 = vsel %vm2556, 1, 0
          %v2653 = vsel %vm2557, 1, 0
          %v2654 = vsel %vm2558, 1, 0
          %v2655 = vsel %vm2559, 1, 0
          %v2656 = vsel %vm2560, 1, 0
          %v2657 = vsel %vm2561, 1, 0
          %v2658 = vsel %vm2562, 1, 0
          %v2659 = vsel %vm2563, 1, 0
          %v2660 = vsel %vm2564, 1, 0
          %v2661 = vsel %vm2565, 1, 0
          %v2662 = vsel %vm2566, 1, 0
          %v2663 = vsel %vm2567, 1, 0
          %v2664 = vsel %vm2568, 1, 0
          %v2665 = vsel %vm2569, 1, 0
          %v2666 = vsel %vm2570, 1, 0
          %v2667 = vsel %vm2571, 1, 0
          %v2668 = vsel %vm2572, 1, 0
          %v2669 = vsel %vm2573, 1, 0
          %v2670 = vsel %vm2574, 1, 0
          %vm2671 = vcmp.eq.s32.totalorder %v2639, 1
          %vm2672 = vcmp.eq.s32.totalorder %v2640, 1
          %vm2673 = vcmp.eq.s32.totalorder %v2641, 1
          %vm2674 = vcmp.eq.s32.totalorder %v2642, 1
          %vm2675 = vcmp.eq.s32.totalorder %v2643, 1
          %vm2676 = vcmp.eq.s32.totalorder %v2644, 1
          %vm2677 = vcmp.eq.s32.totalorder %v2645, 1
          %vm2678 = vcmp.eq.s32.totalorder %v2646, 1
          %vm2679 = vcmp.eq.s32.totalorder %v2647, 1
          %vm2680 = vcmp.eq.s32.totalorder %v2648, 1
          %vm2681 = vcmp.eq.s32.totalorder %v2649, 1
          %vm2682 = vcmp.eq.s32.totalorder %v2650, 1
          %vm2683 = vcmp.eq.s32.totalorder %v2651, 1
          %vm2684 = vcmp.eq.s32.totalorder %v2652, 1
          %vm2685 = vcmp.eq.s32.totalorder %v2653, 1
          %vm2686 = vcmp.eq.s32.totalorder %v2654, 1
          %vm2687 = vcmp.eq.s32.totalorder %v2655, 1
          %vm2688 = vcmp.eq.s32.totalorder %v2656, 1
          %vm2689 = vcmp.eq.s32.totalorder %v2657, 1
          %vm2690 = vcmp.eq.s32.totalorder %v2658, 1
          %vm2691 = vcmp.eq.s32.totalorder %v2659, 1
          %vm2692 = vcmp.eq.s32.totalorder %v2660, 1
          %vm2693 = vcmp.eq.s32.totalorder %v2661, 1
          %vm2694 = vcmp.eq.s32.totalorder %v2662, 1
          %vm2695 = vcmp.eq.s32.totalorder %v2663, 1
          %vm2696 = vcmp.eq.s32.totalorder %v2664, 1
          %vm2697 = vcmp.eq.s32.totalorder %v2665, 1
          %vm2698 = vcmp.eq.s32.totalorder %v2666, 1
          %vm2699 = vcmp.eq.s32.totalorder %v2667, 1
          %vm2700 = vcmp.eq.s32.totalorder %v2668, 1
          %vm2701 = vcmp.eq.s32.totalorder %v2669, 1
          %vm2702 = vcmp.eq.s32.totalorder %v2670, 1
          %v2703 = vsel %vm2671, %v1762, 0.0
          %v2704 = vsel %vm2672, %v1763, 0.0
          %v2705 = vsel %vm2673, %v1764, 0.0
          %v2706 = vsel %vm2674, %v1765, 0.0
          %v2707 = vsel %vm2675, %v1766, 0.0
          %v2708 = vsel %vm2676, %v1767, 0.0
          %v2709 = vsel %vm2677, %v1768, 0.0
          %v2710 = vsel %vm2678, %v1769, 0.0
          %v2711 = vsel %vm2679, %v1770, 0.0
          %v2712 = vsel %vm2680, %v1771, 0.0
          %v2713 = vsel %vm2681, %v1772, 0.0
          %v2714 = vsel %vm2682, %v1773, 0.0
          %v2715 = vsel %vm2683, %v1774, 0.0
          %v2716 = vsel %vm2684, %v1775, 0.0
          %v2717 = vsel %vm2685, %v1776, 0.0
          %v2718 = vsel %vm2686, %v1777, 0.0
          %v2719 = vsel %vm2687, %v1778, 0.0
          %v2720 = vsel %vm2688, %v1779, 0.0
          %v2721 = vsel %vm2689, %v1780, 0.0
          %v2722 = vsel %vm2690, %v1781, 0.0
          %v2723 = vsel %vm2691, %v1782, 0.0
          %v2724 = vsel %vm2692, %v1783, 0.0
          %v2725 = vsel %vm2693, %v1784, 0.0
          %v2726 = vsel %vm2694, %v1785, 0.0
          %v2727 = vsel %vm2695, %v1786, 0.0
          %v2728 = vsel %vm2696, %v1787, 0.0
          %v2729 = vsel %vm2697, %v1788, 0.0
          %v2730 = vsel %vm2698, %v1789, 0.0
          %v2731 = vsel %vm2699, %v1790, 0.0
          %v2732 = vsel %vm2700, %v1791, 0.0
          %v2733 = vsel %vm2701, %v1792, 0.0
          %v2734 = vsel %vm2702, %v1793, 0.0
          %v2735 = vsel %vm2671, %v1794, 0.0
          %v2736 = vsel %vm2672, %v1795, 0.0
          %v2737 = vsel %vm2673, %v1796, 0.0
          %v2738 = vsel %vm2674, %v1797, 0.0
          %v2739 = vsel %vm2675, %v1798, 0.0
          %v2740 = vsel %vm2676, %v1799, 0.0
          %v2741 = vsel %vm2677, %v1800, 0.0
          %v2742 = vsel %vm2678, %v1801, 0.0
          %v2743 = vsel %vm2679, %v1802, 0.0
          %v2744 = vsel %vm2680, %v1803, 0.0
          %v2745 = vsel %vm2681, %v1804, 0.0
          %v2746 = vsel %vm2682, %v1805, 0.0
          %v2747 = vsel %vm2683, %v1806, 0.0
          %v2748 = vsel %vm2684, %v1807, 0.0
          %v2749 = vsel %vm2685, %v1808, 0.0
          %v2750 = vsel %vm2686, %v1809, 0.0
          %v2751 = vsel %vm2687, %v1810, 0.0
          %v2752 = vsel %vm2688, %v1811, 0.0
          %v2753 = vsel %vm2689, %v1812, 0.0
          %v2754 = vsel %vm2690, %v1813, 0.0
          %v2755 = vsel %vm2691, %v1814, 0.0
          %v2756 = vsel %vm2692, %v1815, 0.0
          %v2757 = vsel %vm2693, %v1816, 0.0
          %v2758 = vsel %vm2694, %v1817, 0.0
          %v2759 = vsel %vm2695, %v1818, 0.0
          %v2760 = vsel %vm2696, %v1819, 0.0
          %v2761 = vsel %vm2697, %v1820, 0.0
          %v2762 = vsel %vm2698, %v1821, 0.0
          %v2763 = vsel %vm2699, %v1822, 0.0
          %v2764 = vsel %vm2700, %v1823, 0.0
          %v2765 = vsel %vm2701, %v1824, 0.0
          %v2766 = vsel %vm2702, %v1825, 0.0
          %v2767 = vadd.f32 %v2575, %v2703
          %v2768 = vadd.f32 %v2576, %v2704
          %v2769 = vadd.f32 %v2577, %v2705
          %v2770 = vadd.f32 %v2578, %v2706
          %v2771 = vadd.f32 %v2579, %v2707
          %v2772 = vadd.f32 %v2580, %v2708
          %v2773 = vadd.f32 %v2581, %v2709
          %v2774 = vadd.f32 %v2582, %v2710
          %v2775 = vadd.f32 %v2583, %v2711
          %v2776 = vadd.f32 %v2584, %v2712
          %v2777 = vadd.f32 %v2585, %v2713
          %v2778 = vadd.f32 %v2586, %v2714
          %v2779 = vadd.f32 %v2587, %v2715
          %v2780 = vadd.f32 %v2588, %v2716
          %v2781 = vadd.f32 %v2589, %v2717
          %v2782 = vadd.f32 %v2590, %v2718
          %v2783 = vadd.f32 %v2591, %v2719
          %v2784 = vadd.f32 %v2592, %v2720
          %v2785 = vadd.f32 %v2593, %v2721
          %v2786 = vadd.f32 %v2594, %v2722
          %v2787 = vadd.f32 %v2595, %v2723
          %v2788 = vadd.f32 %v2596, %v2724
          %v2789 = vadd.f32 %v2597, %v2725
          %v2790 = vadd.f32 %v2598, %v2726
          %v2791 = vadd.f32 %v2599, %v2727
          %v2792 = vadd.f32 %v2600, %v2728
          %v2793 = vadd.f32 %v2601, %v2729
          %v2794 = vadd.f32 %v2602, %v2730
          %v2795 = vadd.f32 %v2603, %v2731
          %v2796 = vadd.f32 %v2604, %v2732
          %v2797 = vadd.f32 %v2605, %v2733
          %v2798 = vadd.f32 %v2606, %v2734
          %v2799 = vadd.f32 %v2607, %v2735
          %v2800 = vadd.f32 %v2608, %v2736
          %v2801 = vadd.f32 %v2609, %v2737
          %v2802 = vadd.f32 %v2610, %v2738
          %v2803 = vadd.f32 %v2611, %v2739
          %v2804 = vadd.f32 %v2612, %v2740
          %v2805 = vadd.f32 %v2613, %v2741
          %v2806 = vadd.f32 %v2614, %v2742
          %v2807 = vadd.f32 %v2615, %v2743
          %v2808 = vadd.f32 %v2616, %v2744
          %v2809 = vadd.f32 %v2617, %v2745
          %v2810 = vadd.f32 %v2618, %v2746
          %v2811 = vadd.f32 %v2619, %v2747
          %v2812 = vadd.f32 %v2620, %v2748
          %v2813 = vadd.f32 %v2621, %v2749
          %v2814 = vadd.f32 %v2622, %v2750
          %v2815 = vadd.f32 %v2623, %v2751
          %v2816 = vadd.f32 %v2624, %v2752
          %v2817 = vadd.f32 %v2625, %v2753
          %v2818 = vadd.f32 %v2626, %v2754
          %v2819 = vadd.f32 %v2627, %v2755
          %v2820 = vadd.f32 %v2628, %v2756
          %v2821 = vadd.f32 %v2629, %v2757
          %v2822 = vadd.f32 %v2630, %v2758
          %v2823 = vadd.f32 %v2631, %v2759
          %v2824 = vadd.f32 %v2632, %v2760
          %v2825 = vadd.f32 %v2633, %v2761
          %v2826 = vadd.f32 %v2634, %v2762
          %v2827 = vadd.f32 %v2635, %v2763
          %v2828 = vadd.f32 %v2636, %v2764
          %v2829 = vadd.f32 %v2637, %v2765
          %v2830 = vadd.f32 %v2638, %v2766
          %2831 = vst [vmem:[#allocation3] sm:$0xff] %v2767
          %2832 = vst [vmem:[#allocation3 + $0x8] sm:$0xff] %v2768
          %2833 = vst [vmem:[#allocation3 + $0x10] sm:$0xff] %v2769
          %2834 = vst [vmem:[#allocation3 + $0x18] sm:$0xff] %v2770
          %2835 = vst [vmem:[#allocation3 + $0x20] sm:$0xff] %v2771
          %2836 = vst [vmem:[#allocation3 + $0x28] sm:$0xff] %v2772
          %2837 = vst [vmem:[#allocation3 + $0x30] sm:$0xff] %v2773
          %2838 = vst [vmem:[#allocation3 + $0x38] sm:$0xff] %v2774
          %2839 = vst [vmem:[#allocation3 + $0x40] sm:$0xff] %v2775
          %2840 = vst [vmem:[#allocation3 + $0x48] sm:$0xff] %v2776
          %2841 = vst [vmem:[#allocation3 + $0x50] sm:$0xff] %v2777
          %2842 = vst [vmem:[#allocation3 + $0x58] sm:$0xff] %v2778
          %2843 = vst [vmem:[#allocation3 + $0x60] sm:$0xff] %v2779
          %2844 = vst [vmem:[#allocation3 + $0x68] sm:$0xff] %v2780
          %2845 = vst [vmem:[#allocation3 + $0x70] sm:$0xff] %v2781
          %2846 = vst [vmem:[#allocation3 + $0x78] sm:$0xff] %v2782
          %2847 = vst [vmem:[#allocation3 + $0x80] sm:$0xff] %v2783
          %2848 = vst [vmem:[#allocation3 + $0x88] sm:$0xff] %v2784
          %2849 = vst [vmem:[#allocation3 + $0x90] sm:$0xff] %v2785
          %2850 = vst [vmem:[#allocation3 + $0x98] sm:$0xff] %v2786
          %2851 = vst [vmem:[#allocation3 + $0xa0] sm:$0xff] %v2787
          %2852 = vst [vmem:[#allocation3 + $0xa8] sm:$0xff] %v2788
          %2853 = vst [vmem:[#allocation3 + $0xb0] sm:$0xff] %v2789
          %2854 = vst [vmem:[#allocation3 + $0xb8] sm:$0xff] %v2790
          %2855 = vst [vmem:[#allocation3 + $0xc0] sm:$0xff] %v2791
          %2856 = vst [vmem:[#allocation3 + $0xc8] sm:$0xff] %v2792
          %2857 = vst [vmem:[#allocation3 + $0xd0] sm:$0xff] %v2793
          %2858 = vst [vmem:[#allocation3 + $0xd8] sm:$0xff] %v2794
          %2859 = vst [vmem:[#allocation3 + $0xe0] sm:$0xff] %v2795
          %2860 = vst [vmem:[#allocation3 + $0xe8] sm:$0xff] %v2796
          %2861 = vst [vmem:[#allocation3 + $0xf0] sm:$0xff] %v2797
          %2862 = vst [vmem:[#allocation3 + $0xf8] sm:$0xff] %v2798
          %2863 = vst [vmem:[#allocation3 + $0x100] sm:$0x7] %v2799
          %2864 = vst [vmem:[#allocation3 + $0x108] sm:$0x7] %v2800
          %2865 = vst [vmem:[#allocation3 + $0x110] sm:$0x7] %v2801
          %2866 = vst [vmem:[#allocation3 + $0x118] sm:$0x7] %v2802
          %2867 = vst [vmem:[#allocation3 + $0x120] sm:$0x7] %v2803
          %2868 = vst [vmem:[#allocation3 + $0x128] sm:$0x7] %v2804
          %2869 = vst [vmem:[#allocation3 + $0x130] sm:$0x7] %v2805
          %2870 = vst [vmem:[#allocation3 + $0x138] sm:$0x7] %v2806
          %2871 = vst [vmem:[#allocation3 + $0x140] sm:$0x7] %v2807
          %2872 = vst [vmem:[#allocation3 + $0x148] sm:$0x7] %v2808
          %2873 = vst [vmem:[#allocation3 + $0x150] sm:$0x7] %v2809
          %2874 = vst [vmem:[#allocation3 + $0x158] sm:$0x7] %v2810
          %2875 = vst [vmem:[#allocation3 + $0x160] sm:$0x7] %v2811
          %2876 = vst [vmem:[#allocation3 + $0x168] sm:$0x7] %v2812
          %2877 = vst [vmem:[#allocation3 + $0x170] sm:$0x7] %v2813
          %2878 = vst [vmem:[#allocation3 + $0x178] sm:$0x7] %v2814
          %2879 = vst [vmem:[#allocation3 + $0x180] sm:$0x7] %v2815
          %2880 = vst [vmem:[#allocation3 + $0x188] sm:$0x7] %v2816
          %2881 = vst [vmem:[#allocation3 + $0x190] sm:$0x7] %v2817
          %2882 = vst [vmem:[#allocation3 + $0x198] sm:$0x7] %v2818
          %2883 = vst [vmem:[#allocation3 + $0x1a0] sm:$0x7] %v2819
          %2884 = vst [vmem:[#allocation3 + $0x1a8] sm:$0x7] %v2820
          %2885 = vst [vmem:[#allocation3 + $0x1b0] sm:$0x7] %v2821
          %2886 = vst [vmem:[#allocation3 + $0x1b8] sm:$0x7] %v2822
          %2887 = vst [vmem:[#allocation3 + $0x1c0] sm:$0x7] %v2823
          %2888 = vst [vmem:[#allocation3 + $0x1c8] sm:$0x7] %v2824
          %2889 = vst [vmem:[#allocation3 + $0x1d0] sm:$0x7] %v2825
          %2890 = vst [vmem:[#allocation3 + $0x1d8] sm:$0x7] %v2826
          %2891 = vst [vmem:[#allocation3 + $0x1e0] sm:$0x7] %v2827
          %2892 = vst [vmem:[#allocation3 + $0x1e8] sm:$0x7] %v2828
          %2893 = vst [vmem:[#allocation3 + $0x1f0] sm:$0x7] %v2829
          %2894 = vst [vmem:[#allocation3 + $0x1f8] sm:$0x7] %v2830
        $region48: #{tpu_custom_call.1} parent=27 // pred_fallthru
          _
        %vm2895 = vcmp.eq.s32.totalorder %v607, 1
        %vm2896 = vcmp.eq.s32.totalorder %v608, 1
        %v2897 = vsel %vm2895, 0.8387516, 0.8257477
        %v2898 = vsel %vm2896, 0.8387516, 0.8257477
        %vm2899 = vcmp.eq.s32.totalorder %v607, 2
        %vm2900 = vcmp.eq.s32.totalorder %v608, 2
        %v2901 = vsel %vm2899, 1.053316, %v2897
        %v2902 = vsel %vm2900, 1.053316, %v2898
        %vm2903 = vcmp.eq.s32.totalorder %v607, 3
        %vm2904 = vcmp.eq.s32.totalorder %v608, 3
        %v2905 = vsel %vm2903, 1.26658, %v2901
        %v2906 = vsel %vm2904, 1.26658, %v2902
        %vm2907 = vcmp.eq.s32.totalorder %v607, 4
        %vm2908 = vcmp.eq.s32.totalorder %v608, 4
        %v2909 = vsel %vm2907, 1.0, %v2905
        %v2910 = vsel %vm2908, 1.0, %v2906
        %vm2911 = vcmp.eq.s32.totalorder %v607, 5
        %vm2912 = vcmp.eq.s32.totalorder %v608, 5
        %v2913 = vsel %vm2911, 0.7529259, %v2909
        %v2914 = vsel %vm2912, 0.7529259, %v2910
        %vm2915 = vcmp.eq.s32.totalorder %v607, 6
        %vm2916 = vcmp.eq.s32.totalorder %v608, 6
        %v2917 = vsel %vm2915, 2.0182054, %v2913
        %v2918 = vsel %vm2916, 2.0182054, %v2914
        %vm2919 = vcmp.eq.s32.totalorder %v607, 7
        %vm2920 = vcmp.eq.s32.totalorder %v608, 7
        %v2921 = vsel %vm2919, 0.7854356, %v2917
        %v2922 = vsel %vm2920, 0.7854356, %v2918
        %vm2923 = vcmp.eq.s32.totalorder %v607, 8
        %vm2924 = vcmp.eq.s32.totalorder %v608, 8
        %v2925 = vsel %vm2923, 1.4447334, %v2921
        %v2926 = vsel %vm2924, 1.4447334, %v2922
        %vm2927 = vcmp.eq.s32.totalorder %v607, 9
        %vm2928 = vcmp.eq.s32.totalorder %v608, 9
        %v2929 = vsel %vm2927, 2.0455136, %v2925
        %v2930 = vsel %vm2928, 2.0455136, %v2926
        %vm2931 = vcmp.eq.s32.totalorder %v607, 10
        %vm2932 = vcmp.eq.s32.totalorder %v608, 10
        %v2933 = vsel %vm2931, 0.97269183, %v2929
        %v2934 = vsel %vm2932, 0.97269183, %v2930
        %v2935 = vmul.f32 %v865, %v2933
        %v2936 = vmul.f32 %v866, %v2933
        %v2937 = vmul.f32 %v867, %v2933
        %v2938 = vmul.f32 %v868, %v2933
        %v2939 = vmul.f32 %v869, %v2933
        %v2940 = vmul.f32 %v870, %v2933
        %v2941 = vmul.f32 %v871, %v2933
        %v2942 = vmul.f32 %v872, %v2933
        %v2943 = vmul.f32 %v873, %v2933
        %v2944 = vmul.f32 %v874, %v2933
        %v2945 = vmul.f32 %v875, %v2933
        %v2946 = vmul.f32 %v876, %v2933
        %v2947 = vmul.f32 %v877, %v2933
        %v2948 = vmul.f32 %v878, %v2933
        %v2949 = vmul.f32 %v879, %v2933
        %v2950 = vmul.f32 %v880, %v2933
        %v2951 = vmul.f32 %v881, %v2933
        %v2952 = vmul.f32 %v882, %v2933
        %v2953 = vmul.f32 %v883, %v2933
        %v2954 = vmul.f32 %v884, %v2933
        %v2955 = vmul.f32 %v885, %v2933
        %v2956 = vmul.f32 %v886, %v2933
        %v2957 = vmul.f32 %v887, %v2933
        %v2958 = vmul.f32 %v888, %v2933
        %v2959 = vmul.f32 %v889, %v2933
        %v2960 = vmul.f32 %v890, %v2933
        %v2961 = vmul.f32 %v891, %v2933
        %v2962 = vmul.f32 %v892, %v2933
        %v2963 = vmul.f32 %v893, %v2933
        %v2964 = vmul.f32 %v894, %v2933
        %v2965 = vmul.f32 %v895, %v2933
        %v2966 = vmul.f32 %v896, %v2933
        %v2967 = vmul.f32 %v897, %v2934
        %v2968 = vmul.f32 %v898, %v2934
        %v2969 = vmul.f32 %v899, %v2934
        %v2970 = vmul.f32 %v900, %v2934
        %v2971 = vmul.f32 %v901, %v2934
        %v2972 = vmul.f32 %v902, %v2934
        %v2973 = vmul.f32 %v903, %v2934
        %v2974 = vmul.f32 %v904, %v2934
        %v2975 = vmul.f32 %v905, %v2934
        %v2976 = vmul.f32 %v906, %v2934
        %v2977 = vmul.f32 %v907, %v2934
        %v2978 = vmul.f32 %v908, %v2934
        %v2979 = vmul.f32 %v909, %v2934
        %v2980 = vmul.f32 %v910, %v2934
        %v2981 = vmul.f32 %v911, %v2934
        %v2982 = vmul.f32 %v912, %v2934
        %v2983 = vmul.f32 %v913, %v2934
        %v2984 = vmul.f32 %v914, %v2934
        %v2985 = vmul.f32 %v915, %v2934
        %v2986 = vmul.f32 %v916, %v2934
        %v2987 = vmul.f32 %v917, %v2934
        %v2988 = vmul.f32 %v918, %v2934
        %v2989 = vmul.f32 %v919, %v2934
        %v2990 = vmul.f32 %v920, %v2934
        %v2991 = vmul.f32 %v921, %v2934
        %v2992 = vmul.f32 %v922, %v2934
        %v2993 = vmul.f32 %v923, %v2934
        %v2994 = vmul.f32 %v924, %v2934
        %v2995 = vmul.f32 %v925, %v2934
        %v2996 = vmul.f32 %v926, %v2934
        %v2997 = vmul.f32 %v927, %v2934
        %v2998 = vmul.f32 %v928, %v2934
        %v2999 = vsub.f32 %v1635, %v1186
        %v3000 = vsub.f32 %v1637, %v1187
        %v3001 = vsub.f32 %v1639, %v1188
        %v3002 = vsub.f32 %v1641, %v1189
        %v3003 = vsub.f32 %v1643, %v1190
        %v3004 = vsub.f32 %v1645, %v1191
        %v3005 = vsub.f32 %v1647, %v1192
        %v3006 = vsub.f32 %v1649, %v1193
        %v3007 = vsub.f32 %v1651, %v1194
        %v3008 = vsub.f32 %v1653, %v1195
        %v3009 = vsub.f32 %v1655, %v1196
        %v3010 = vsub.f32 %v1657, %v1197
        %v3011 = vsub.f32 %v1659, %v1198
        %v3012 = vsub.f32 %v1661, %v1199
        %v3013 = vsub.f32 %v1663, %v1200
        %v3014 = vsub.f32 %v1665, %v1201
        %v3015 = vsub.f32 %v1667, %v1202
        %v3016 = vsub.f32 %v1669, %v1203
        %v3017 = vsub.f32 %v1671, %v1204
        %v3018 = vsub.f32 %v1673, %v1205
        %v3019 = vsub.f32 %v1675, %v1206
        %v3020 = vsub.f32 %v1677, %v1207
        %v3021 = vsub.f32 %v1679, %v1208
        %v3022 = vsub.f32 %v1681, %v1209
        %v3023 = vsub.f32 %v1683, %v1210
        %v3024 = vsub.f32 %v1685, %v1211
        %v3025 = vsub.f32 %v1687, %v1212
        %v3026 = vsub.f32 %v1689, %v1213
        %v3027 = vsub.f32 %v1691, %v1214
        %v3028 = vsub.f32 %v1693, %v1215
        %v3029 = vsub.f32 %v1695, %v1216
        %v3030 = vsub.f32 %v1697, %v1217
        %v3031 = vsub.f32 %v1635, %v1218
        %v3032 = vsub.f32 %v1637, %v1219
        %v3033 = vsub.f32 %v1639, %v1220
        %v3034 = vsub.f32 %v1641, %v1221
        %v3035 = vsub.f32 %v1643, %v1222
        %v3036 = vsub.f32 %v1645, %v1223
        %v3037 = vsub.f32 %v1647, %v1224
        %v3038 = vsub.f32 %v1649, %v1225
        %v3039 = vsub.f32 %v1651, %v1226
        %v3040 = vsub.f32 %v1653, %v1227
        %v3041 = vsub.f32 %v1655, %v1228
        %v3042 = vsub.f32 %v1657, %v1229
        %v3043 = vsub.f32 %v1659, %v1230
        %v3044 = vsub.f32 %v1661, %v1231
        %v3045 = vsub.f32 %v1663, %v1232
        %v3046 = vsub.f32 %v1665, %v1233
        %v3047 = vsub.f32 %v1667, %v1234
        %v3048 = vsub.f32 %v1669, %v1235
        %v3049 = vsub.f32 %v1671, %v1236
        %v3050 = vsub.f32 %v1673, %v1237
        %v3051 = vsub.f32 %v1675, %v1238
        %v3052 = vsub.f32 %v1677, %v1239
        %v3053 = vsub.f32 %v1679, %v1240
        %v3054 = vsub.f32 %v1681, %v1241
        %v3055 = vsub.f32 %v1683, %v1242
        %v3056 = vsub.f32 %v1685, %v1243
        %v3057 = vsub.f32 %v1687, %v1244
        %v3058 = vsub.f32 %v1689, %v1245
        %v3059 = vsub.f32 %v1691, %v1246
        %v3060 = vsub.f32 %v1693, %v1247
        %v3061 = vsub.f32 %v1695, %v1248
        %v3062 = vsub.f32 %v1697, %v1249
        %v3063 = vmul.f32 %v2935, %v2999
        %v3064 = vmul.f32 %v2936, %v3000
        %v3065 = vmul.f32 %v2937, %v3001
        %v3066 = vmul.f32 %v2938, %v3002
        %v3067 = vmul.f32 %v2939, %v3003
        %v3068 = vmul.f32 %v2940, %v3004
        %v3069 = vmul.f32 %v2941, %v3005
        %v3070 = vmul.f32 %v2942, %v3006
        %v3071 = vmul.f32 %v2943, %v3007
        %v3072 = vmul.f32 %v2944, %v3008
        %v3073 = vmul.f32 %v2945, %v3009
        %v3074 = vmul.f32 %v2946, %v3010
        %v3075 = vmul.f32 %v2947, %v3011
        %v3076 = vmul.f32 %v2948, %v3012
        %v3077 = vmul.f32 %v2949, %v3013
        %v3078 = vmul.f32 %v2950, %v3014
        %v3079 = vmul.f32 %v2951, %v3015
        %v3080 = vmul.f32 %v2952, %v3016
        %v3081 = vmul.f32 %v2953, %v3017
        %v3082 = vmul.f32 %v2954, %v3018
        %v3083 = vmul.f32 %v2955, %v3019
        %v3084 = vmul.f32 %v2956, %v3020
        %v3085 = vmul.f32 %v2957, %v3021
        %v3086 = vmul.f32 %v2958, %v3022
        %v3087 = vmul.f32 %v2959, %v3023
        %v3088 = vmul.f32 %v2960, %v3024
        %v3089 = vmul.f32 %v2961, %v3025
        %v3090 = vmul.f32 %v2962, %v3026
        %v3091 = vmul.f32 %v2963, %v3027
        %v3092 = vmul.f32 %v2964, %v3028
        %v3093 = vmul.f32 %v2965, %v3029
        %v3094 = vmul.f32 %v2966, %v3030
        %v3095 = vmul.f32 %v2967, %v3031
        %v3096 = vmul.f32 %v2968, %v3032
        %v3097 = vmul.f32 %v2969, %v3033
        %v3098 = vmul.f32 %v2970, %v3034
        %v3099 = vmul.f32 %v2971, %v3035
        %v3100 = vmul.f32 %v2972, %v3036
        %v3101 = vmul.f32 %v2973, %v3037
        %v3102 = vmul.f32 %v2974, %v3038
        %v3103 = vmul.f32 %v2975, %v3039
        %v3104 = vmul.f32 %v2976, %v3040
        %v3105 = vmul.f32 %v2977, %v3041
        %v3106 = vmul.f32 %v2978, %v3042
        %v3107 = vmul.f32 %v2979, %v3043
        %v3108 = vmul.f32 %v2980, %v3044
        %v3109 = vmul.f32 %v2981, %v3045
        %v3110 = vmul.f32 %v2982, %v3046
        %v3111 = vmul.f32 %v2983, %v3047
        %v3112 = vmul.f32 %v2984, %v3048
        %v3113 = vmul.f32 %v2985, %v3049
        %v3114 = vmul.f32 %v2986, %v3050
        %v3115 = vmul.f32 %v2987, %v3051
        %v3116 = vmul.f32 %v2988, %v3052
        %v3117 = vmul.f32 %v2989, %v3053
        %v3118 = vmul.f32 %v2990, %v3054
        %v3119 = vmul.f32 %v2991, %v3055
        %v3120 = vmul.f32 %v2992, %v3056
        %v3121 = vmul.f32 %v2993, %v3057
        %v3122 = vmul.f32 %v2994, %v3058
        %v3123 = vmul.f32 %v2995, %v3059
        %v3124 = vmul.f32 %v2996, %v3060
        %v3125 = vmul.f32 %v2997, %v3061
        %v3126 = vmul.f32 %v2998, %v3062
        %v3127 = vsel %vm929, %v3095, 0.0
        %v3128 = vadd.f32 %v3063, %v3127
        %v3129 = vrot.slane %v3128, 4
        %v3130 = vadd.f32 %v3128, %v3129
        %v3131 = vrot.slane %v3130, 2
        %v3132 = vadd.f32 %v3130, %v3131
        %v3133 = vrot.slane %v3132, 1
        %v3134 = vadd.f32 %v3132, %v3133
        %v3135 = vsel %vm929, %v3096, 0.0
        %v3136 = vadd.f32 %v3064, %v3135
        %v3137 = vrot.slane %v3136, 4
        %v3138 = vadd.f32 %v3136, %v3137
        %v3139 = vrot.slane %v3138, 2
        %v3140 = vadd.f32 %v3138, %v3139
        %v3141 = vrot.slane %v3140, 1
        %v3142 = vadd.f32 %v3140, %v3141
        %v3143 = vsel %vm929, %v3097, 0.0
        %v3144 = vadd.f32 %v3065, %v3143
        %v3145 = vrot.slane %v3144, 4
        %v3146 = vadd.f32 %v3144, %v3145
        %v3147 = vrot.slane %v3146, 2
        %v3148 = vadd.f32 %v3146, %v3147
        %v3149 = vrot.slane %v3148, 1
        %v3150 = vadd.f32 %v3148, %v3149
        %v3151 = vsel %vm929, %v3098, 0.0
        %v3152 = vadd.f32 %v3066, %v3151
        %v3153 = vrot.slane %v3152, 4
        %v3154 = vadd.f32 %v3152, %v3153
        %v3155 = vrot.slane %v3154, 2
        %v3156 = vadd.f32 %v3154, %v3155
        %v3157 = vrot.slane %v3156, 1
        %v3158 = vadd.f32 %v3156, %v3157
        %v3159 = vsel %vm929, %v3099, 0.0
        %v3160 = vadd.f32 %v3067, %v3159
        %v3161 = vrot.slane %v3160, 4
        %v3162 = vadd.f32 %v3160, %v3161
        %v3163 = vrot.slane %v3162, 2
        %v3164 = vadd.f32 %v3162, %v3163
        %v3165 = vrot.slane %v3164, 1
        %v3166 = vadd.f32 %v3164, %v3165
        %v3167 = vsel %vm929, %v3100, 0.0
        %v3168 = vadd.f32 %v3068, %v3167
        %v3169 = vrot.slane %v3168, 4
        %v3170 = vadd.f32 %v3168, %v3169
        %v3171 = vrot.slane %v3170, 2
        %v3172 = vadd.f32 %v3170, %v3171
        %v3173 = vrot.slane %v3172, 1
        %v3174 = vadd.f32 %v3172, %v3173
        %v3175 = vsel %vm929, %v3101, 0.0
        %v3176 = vadd.f32 %v3069, %v3175
        %v3177 = vrot.slane %v3176, 4
        %v3178 = vadd.f32 %v3176, %v3177
        %v3179 = vrot.slane %v3178, 2
        %v3180 = vadd.f32 %v3178, %v3179
        %v3181 = vrot.slane %v3180, 1
        %v3182 = vadd.f32 %v3180, %v3181
        %v3183 = vsel %vm929, %v3102, 0.0
        %v3184 = vadd.f32 %v3070, %v3183
        %v3185 = vrot.slane %v3184, 4
        %v3186 = vadd.f32 %v3184, %v3185
        %v3187 = vrot.slane %v3186, 2
        %v3188 = vadd.f32 %v3186, %v3187
        %v3189 = vrot.slane %v3188, 1
        %v3190 = vadd.f32 %v3188, %v3189
        %v3191 = vsel %vm929, %v3103, 0.0
        %v3192 = vadd.f32 %v3071, %v3191
        %v3193 = vrot.slane %v3192, 4
        %v3194 = vadd.f32 %v3192, %v3193
        %v3195 = vrot.slane %v3194, 2
        %v3196 = vadd.f32 %v3194, %v3195
        %v3197 = vrot.slane %v3196, 1
        %v3198 = vadd.f32 %v3196, %v3197
        %v3199 = vsel %vm929, %v3104, 0.0
        %v3200 = vadd.f32 %v3072, %v3199
        %v3201 = vrot.slane %v3200, 4
        %v3202 = vadd.f32 %v3200, %v3201
        %v3203 = vrot.slane %v3202, 2
        %v3204 = vadd.f32 %v3202, %v3203
        %v3205 = vrot.slane %v3204, 1
        %v3206 = vadd.f32 %v3204, %v3205
        %v3207 = vsel %vm929, %v3105, 0.0
        %v3208 = vadd.f32 %v3073, %v3207
        %v3209 = vrot.slane %v3208, 4
        %v3210 = vadd.f32 %v3208, %v3209
        %v3211 = vrot.slane %v3210, 2
        %v3212 = vadd.f32 %v3210, %v3211
        %v3213 = vrot.slane %v3212, 1
        %v3214 = vadd.f32 %v3212, %v3213
        %v3215 = vsel %vm929, %v3106, 0.0
        %v3216 = vadd.f32 %v3074, %v3215
        %v3217 = vrot.slane %v3216, 4
        %v3218 = vadd.f32 %v3216, %v3217
        %v3219 = vrot.slane %v3218, 2
        %v3220 = vadd.f32 %v3218, %v3219
        %v3221 = vrot.slane %v3220, 1
        %v3222 = vadd.f32 %v3220, %v3221
        %v3223 = vsel %vm929, %v3107, 0.0
        %v3224 = vadd.f32 %v3075, %v3223
        %v3225 = vrot.slane %v3224, 4
        %v3226 = vadd.f32 %v3224, %v3225
        %v3227 = vrot.slane %v3226, 2
        %v3228 = vadd.f32 %v3226, %v3227
        %v3229 = vrot.slane %v3228, 1
        %v3230 = vadd.f32 %v3228, %v3229
        %v3231 = vsel %vm929, %v3108, 0.0
        %v3232 = vadd.f32 %v3076, %v3231
        %v3233 = vrot.slane %v3232, 4
        %v3234 = vadd.f32 %v3232, %v3233
        %v3235 = vrot.slane %v3234, 2
        %v3236 = vadd.f32 %v3234, %v3235
        %v3237 = vrot.slane %v3236, 1
        %v3238 = vadd.f32 %v3236, %v3237
        %v3239 = vsel %vm929, %v3109, 0.0
        %v3240 = vadd.f32 %v3077, %v3239
        %v3241 = vrot.slane %v3240, 4
        %v3242 = vadd.f32 %v3240, %v3241
        %v3243 = vrot.slane %v3242, 2
        %v3244 = vadd.f32 %v3242, %v3243
        %v3245 = vrot.slane %v3244, 1
        %v3246 = vadd.f32 %v3244, %v3245
        %v3247 = vsel %vm929, %v3110, 0.0
        %v3248 = vadd.f32 %v3078, %v3247
        %v3249 = vrot.slane %v3248, 4
        %v3250 = vadd.f32 %v3248, %v3249
        %v3251 = vrot.slane %v3250, 2
        %v3252 = vadd.f32 %v3250, %v3251
        %v3253 = vrot.slane %v3252, 1
        %v3254 = vadd.f32 %v3252, %v3253
        %v3255 = vsel %vm929, %v3111, 0.0
        %v3256 = vadd.f32 %v3079, %v3255
        %v3257 = vrot.slane %v3256, 4
        %v3258 = vadd.f32 %v3256, %v3257
        %v3259 = vrot.slane %v3258, 2
        %v3260 = vadd.f32 %v3258, %v3259
        %v3261 = vrot.slane %v3260, 1
        %v3262 = vadd.f32 %v3260, %v3261
        %v3263 = vsel %vm929, %v3112, 0.0
        %v3264 = vadd.f32 %v3080, %v3263
        %v3265 = vrot.slane %v3264, 4
        %v3266 = vadd.f32 %v3264, %v3265
        %v3267 = vrot.slane %v3266, 2
        %v3268 = vadd.f32 %v3266, %v3267
        %v3269 = vrot.slane %v3268, 1
        %v3270 = vadd.f32 %v3268, %v3269
        %v3271 = vsel %vm929, %v3113, 0.0
        %v3272 = vadd.f32 %v3081, %v3271
        %v3273 = vrot.slane %v3272, 4
        %v3274 = vadd.f32 %v3272, %v3273
        %v3275 = vrot.slane %v3274, 2
        %v3276 = vadd.f32 %v3274, %v3275
        %v3277 = vrot.slane %v3276, 1
        %v3278 = vadd.f32 %v3276, %v3277
        %v3279 = vsel %vm929, %v3114, 0.0
        %v3280 = vadd.f32 %v3082, %v3279
        %v3281 = vrot.slane %v3280, 4
        %v3282 = vadd.f32 %v3280, %v3281
        %v3283 = vrot.slane %v3282, 2
        %v3284 = vadd.f32 %v3282, %v3283
        %v3285 = vrot.slane %v3284, 1
        %v3286 = vadd.f32 %v3284, %v3285
        %v3287 = vsel %vm929, %v3115, 0.0
        %v3288 = vadd.f32 %v3083, %v3287
        %v3289 = vrot.slane %v3288, 4
        %v3290 = vadd.f32 %v3288, %v3289
        %v3291 = vrot.slane %v3290, 2
        %v3292 = vadd.f32 %v3290, %v3291
        %v3293 = vrot.slane %v3292, 1
        %v3294 = vadd.f32 %v3292, %v3293
        %v3295 = vsel %vm929, %v3116, 0.0
        %v3296 = vadd.f32 %v3084, %v3295
        %v3297 = vrot.slane %v3296, 4
        %v3298 = vadd.f32 %v3296, %v3297
        %v3299 = vrot.slane %v3298, 2
        %v3300 = vadd.f32 %v3298, %v3299
        %v3301 = vrot.slane %v3300, 1
        %v3302 = vadd.f32 %v3300, %v3301
        %v3303 = vsel %vm929, %v3117, 0.0
        %v3304 = vadd.f32 %v3085, %v3303
        %v3305 = vrot.slane %v3304, 4
        %v3306 = vadd.f32 %v3304, %v3305
        %v3307 = vrot.slane %v3306, 2
        %v3308 = vadd.f32 %v3306, %v3307
        %v3309 = vrot.slane %v3308, 1
        %v3310 = vadd.f32 %v3308, %v3309
        %v3311 = vsel %vm929, %v3118, 0.0
        %v3312 = vadd.f32 %v3086, %v3311
        %v3313 = vrot.slane %v3312, 4
        %v3314 = vadd.f32 %v3312, %v3313
        %v3315 = vrot.slane %v3314, 2
        %v3316 = vadd.f32 %v3314, %v3315
        %v3317 = vrot.slane %v3316, 1
        %v3318 = vadd.f32 %v3316, %v3317
        %v3319 = vsel %vm929, %v3119, 0.0
        %v3320 = vadd.f32 %v3087, %v3319
        %v3321 = vrot.slane %v3320, 4
        %v3322 = vadd.f32 %v3320, %v3321
        %v3323 = vrot.slane %v3322, 2
        %v3324 = vadd.f32 %v3322, %v3323
        %v3325 = vrot.slane %v3324, 1
        %v3326 = vadd.f32 %v3324, %v3325
        %v3327 = vsel %vm929, %v3120, 0.0
        %v3328 = vadd.f32 %v3088, %v3327
        %v3329 = vrot.slane %v3328, 4
        %v3330 = vadd.f32 %v3328, %v3329
        %v3331 = vrot.slane %v3330, 2
        %v3332 = vadd.f32 %v3330, %v3331
        %v3333 = vrot.slane %v3332, 1
        %v3334 = vadd.f32 %v3332, %v3333
        %v3335 = vsel %vm929, %v3121, 0.0
        %v3336 = vadd.f32 %v3089, %v3335
        %v3337 = vrot.slane %v3336, 4
        %v3338 = vadd.f32 %v3336, %v3337
        %v3339 = vrot.slane %v3338, 2
        %v3340 = vadd.f32 %v3338, %v3339
        %v3341 = vrot.slane %v3340, 1
        %v3342 = vadd.f32 %v3340, %v3341
        %v3343 = vsel %vm929, %v3122, 0.0
        %v3344 = vadd.f32 %v3090, %v3343
        %v3345 = vrot.slane %v3344, 4
        %v3346 = vadd.f32 %v3344, %v3345
        %v3347 = vrot.slane %v3346, 2
        %v3348 = vadd.f32 %v3346, %v3347
        %v3349 = vrot.slane %v3348, 1
        %v3350 = vadd.f32 %v3348, %v3349
        %v3351 = vsel %vm929, %v3123, 0.0
        %v3352 = vadd.f32 %v3091, %v3351
        %v3353 = vrot.slane %v3352, 4
        %v3354 = vadd.f32 %v3352, %v3353
        %v3355 = vrot.slane %v3354, 2
        %v3356 = vadd.f32 %v3354, %v3355
        %v3357 = vrot.slane %v3356, 1
        %v3358 = vadd.f32 %v3356, %v3357
        %v3359 = vsel %vm929, %v3124, 0.0
        %v3360 = vadd.f32 %v3092, %v3359
        %v3361 = vrot.slane %v3360, 4
        %v3362 = vadd.f32 %v3360, %v3361
        %v3363 = vrot.slane %v3362, 2
        %v3364 = vadd.f32 %v3362, %v3363
        %v3365 = vrot.slane %v3364, 1
        %v3366 = vadd.f32 %v3364, %v3365
        %v3367 = vsel %vm929, %v3125, 0.0
        %v3368 = vadd.f32 %v3093, %v3367
        %v3369 = vrot.slane %v3368, 4
        %v3370 = vadd.f32 %v3368, %v3369
        %v3371 = vrot.slane %v3370, 2
        %v3372 = vadd.f32 %v3370, %v3371
        %v3373 = vrot.slane %v3372, 1
        %v3374 = vadd.f32 %v3372, %v3373
        %v3375 = vsel %vm929, %v3126, 0.0
        %v3376 = vadd.f32 %v3094, %v3375
        %v3377 = vrot.slane %v3376, 4
        %v3378 = vadd.f32 %v3376, %v3377
        %v3379 = vrot.slane %v3378, 2
        %v3380 = vadd.f32 %v3378, %v3379
        %v3381 = vrot.slane %v3380, 1
        %v3382 = vadd.f32 %v3380, %v3381
        %v3383 = vsub.f32 0.0, %v3134
        %v3384 = vsub.f32 0.0, %v3142
        %v3385 = vsub.f32 0.0, %v3150
        %v3386 = vsub.f32 0.0, %v3158
        %v3387 = vsub.f32 0.0, %v3166
        %v3388 = vsub.f32 0.0, %v3174
        %v3389 = vsub.f32 0.0, %v3182
        %v3390 = vsub.f32 0.0, %v3190
        %v3391 = vsub.f32 0.0, %v3198
        %v3392 = vsub.f32 0.0, %v3206
        %v3393 = vsub.f32 0.0, %v3214
        %v3394 = vsub.f32 0.0, %v3222
        %v3395 = vsub.f32 0.0, %v3230
        %v3396 = vsub.f32 0.0, %v3238
        %v3397 = vsub.f32 0.0, %v3246
        %v3398 = vsub.f32 0.0, %v3254
        %v3399 = vsub.f32 0.0, %v3262
        %v3400 = vsub.f32 0.0, %v3270
        %v3401 = vsub.f32 0.0, %v3278
        %v3402 = vsub.f32 0.0, %v3286
        %v3403 = vsub.f32 0.0, %v3294
        %v3404 = vsub.f32 0.0, %v3302
        %v3405 = vsub.f32 0.0, %v3310
        %v3406 = vsub.f32 0.0, %v3318
        %v3407 = vsub.f32 0.0, %v3326
        %v3408 = vsub.f32 0.0, %v3334
        %v3409 = vsub.f32 0.0, %v3342
        %v3410 = vsub.f32 0.0, %v3350
        %v3411 = vsub.f32 0.0, %v3358
        %v3412 = vsub.f32 0.0, %v3366
        %v3413 = vsub.f32 0.0, %v3374
        %v3414 = vsub.f32 0.0, %v3382
        %v3415 = vmul.f32 %v3383, 1.442695
        %v3416 = vpow.pop %v3415
        %v3417 = vmul.f32 %v3384, 1.442695
        %v3418 = vpow.pop %v3417
        %v3419 = vmul.f32 %v3385, 1.442695
        %v3420 = vpow.pop %v3419
        %v3421 = vmul.f32 %v3386, 1.442695
        %v3422 = vpow.pop %v3421
        %v3423 = vmul.f32 %v3387, 1.442695
        %v3424 = vpow.pop %v3423
        %v3425 = vmul.f32 %v3388, 1.442695
        %v3426 = vpow.pop %v3425
        %v3427 = vmul.f32 %v3389, 1.442695
        %v3428 = vpow.pop %v3427
        %v3429 = vmul.f32 %v3390, 1.442695
        %v3430 = vpow.pop %v3429
        %v3431 = vmul.f32 %v3391, 1.442695
        %v3432 = vpow.pop %v3431
        %v3433 = vmul.f32 %v3392, 1.442695
        %v3434 = vpow.pop %v3433
        %v3435 = vmul.f32 %v3393, 1.442695
        %v3436 = vpow.pop %v3435
        %v3437 = vmul.f32 %v3394, 1.442695
        %v3438 = vpow.pop %v3437
        %v3439 = vmul.f32 %v3395, 1.442695
        %v3440 = vpow.pop %v3439
        %v3441 = vmul.f32 %v3396, 1.442695
        %v3442 = vpow.pop %v3441
        %v3443 = vmul.f32 %v3397, 1.442695
        %v3444 = vpow.pop %v3443
        %v3445 = vmul.f32 %v3398, 1.442695
        %v3446 = vpow.pop %v3445
        %v3447 = vmul.f32 %v3399, 1.442695
        %v3448 = vpow.pop %v3447
        %v3449 = vmul.f32 %v3400, 1.442695
        %v3450 = vpow.pop %v3449
        %v3451 = vmul.f32 %v3401, 1.442695
        %v3452 = vpow.pop %v3451
        %v3453 = vmul.f32 %v3402, 1.442695
        %v3454 = vpow.pop %v3453
        %v3455 = vmul.f32 %v3403, 1.442695
        %v3456 = vpow.pop %v3455
        %v3457 = vmul.f32 %v3404, 1.442695
        %v3458 = vpow.pop %v3457
        %v3459 = vmul.f32 %v3405, 1.442695
        %v3460 = vpow.pop %v3459
        %v3461 = vmul.f32 %v3406, 1.442695
        %v3462 = vpow.pop %v3461
        %v3463 = vmul.f32 %v3407, 1.442695
        %v3464 = vpow.pop %v3463
        %v3465 = vmul.f32 %v3408, 1.442695
        %v3466 = vpow.pop %v3465
        %v3467 = vmul.f32 %v3409, 1.442695
        %v3468 = vpow.pop %v3467
        %v3469 = vmul.f32 %v3410, 1.442695
        %v3470 = vpow.pop %v3469
        %v3471 = vmul.f32 %v3411, 1.442695
        %v3472 = vpow.pop %v3471
        %v3473 = vmul.f32 %v3412, 1.442695
        %v3474 = vpow.pop %v3473
        %v3475 = vmul.f32 %v3413, 1.442695
        %v3476 = vpow.pop %v3475
        %v3477 = vmul.f32 %v3414, 1.442695
        %v3478 = vpow.pop %v3477
        %v3479 = vsub.f32 1.0, %v3416
        %v3480 = vsub.f32 1.0, %v3418
        %v3481 = vsub.f32 1.0, %v3420
        %v3482 = vsub.f32 1.0, %v3422
        %v3483 = vsub.f32 1.0, %v3424
        %v3484 = vsub.f32 1.0, %v3426
        %v3485 = vsub.f32 1.0, %v3428
        %v3486 = vsub.f32 1.0, %v3430
        %v3487 = vsub.f32 1.0, %v3432
        %v3488 = vsub.f32 1.0, %v3434
        %v3489 = vsub.f32 1.0, %v3436
        %v3490 = vsub.f32 1.0, %v3438
        %v3491 = vsub.f32 1.0, %v3440
        %v3492 = vsub.f32 1.0, %v3442
        %v3493 = vsub.f32 1.0, %v3444
        %v3494 = vsub.f32 1.0, %v3446
        %v3495 = vsub.f32 1.0, %v3448
        %v3496 = vsub.f32 1.0, %v3450
        %v3497 = vsub.f32 1.0, %v3452
        %v3498 = vsub.f32 1.0, %v3454
        %v3499 = vsub.f32 1.0, %v3456
        %v3500 = vsub.f32 1.0, %v3458
        %v3501 = vsub.f32 1.0, %v3460
        %v3502 = vsub.f32 1.0, %v3462
        %v3503 = vsub.f32 1.0, %v3464
        %v3504 = vsub.f32 1.0, %v3466
        %v3505 = vsub.f32 1.0, %v3468
        %v3506 = vsub.f32 1.0, %v3470
        %v3507 = vsub.f32 1.0, %v3472
        %v3508 = vsub.f32 1.0, %v3474
        %v3509 = vsub.f32 1.0, %v3476
        %v3510 = vsub.f32 1.0, %v3478
        %v3511 = vld [vmem:[#allocation5] sm:$0xff]
        %v3512 = vld [vmem:[#allocation5 + $0x8] sm:$0xff]
        %v3513 = vld [vmem:[#allocation5 + $0x10] sm:$0xff]
        %v3514 = vld [vmem:[#allocation5 + $0x18] sm:$0xff]
        %v3515 = vmul.f32 %v3479, %v3479
        %v3516 = vmul.f32 %v3480, %v3480
        %v3517 = vmul.f32 %v3481, %v3481
        %v3518 = vmul.f32 %v3482, %v3482
        %v3519 = vmul.f32 %v3483, %v3483
        %v3520 = vmul.f32 %v3484, %v3484
        %v3521 = vmul.f32 %v3485, %v3485
        %v3522 = vmul.f32 %v3486, %v3486
        %v3523 = vmul.f32 %v3487, %v3487
        %v3524 = vmul.f32 %v3488, %v3488
        %v3525 = vmul.f32 %v3489, %v3489
        %v3526 = vmul.f32 %v3490, %v3490
        %v3527 = vmul.f32 %v3491, %v3491
        %v3528 = vmul.f32 %v3492, %v3492
        %v3529 = vmul.f32 %v3493, %v3493
        %v3530 = vmul.f32 %v3494, %v3494
        %v3531 = vmul.f32 %v3495, %v3495
        %v3532 = vmul.f32 %v3496, %v3496
        %v3533 = vmul.f32 %v3497, %v3497
        %v3534 = vmul.f32 %v3498, %v3498
        %v3535 = vmul.f32 %v3499, %v3499
        %v3536 = vmul.f32 %v3500, %v3500
        %v3537 = vmul.f32 %v3501, %v3501
        %v3538 = vmul.f32 %v3502, %v3502
        %v3539 = vmul.f32 %v3503, %v3503
        %v3540 = vmul.f32 %v3504, %v3504
        %v3541 = vmul.f32 %v3505, %v3505
        %v3542 = vmul.f32 %v3506, %v3506
        %v3543 = vmul.f32 %v3507, %v3507
        %v3544 = vmul.f32 %v3508, %v3508
        %v3545 = vmul.f32 %v3509, %v3509
        %v3546 = vmul.f32 %v3510, %v3510
        %v3547 = vmul.f32 %v3515, %v3134
        %v3548 = vmul.f32 %v3516, %v3142
        %v3549 = vmul.f32 %v3517, %v3150
        %v3550 = vmul.f32 %v3518, %v3158
        %v3551 = vmul.f32 %v3519, %v3166
        %v3552 = vmul.f32 %v3520, %v3174
        %v3553 = vmul.f32 %v3521, %v3182
        %v3554 = vmul.f32 %v3522, %v3190
        %v3555 = vmul.f32 %v3523, %v3198
        %v3556 = vmul.f32 %v3524, %v3206
        %v3557 = vmul.f32 %v3525, %v3214
        %v3558 = vmul.f32 %v3526, %v3222
        %v3559 = vmul.f32 %v3527, %v3230
        %v3560 = vmul.f32 %v3528, %v3238
        %v3561 = vmul.f32 %v3529, %v3246
        %v3562 = vmul.f32 %v3530, %v3254
        %v3563 = vmul.f32 %v3531, %v3262
        %v3564 = vmul.f32 %v3532, %v3270
        %v3565 = vmul.f32 %v3533, %v3278
        %v3566 = vmul.f32 %v3534, %v3286
        %v3567 = vmul.f32 %v3535, %v3294
        %v3568 = vmul.f32 %v3536, %v3302
        %v3569 = vmul.f32 %v3537, %v3310
        %v3570 = vmul.f32 %v3538, %v3318
        %v3571 = vmul.f32 %v3539, %v3326
        %v3572 = vmul.f32 %v3540, %v3334
        %v3573 = vmul.f32 %v3541, %v3342
        %v3574 = vmul.f32 %v3542, %v3350
        %v3575 = vmul.f32 %v3543, %v3358
        %v3576 = vmul.f32 %v3544, %v3366
        %v3577 = vmul.f32 %v3545, %v3374
        %v3578 = vmul.f32 %v3546, %v3382
        %v3611 = vcombine.low %v3547, %v3548
        %v3612 = vcombine.low %v3549, %v3550
        %v3613 = vcombine.low %v3551, %v3552
        %v3614 = vcombine.low %v3553, %v3554
        %v3616 = vunpack.c.l.s4 1966171168
        %v3617 = vunpack.c.0.s8 %v3616
        %v3618 = vlaneseq
        %v3619 = vshrl.u32 %v3618, 7
        %v3620 = vsub.s32 %v3617, %v3619
        %v3621 = vrot.slane %v3611, %v3620
        %v3623 = vunpack.c.l.s4 1966171168
        %v3624 = vunpack.c.0.s8 %v3623
        %v3625 = vlaneseq
        %v3626 = vshrl.u32 %v3625, 7
        %v3627 = vsub.s32 %v3624, %v3626
        %v3628 = vrot.slane %v3612, %v3627
        %v3630 = vunpack.c.l.s4 1966171168
        %v3631 = vunpack.c.0.s8 %v3630
        %v3632 = vlaneseq
        %v3633 = vshrl.u32 %v3632, 7
        %v3634 = vsub.s32 %v3631, %v3633
        %v3635 = vrot.slane %v3613, %v3634
        %v3637 = vunpack.c.l.s4 1966171168
        %v3638 = vunpack.c.0.s8 %v3637
        %v3639 = vlaneseq
        %v3640 = vshrl.u32 %v3639, 7
        %v3641 = vsub.s32 %v3638, %v3640
        %v3642 = vrot.slane %v3614, %v3641
        %v3643 = vcombine.low %v3621, %v3628
        %v3644 = vcombine.low %v3635, %v3642
        %v3646 = vunpack.c.l.s4 1966171168
        %v3647 = vunpack.c.0.s8 %v3646
        %v3648 = vlaneseq
        %v3649 = vshrl.u32 %v3648, 7
        %v3650 = vsub.s32 %v3647, %v3649
        %v3651 = vrot.slane %v3643, %v3650
        %v3653 = vunpack.c.l.s4 1966171168
        %v3654 = vunpack.c.0.s8 %v3653
        %v3655 = vlaneseq
        %v3656 = vshrl.u32 %v3655, 7
        %v3657 = vsub.s32 %v3654, %v3656
        %v3658 = vrot.slane %v3644, %v3657
        %v3659 = vcombine.low %v3651, %v3658
        %v3660 = vcombine.low %v3555, %v3556
        %v3661 = vcombine.low %v3557, %v3558
        %v3662 = vcombine.low %v3559, %v3560
        %v3663 = vcombine.low %v3561, %v3562
        %v3665 = vunpack.c.l.s4 1966171168
        %v3666 = vunpack.c.0.s8 %v3665
        %v3667 = vlaneseq
        %v3668 = vshrl.u32 %v3667, 7
        %v3669 = vsub.s32 %v3666, %v3668
        %v3670 = vrot.slane %v3660, %v3669
        %v3672 = vunpack.c.l.s4 1966171168
        %v3673 = vunpack.c.0.s8 %v3672
        %v3674 = vlaneseq
        %v3675 = vshrl.u32 %v3674, 7
        %v3676 = vsub.s32 %v3673, %v3675
        %v3677 = vrot.slane %v3661, %v3676
        %v3679 = vunpack.c.l.s4 1966171168
        %v3680 = vunpack.c.0.s8 %v3679
        %v3681 = vlaneseq
        %v3682 = vshrl.u32 %v3681, 7
        %v3683 = vsub.s32 %v3680, %v3682
        %v3684 = vrot.slane %v3662, %v3683
        %v3686 = vunpack.c.l.s4 1966171168
        %v3687 = vunpack.c.0.s8 %v3686
        %v3688 = vlaneseq
        %v3689 = vshrl.u32 %v3688, 7
        %v3690 = vsub.s32 %v3687, %v3689
        %v3691 = vrot.slane %v3663, %v3690
        %v3692 = vcombine.low %v3670, %v3677
        %v3693 = vcombine.low %v3684, %v3691
        %v3695 = vunpack.c.l.s4 1966171168
        %v3696 = vunpack.c.0.s8 %v3695
        %v3697 = vlaneseq
        %v3698 = vshrl.u32 %v3697, 7
        %v3699 = vsub.s32 %v3696, %v3698
        %v3700 = vrot.slane %v3692, %v3699
        %v3702 = vunpack.c.l.s4 1966171168
        %v3703 = vunpack.c.0.s8 %v3702
        %v3704 = vlaneseq
        %v3705 = vshrl.u32 %v3704, 7
        %v3706 = vsub.s32 %v3703, %v3705
        %v3707 = vrot.slane %v3693, %v3706
        %v3708 = vcombine.low %v3700, %v3707
        %v3709 = vcombine.low %v3563, %v3564
        %v3710 = vcombine.low %v3565, %v3566
        %v3711 = vcombine.low %v3567, %v3568
        %v3712 = vcombine.low %v3569, %v3570
        %v3714 = vunpack.c.l.s4 1966171168
        %v3715 = vunpack.c.0.s8 %v3714
        %v3716 = vlaneseq
        %v3717 = vshrl.u32 %v3716, 7
        %v3718 = vsub.s32 %v3715, %v3717
        %v3719 = vrot.slane %v3709, %v3718
        %v3721 = vunpack.c.l.s4 1966171168
        %v3722 = vunpack.c.0.s8 %v3721
        %v3723 = vlaneseq
        %v3724 = vshrl.u32 %v3723, 7
        %v3725 = vsub.s32 %v3722, %v3724
        %v3726 = vrot.slane %v3710, %v3725
        %v3728 = vunpack.c.l.s4 1966171168
        %v3729 = vunpack.c.0.s8 %v3728
        %v3730 = vlaneseq
        %v3731 = vshrl.u32 %v3730, 7
        %v3732 = vsub.s32 %v3729, %v3731
        %v3733 = vrot.slane %v3711, %v3732
        %v3735 = vunpack.c.l.s4 1966171168
        %v3736 = vunpack.c.0.s8 %v3735
        %v3737 = vlaneseq
        %v3738 = vshrl.u32 %v3737, 7
        %v3739 = vsub.s32 %v3736, %v3738
        %v3740 = vrot.slane %v3712, %v3739
        %v3741 = vcombine.low %v3719, %v3726
        %v3742 = vcombine.low %v3733, %v3740
        %v3744 = vunpack.c.l.s4 1966171168
        %v3745 = vunpack.c.0.s8 %v3744
        %v3746 = vlaneseq
        %v3747 = vshrl.u32 %v3746, 7
        %v3748 = vsub.s32 %v3745, %v3747
        %v3749 = vrot.slane %v3741, %v3748
        %v3751 = vunpack.c.l.s4 1966171168
        %v3752 = vunpack.c.0.s8 %v3751
        %v3753 = vlaneseq
        %v3754 = vshrl.u32 %v3753, 7
        %v3755 = vsub.s32 %v3752, %v3754
        %v3756 = vrot.slane %v3742, %v3755
        %v3757 = vcombine.low %v3749, %v3756
        %v3758 = vcombine.low %v3571, %v3572
        %v3759 = vcombine.low %v3573, %v3574
        %v3760 = vcombine.low %v3575, %v3576
        %v3761 = vcombine.low %v3577, %v3578
        %v3763 = vunpack.c.l.s4 1966171168
        %v3764 = vunpack.c.0.s8 %v3763
        %v3765 = vlaneseq
        %v3766 = vshrl.u32 %v3765, 7
        %v3767 = vsub.s32 %v3764, %v3766
        %v3768 = vrot.slane %v3758, %v3767
        %v3770 = vunpack.c.l.s4 1966171168
        %v3771 = vunpack.c.0.s8 %v3770
        %v3772 = vlaneseq
        %v3773 = vshrl.u32 %v3772, 7
        %v3774 = vsub.s32 %v3771, %v3773
        %v3775 = vrot.slane %v3759, %v3774
        %v3777 = vunpack.c.l.s4 1966171168
        %v3778 = vunpack.c.0.s8 %v3777
        %v3779 = vlaneseq
        %v3780 = vshrl.u32 %v3779, 7
        %v3781 = vsub.s32 %v3778, %v3780
        %v3782 = vrot.slane %v3760, %v3781
        %v3784 = vunpack.c.l.s4 1966171168
        %v3785 = vunpack.c.0.s8 %v3784
        %v3786 = vlaneseq
        %v3787 = vshrl.u32 %v3786, 7
        %v3788 = vsub.s32 %v3785, %v3787
        %v3789 = vrot.slane %v3761, %v3788
        %v3790 = vcombine.low %v3768, %v3775
        %v3791 = vcombine.low %v3782, %v3789
        %v3793 = vunpack.c.l.s4 1966171168
        %v3794 = vunpack.c.0.s8 %v3793
        %v3795 = vlaneseq
        %v3796 = vshrl.u32 %v3795, 7
        %v3797 = vsub.s32 %v3794, %v3796
        %v3798 = vrot.slane %v3790, %v3797
        %v3800 = vunpack.c.l.s4 1966171168
        %v3801 = vunpack.c.0.s8 %v3800
        %v3802 = vlaneseq
        %v3803 = vshrl.u32 %v3802, 7
        %v3804 = vsub.s32 %v3801, %v3803
        %v3805 = vrot.slane %v3791, %v3804
        %v3806 = vcombine.low %v3798, %v3805
        %v3811 = vadd.f32 %v3511, %v3659
        %v3812 = vadd.f32 %v3512, %v3708
        %v3813 = vadd.f32 %v3513, %v3757
        %v3814 = vadd.f32 %v3514, %v3806
        %3815 = vst [vmem:[#allocation5] sm:$0xff] %v3811
        %3816 = vst [vmem:[#allocation5 + $0x8] sm:$0xff] %v3812
        %3817 = vst [vmem:[#allocation5 + $0x10] sm:$0xff] %v3813
        %3818 = vst [vmem:[#allocation5 + $0x18] sm:$0xff] %v3814
        // Predicated region
        $region49: #{tpu_custom_call.1} parent=27 // pred_check
          %p3819 = pneg %p338
        $region50: #{tpu_custom_call.1} parent=27 // pred_check_branch
          %3821 = sbr.rel (%p3819) target = $region52
        $region51: #{tpu_custom_call.1} parent=27 // pred_region
          %v3822 = vld [vmem:[#allocation2] sm:$0xff]
          %v3823 = vld [vmem:[#allocation2 + $0x8] sm:$0xff]
          %v3824 = vld [vmem:[#allocation2 + $0x10] sm:$0xff]
          %v3825 = vld [vmem:[#allocation2 + $0x18] sm:$0xff]
          %v3826 = vld [vmem:[#allocation2 + $0x20] sm:$0xff]
          %v3827 = vld [vmem:[#allocation2 + $0x28] sm:$0xff]
          %v3828 = vld [vmem:[#allocation2 + $0x30] sm:$0xff]
          %v3829 = vld [vmem:[#allocation2 + $0x38] sm:$0xff]
          %v3830 = vld [vmem:[#allocation2 + $0x40] sm:$0xff]
          %v3831 = vld [vmem:[#allocation2 + $0x48] sm:$0xff]
          %v3832 = vld [vmem:[#allocation2 + $0x50] sm:$0xff]
          %v3833 = vld [vmem:[#allocation2 + $0x58] sm:$0xff]
          %v3834 = vld [vmem:[#allocation2 + $0x60] sm:$0xff]
          %v3835 = vld [vmem:[#allocation2 + $0x68] sm:$0xff]
          %v3836 = vld [vmem:[#allocation2 + $0x70] sm:$0xff]
          %v3837 = vld [vmem:[#allocation2 + $0x78] sm:$0xff]
          %v3838 = vld [vmem:[#allocation2 + $0x80] sm:$0xff]
          %v3839 = vld [vmem:[#allocation2 + $0x88] sm:$0xff]
          %v3840 = vld [vmem:[#allocation2 + $0x90] sm:$0xff]
          %v3841 = vld [vmem:[#allocation2 + $0x98] sm:$0xff]
          %v3842 = vld [vmem:[#allocation2 + $0xa0] sm:$0xff]
          %v3843 = vld [vmem:[#allocation2 + $0xa8] sm:$0xff]
          %v3844 = vld [vmem:[#allocation2 + $0xb0] sm:$0xff]
          %v3845 = vld [vmem:[#allocation2 + $0xb8] sm:$0xff]
          %v3846 = vld [vmem:[#allocation2 + $0xc0] sm:$0xff]
          %v3847 = vld [vmem:[#allocation2 + $0xc8] sm:$0xff]
          %v3848 = vld [vmem:[#allocation2 + $0xd0] sm:$0xff]
          %v3849 = vld [vmem:[#allocation2 + $0xd8] sm:$0xff]
          %v3850 = vld [vmem:[#allocation2 + $0xe0] sm:$0xff]
          %v3851 = vld [vmem:[#allocation2 + $0xe8] sm:$0xff]
          %v3852 = vld [vmem:[#allocation2 + $0xf0] sm:$0xff]
          %v3853 = vld [vmem:[#allocation2 + $0xf8] sm:$0xff]
          %v3854 = vld [vmem:[#allocation2 + $0x100] sm:$0x7]
          %v3855 = vld [vmem:[#allocation2 + $0x108] sm:$0x7]
          %v3856 = vld [vmem:[#allocation2 + $0x110] sm:$0x7]
          %v3857 = vld [vmem:[#allocation2 + $0x118] sm:$0x7]
          %v3858 = vld [vmem:[#allocation2 + $0x120] sm:$0x7]
          %v3859 = vld [vmem:[#allocation2 + $0x128] sm:$0x7]
          %v3860 = vld [vmem:[#allocation2 + $0x130] sm:$0x7]
          %v3861 = vld [vmem:[#allocation2 + $0x138] sm:$0x7]
          %v3862 = vld [vmem:[#allocation2 + $0x140] sm:$0x7]
          %v3863 = vld [vmem:[#allocation2 + $0x148] sm:$0x7]
          %v3864 = vld [vmem:[#allocation2 + $0x150] sm:$0x7]
          %v3865 = vld [vmem:[#allocation2 + $0x158] sm:$0x7]
          %v3866 = vld [vmem:[#allocation2 + $0x160] sm:$0x7]
          %v3867 = vld [vmem:[#allocation2 + $0x168] sm:$0x7]
          %v3868 = vld [vmem:[#allocation2 + $0x170] sm:$0x7]
          %v3869 = vld [vmem:[#allocation2 + $0x178] sm:$0x7]
          %v3870 = vld [vmem:[#allocation2 + $0x180] sm:$0x7]
          %v3871 = vld [vmem:[#allocation2 + $0x188] sm:$0x7]
          %v3872 = vld [vmem:[#allocation2 + $0x190] sm:$0x7]
          %v3873 = vld [vmem:[#allocation2 + $0x198] sm:$0x7]
          %v3874 = vld [vmem:[#allocation2 + $0x1a0] sm:$0x7]
          %v3875 = vld [vmem:[#allocation2 + $0x1a8] sm:$0x7]
          %v3876 = vld [vmem:[#allocation2 + $0x1b0] sm:$0x7]
          %v3877 = vld [vmem:[#allocation2 + $0x1b8] sm:$0x7]
          %v3878 = vld [vmem:[#allocation2 + $0x1c0] sm:$0x7]
          %v3879 = vld [vmem:[#allocation2 + $0x1c8] sm:$0x7]
          %v3880 = vld [vmem:[#allocation2 + $0x1d0] sm:$0x7]
          %v3881 = vld [vmem:[#allocation2 + $0x1d8] sm:$0x7]
          %v3882 = vld [vmem:[#allocation2 + $0x1e0] sm:$0x7]
          %v3883 = vld [vmem:[#allocation2 + $0x1e8] sm:$0x7]
          %v3884 = vld [vmem:[#allocation2 + $0x1f0] sm:$0x7]
          %v3885 = vld [vmem:[#allocation2 + $0x1f8] sm:$0x7]
          %v3886 = vadd.f32 %v3822, %v3823
          %v3887 = vadd.f32 %v3886, %v3824
          %v3888 = vadd.f32 %v3887, %v3825
          %v3889 = vadd.f32 %v3888, %v3826
          %v3890 = vadd.f32 %v3889, %v3827
          %v3891 = vadd.f32 %v3890, %v3828
          %v3892 = vadd.f32 %v3891, %v3829
          %v3893 = vadd.f32 %v3892, %v3830
          %v3894 = vadd.f32 %v3893, %v3831
          %v3895 = vadd.f32 %v3894, %v3832
          %v3896 = vadd.f32 %v3895, %v3833
          %v3897 = vadd.f32 %v3896, %v3834
          %v3898 = vadd.f32 %v3897, %v3835
          %v3899 = vadd.f32 %v3898, %v3836
          %v3900 = vadd.f32 %v3899, %v3837
          %v3901 = vadd.f32 %v3900, %v3838
          %v3902 = vadd.f32 %v3901, %v3839
          %v3903 = vadd.f32 %v3902, %v3840
          %v3904 = vadd.f32 %v3903, %v3841
          %v3905 = vadd.f32 %v3904, %v3842
          %v3906 = vadd.f32 %v3905, %v3843
          %v3907 = vadd.f32 %v3906, %v3844
          %v3908 = vadd.f32 %v3907, %v3845
          %v3909 = vadd.f32 %v3908, %v3846
          %v3910 = vadd.f32 %v3909, %v3847
          %v3911 = vadd.f32 %v3910, %v3848
          %v3912 = vadd.f32 %v3911, %v3849
          %v3913 = vadd.f32 %v3912, %v3850
          %v3914 = vadd.f32 %v3913, %v3851
          %v3915 = vadd.f32 %v3914, %v3852
          %v3916 = vadd.f32 %v3915, %v3853
          %3917 = vadd.xlane.f32.xlu0 %v3916
          %v3918 = vpop.xlane.xlu0 %3917
          %v3919 = vsel %vm929, %v3854, 0.0
          %v3920 = vsel %vm929, %v3855, 0.0
          %v3921 = vadd.f32 %v3919, %v3920
          %v3922 = vsel %vm929, %v3856, 0.0
          %v3923 = vadd.f32 %v3921, %v3922
          %v3924 = vsel %vm929, %v3857, 0.0
          %v3925 = vadd.f32 %v3923, %v3924
          %v3926 = vsel %vm929, %v3858, 0.0
          %v3927 = vadd.f32 %v3925, %v3926
          %v3928 = vsel %vm929, %v3859, 0.0
          %v3929 = vadd.f32 %v3927, %v3928
          %v3930 = vsel %vm929, %v3860, 0.0
          %v3931 = vadd.f32 %v3929, %v3930
          %v3932 = vsel %vm929, %v3861, 0.0
          %v3933 = vadd.f32 %v3931, %v3932
          %v3934 = vsel %vm929, %v3862, 0.0
          %v3935 = vadd.f32 %v3933, %v3934
          %v3936 = vsel %vm929, %v3863, 0.0
          %v3937 = vadd.f32 %v3935, %v3936
          %v3938 = vsel %vm929, %v3864, 0.0
          %v3939 = vadd.f32 %v3937, %v3938
          %v3940 = vsel %vm929, %v3865, 0.0
          %v3941 = vadd.f32 %v3939, %v3940
          %v3942 = vsel %vm929, %v3866, 0.0
          %v3943 = vadd.f32 %v3941, %v3942
          %v3944 = vsel %vm929, %v3867, 0.0
          %v3945 = vadd.f32 %v3943, %v3944
          %v3946 = vsel %vm929, %v3868, 0.0
          %v3947 = vadd.f32 %v3945, %v3946
          %v3948 = vsel %vm929, %v3869, 0.0
          %v3949 = vadd.f32 %v3947, %v3948
          %v3950 = vsel %vm929, %v3870, 0.0
          %v3951 = vadd.f32 %v3949, %v3950
          %v3952 = vsel %vm929, %v3871, 0.0
          %v3953 = vadd.f32 %v3951, %v3952
          %v3954 = vsel %vm929, %v3872, 0.0
          %v3955 = vadd.f32 %v3953, %v3954
          %v3956 = vsel %vm929, %v3873, 0.0
          %v3957 = vadd.f32 %v3955, %v3956
          %v3958 = vsel %vm929, %v3874, 0.0
          %v3959 = vadd.f32 %v3957, %v3958
          %v3960 = vsel %vm929, %v3875, 0.0
          %v3961 = vadd.f32 %v3959, %v3960
          %v3962 = vsel %vm929, %v3876, 0.0
          %v3963 = vadd.f32 %v3961, %v3962
          %v3964 = vsel %vm929, %v3877, 0.0
          %v3965 = vadd.f32 %v3963, %v3964
          %v3966 = vsel %vm929, %v3878, 0.0
          %v3967 = vadd.f32 %v3965, %v3966
          %v3968 = vsel %vm929, %v3879, 0.0
          %v3969 = vadd.f32 %v3967, %v3968
          %v3970 = vsel %vm929, %v3880, 0.0
          %v3971 = vadd.f32 %v3969, %v3970
          %v3972 = vsel %vm929, %v3881, 0.0
          %v3973 = vadd.f32 %v3971, %v3972
          %v3974 = vsel %vm929, %v3882, 0.0
          %v3975 = vadd.f32 %v3973, %v3974
          %v3976 = vsel %vm929, %v3883, 0.0
          %v3977 = vadd.f32 %v3975, %v3976
          %v3978 = vsel %vm929, %v3884, 0.0
          %v3979 = vadd.f32 %v3977, %v3978
          %v3980 = vsel %vm929, %v3885, 0.0
          %v3981 = vadd.f32 %v3979, %v3980
          %3982 = vadd.xlane.f32.xlu0 %v3981
          %v3983 = vpop.xlane.xlu0 %3982
          %vm3984 = vcmask 7168
          %3985 = vst.msk [vmem:[%s324] sm:$0xff] %vm3984, %v3918
          %vm3986 = vcmask 2048
          %3987 = vst.msk [vmem:[%s324 + $0x8] sm:$0x7] %vm3986, %v3983
          %v3988 = vld [vmem:[#allocation3] sm:$0xff]
          %v3989 = vld [vmem:[#allocation3 + $0x8] sm:$0xff]
          %v3990 = vld [vmem:[#allocation3 + $0x10] sm:$0xff]
          %v3991 = vld [vmem:[#allocation3 + $0x18] sm:$0xff]
          %v3992 = vld [vmem:[#allocation3 + $0x20] sm:$0xff]
          %v3993 = vld [vmem:[#allocation3 + $0x28] sm:$0xff]
          %v3994 = vld [vmem:[#allocation3 + $0x30] sm:$0xff]
          %v3995 = vld [vmem:[#allocation3 + $0x38] sm:$0xff]
          %v3996 = vld [vmem:[#allocation3 + $0x40] sm:$0xff]
          %v3997 = vld [vmem:[#allocation3 + $0x48] sm:$0xff]
          %v3998 = vld [vmem:[#allocation3 + $0x50] sm:$0xff]
          %v3999 = vld [vmem:[#allocation3 + $0x58] sm:$0xff]
          %v4000 = vld [vmem:[#allocation3 + $0x60] sm:$0xff]
          %v4001 = vld [vmem:[#allocation3 + $0x68] sm:$0xff]
          %v4002 = vld [vmem:[#allocation3 + $0x70] sm:$0xff]
          %v4003 = vld [vmem:[#allocation3 + $0x78] sm:$0xff]
          %v4004 = vld [vmem:[#allocation3 + $0x80] sm:$0xff]
          %v4005 = vld [vmem:[#allocation3 + $0x88] sm:$0xff]
          %v4006 = vld [vmem:[#allocation3 + $0x90] sm:$0xff]
          %v4007 = vld [vmem:[#allocation3 + $0x98] sm:$0xff]
          %v4008 = vld [vmem:[#allocation3 + $0xa0] sm:$0xff]
          %v4009 = vld [vmem:[#allocation3 + $0xa8] sm:$0xff]
          %v4010 = vld [vmem:[#allocation3 + $0xb0] sm:$0xff]
          %v4011 = vld [vmem:[#allocation3 + $0xb8] sm:$0xff]
          %v4012 = vld [vmem:[#allocation3 + $0xc0] sm:$0xff]
          %v4013 = vld [vmem:[#allocation3 + $0xc8] sm:$0xff]
          %v4014 = vld [vmem:[#allocation3 + $0xd0] sm:$0xff]
          %v4015 = vld [vmem:[#allocation3 + $0xd8] sm:$0xff]
          %v4016 = vld [vmem:[#allocation3 + $0xe0] sm:$0xff]
          %v4017 = vld [vmem:[#allocation3 + $0xe8] sm:$0xff]
          %v4018 = vld [vmem:[#allocation3 + $0xf0] sm:$0xff]
          %v4019 = vld [vmem:[#allocation3 + $0xf8] sm:$0xff]
          %v4020 = vld [vmem:[#allocation3 + $0x100] sm:$0x7]
          %v4021 = vld [vmem:[#allocation3 + $0x108] sm:$0x7]
          %v4022 = vld [vmem:[#allocation3 + $0x110] sm:$0x7]
          %v4023 = vld [vmem:[#allocation3 + $0x118] sm:$0x7]
          %v4024 = vld [vmem:[#allocation3 + $0x120] sm:$0x7]
          %v4025 = vld [vmem:[#allocation3 + $0x128] sm:$0x7]
          %v4026 = vld [vmem:[#allocation3 + $0x130] sm:$0x7]
          %v4027 = vld [vmem:[#allocation3 + $0x138] sm:$0x7]
          %v4028 = vld [vmem:[#allocation3 + $0x140] sm:$0x7]
          %v4029 = vld [vmem:[#allocation3 + $0x148] sm:$0x7]
          %v4030 = vld [vmem:[#allocation3 + $0x150] sm:$0x7]
          %v4031 = vld [vmem:[#allocation3 + $0x158] sm:$0x7]
          %v4032 = vld [vmem:[#allocation3 + $0x160] sm:$0x7]
          %v4033 = vld [vmem:[#allocation3 + $0x168] sm:$0x7]
          %v4034 = vld [vmem:[#allocation3 + $0x170] sm:$0x7]
          %v4035 = vld [vmem:[#allocation3 + $0x178] sm:$0x7]
          %v4036 = vld [vmem:[#allocation3 + $0x180] sm:$0x7]
          %v4037 = vld [vmem:[#allocation3 + $0x188] sm:$0x7]
          %v4038 = vld [vmem:[#allocation3 + $0x190] sm:$0x7]
          %v4039 = vld [vmem:[#allocation3 + $0x198] sm:$0x7]
          %v4040 = vld [vmem:[#allocation3 + $0x1a0] sm:$0x7]
          %v4041 = vld [vmem:[#allocation3 + $0x1a8] sm:$0x7]
          %v4042 = vld [vmem:[#allocation3 + $0x1b0] sm:$0x7]
          %v4043 = vld [vmem:[#allocation3 + $0x1b8] sm:$0x7]
          %v4044 = vld [vmem:[#allocation3 + $0x1c0] sm:$0x7]
          %v4045 = vld [vmem:[#allocation3 + $0x1c8] sm:$0x7]
          %v4046 = vld [vmem:[#allocation3 + $0x1d0] sm:$0x7]
          %v4047 = vld [vmem:[#allocation3 + $0x1d8] sm:$0x7]
          %v4048 = vld [vmem:[#allocation3 + $0x1e0] sm:$0x7]
          %v4049 = vld [vmem:[#allocation3 + $0x1e8] sm:$0x7]
          %v4050 = vld [vmem:[#allocation3 + $0x1f0] sm:$0x7]
          %v4051 = vld [vmem:[#allocation3 + $0x1f8] sm:$0x7]
          %v4052 = vadd.f32 %v3988, %v3989
          %v4053 = vadd.f32 %v4052, %v3990
          %v4054 = vadd.f32 %v4053, %v3991
          %v4055 = vadd.f32 %v4054, %v3992
          %v4056 = vadd.f32 %v4055, %v3993
          %v4057 = vadd.f32 %v4056, %v3994
          %v4058 = vadd.f32 %v4057, %v3995
          %v4059 = vadd.f32 %v4058, %v3996
          %v4060 = vadd.f32 %v4059, %v3997
          %v4061 = vadd.f32 %v4060, %v3998
          %v4062 = vadd.f32 %v4061, %v3999
          %v4063 = vadd.f32 %v4062, %v4000
          %v4064 = vadd.f32 %v4063, %v4001
          %v4065 = vadd.f32 %v4064, %v4002
          %v4066 = vadd.f32 %v4065, %v4003
          %v4067 = vadd.f32 %v4066, %v4004
          %v4068 = vadd.f32 %v4067, %v4005
          %v4069 = vadd.f32 %v4068, %v4006
          %v4070 = vadd.f32 %v4069, %v4007
          %v4071 = vadd.f32 %v4070, %v4008
          %v4072 = vadd.f32 %v4071, %v4009
          %v4073 = vadd.f32 %v4072, %v4010
          %v4074 = vadd.f32 %v4073, %v4011
          %v4075 = vadd.f32 %v4074, %v4012
          %v4076 = vadd.f32 %v4075, %v4013
          %v4077 = vadd.f32 %v4076, %v4014
          %v4078 = vadd.f32 %v4077, %v4015
          %v4079 = vadd.f32 %v4078, %v4016
          %v4080 = vadd.f32 %v4079, %v4017
          %v4081 = vadd.f32 %v4080, %v4018
          %v4082 = vadd.f32 %v4081, %v4019
          %4083 = vadd.xlane.f32.xlu0 %v4082
          %v4084 = vpop.xlane.xlu0 %4083
          %v4085 = vsel %vm929, %v4020, 0.0
          %v4086 = vsel %vm929, %v4021, 0.0
          %v4087 = vadd.f32 %v4085, %v4086
          %v4088 = vsel %vm929, %v4022, 0.0
          %v4089 = vadd.f32 %v4087, %v4088
          %v4090 = vsel %vm929, %v4023, 0.0
          %v4091 = vadd.f32 %v4089, %v4090
          %v4092 = vsel %vm929, %v4024, 0.0
          %v4093 = vadd.f32 %v4091, %v4092
          %v4094 = vsel %vm929, %v4025, 0.0
          %v4095 = vadd.f32 %v4093, %v4094
          %v4096 = vsel %vm929, %v4026, 0.0
          %v4097 = vadd.f32 %v4095, %v4096
          %v4098 = vsel %vm929, %v4027, 0.0
          %v4099 = vadd.f32 %v4097, %v4098
          %v4100 = vsel %vm929, %v4028, 0.0
          %v4101 = vadd.f32 %v4099, %v4100
          %v4102 = vsel %vm929, %v4029, 0.0
          %v4103 = vadd.f32 %v4101, %v4102
          %v4104 = vsel %vm929, %v4030, 0.0
          %v4105 = vadd.f32 %v4103, %v4104
          %v4106 = vsel %vm929, %v4031, 0.0
          %v4107 = vadd.f32 %v4105, %v4106
          %v4108 = vsel %vm929, %v4032, 0.0
          %v4109 = vadd.f32 %v4107, %v4108
          %v4110 = vsel %vm929, %v4033, 0.0
          %v4111 = vadd.f32 %v4109, %v4110
          %v4112 = vsel %vm929, %v4034, 0.0
          %v4113 = vadd.f32 %v4111, %v4112
          %v4114 = vsel %vm929, %v4035, 0.0
          %v4115 = vadd.f32 %v4113, %v4114
          %v4116 = vsel %vm929, %v4036, 0.0
          %v4117 = vadd.f32 %v4115, %v4116
          %v4118 = vsel %vm929, %v4037, 0.0
          %v4119 = vadd.f32 %v4117, %v4118
          %v4120 = vsel %vm929, %v4038, 0.0
          %v4121 = vadd.f32 %v4119, %v4120
          %v4122 = vsel %vm929, %v4039, 0.0
          %v4123 = vadd.f32 %v4121, %v4122
          %v4124 = vsel %vm929, %v4040, 0.0
          %v4125 = vadd.f32 %v4123, %v4124
          %v4126 = vsel %vm929, %v4041, 0.0
          %v4127 = vadd.f32 %v4125, %v4126
          %v4128 = vsel %vm929, %v4042, 0.0
          %v4129 = vadd.f32 %v4127, %v4128
          %v4130 = vsel %vm929, %v4043, 0.0
          %v4131 = vadd.f32 %v4129, %v4130
          %v4132 = vsel %vm929, %v4044, 0.0
          %v4133 = vadd.f32 %v4131, %v4132
          %v4134 = vsel %vm929, %v4045, 0.0
          %v4135 = vadd.f32 %v4133, %v4134
          %v4136 = vsel %vm929, %v4046, 0.0
          %v4137 = vadd.f32 %v4135, %v4136
          %v4138 = vsel %vm929, %v4047, 0.0
          %v4139 = vadd.f32 %v4137, %v4138
          %v4140 = vsel %vm929, %v4048, 0.0
          %v4141 = vadd.f32 %v4139, %v4140
          %v4142 = vsel %vm929, %v4049, 0.0
          %v4143 = vadd.f32 %v4141, %v4142
          %v4144 = vsel %vm929, %v4050, 0.0
          %v4145 = vadd.f32 %v4143, %v4144
          %v4146 = vsel %vm929, %v4051, 0.0
          %v4147 = vadd.f32 %v4145, %v4146
          %4148 = vadd.xlane.f32.xlu0 %v4147
          %v4149 = vpop.xlane.xlu0 %4148
          %4150 = vst.msk [vmem:[%s329] sm:$0xff] %vm3984, %v4084
          %4151 = vst.msk [vmem:[%s329 + $0x8] sm:$0x7] %vm3986, %v4149
          %v4152 = vld [vmem:[#allocation4] sm:$0xff]
          %v4153 = vld [vmem:[#allocation4 + $0x8] sm:$0xff]
          %v4154 = vld [vmem:[#allocation4 + $0x10] sm:$0xff]
          %v4155 = vld [vmem:[#allocation4 + $0x18] sm:$0xff]
          %v4156 = vld [vmem:[#allocation4 + $0x20] sm:$0xff]
          %v4157 = vld [vmem:[#allocation4 + $0x28] sm:$0xff]
          %v4158 = vld [vmem:[#allocation4 + $0x30] sm:$0xff]
          %v4159 = vld [vmem:[#allocation4 + $0x38] sm:$0xff]
          %v4160 = vld [vmem:[#allocation4 + $0x40] sm:$0xff]
          %v4161 = vld [vmem:[#allocation4 + $0x48] sm:$0xff]
          %v4162 = vld [vmem:[#allocation4 + $0x50] sm:$0xff]
          %v4163 = vld [vmem:[#allocation4 + $0x58] sm:$0xff]
          %v4164 = vld [vmem:[#allocation4 + $0x60] sm:$0xff]
          %v4165 = vld [vmem:[#allocation4 + $0x68] sm:$0xff]
          %v4166 = vld [vmem:[#allocation4 + $0x70] sm:$0xff]
          %v4167 = vld [vmem:[#allocation4 + $0x78] sm:$0xff]
          %v4168 = vld [vmem:[#allocation4 + $0x80] sm:$0xff]
          %v4169 = vld [vmem:[#allocation4 + $0x88] sm:$0xff]
          %v4170 = vld [vmem:[#allocation4 + $0x90] sm:$0xff]
          %v4171 = vld [vmem:[#allocation4 + $0x98] sm:$0xff]
          %v4172 = vld [vmem:[#allocation4 + $0xa0] sm:$0xff]
          %v4173 = vld [vmem:[#allocation4 + $0xa8] sm:$0xff]
          %v4174 = vld [vmem:[#allocation4 + $0xb0] sm:$0xff]
          %v4175 = vld [vmem:[#allocation4 + $0xb8] sm:$0xff]
          %v4176 = vld [vmem:[#allocation4 + $0xc0] sm:$0xff]
          %v4177 = vld [vmem:[#allocation4 + $0xc8] sm:$0xff]
          %v4178 = vld [vmem:[#allocation4 + $0xd0] sm:$0xff]
          %v4179 = vld [vmem:[#allocation4 + $0xd8] sm:$0xff]
          %v4180 = vld [vmem:[#allocation4 + $0xe0] sm:$0xff]
          %v4181 = vld [vmem:[#allocation4 + $0xe8] sm:$0xff]
          %v4182 = vld [vmem:[#allocation4 + $0xf0] sm:$0xff]
          %v4183 = vld [vmem:[#allocation4 + $0xf8] sm:$0xff]
          %v4184 = vld [vmem:[#allocation4 + $0x100] sm:$0x7]
          %v4185 = vld [vmem:[#allocation4 + $0x108] sm:$0x7]
          %v4186 = vld [vmem:[#allocation4 + $0x110] sm:$0x7]
          %v4187 = vld [vmem:[#allocation4 + $0x118] sm:$0x7]
          %v4188 = vld [vmem:[#allocation4 + $0x120] sm:$0x7]
          %v4189 = vld [vmem:[#allocation4 + $0x128] sm:$0x7]
          %v4190 = vld [vmem:[#allocation4 + $0x130] sm:$0x7]
          %v4191 = vld [vmem:[#allocation4 + $0x138] sm:$0x7]
          %v4192 = vld [vmem:[#allocation4 + $0x140] sm:$0x7]
          %v4193 = vld [vmem:[#allocation4 + $0x148] sm:$0x7]
          %v4194 = vld [vmem:[#allocation4 + $0x150] sm:$0x7]
          %v4195 = vld [vmem:[#allocation4 + $0x158] sm:$0x7]
          %v4196 = vld [vmem:[#allocation4 + $0x160] sm:$0x7]
          %v4197 = vld [vmem:[#allocation4 + $0x168] sm:$0x7]
          %v4198 = vld [vmem:[#allocation4 + $0x170] sm:$0x7]
          %v4199 = vld [vmem:[#allocation4 + $0x178] sm:$0x7]
          %v4200 = vld [vmem:[#allocation4 + $0x180] sm:$0x7]
          %v4201 = vld [vmem:[#allocation4 + $0x188] sm:$0x7]
          %v4202 = vld [vmem:[#allocation4 + $0x190] sm:$0x7]
          %v4203 = vld [vmem:[#allocation4 + $0x198] sm:$0x7]
          %v4204 = vld [vmem:[#allocation4 + $0x1a0] sm:$0x7]
          %v4205 = vld [vmem:[#allocation4 + $0x1a8] sm:$0x7]
          %v4206 = vld [vmem:[#allocation4 + $0x1b0] sm:$0x7]
          %v4207 = vld [vmem:[#allocation4 + $0x1b8] sm:$0x7]
          %v4208 = vld [vmem:[#allocation4 + $0x1c0] sm:$0x7]
          %v4209 = vld [vmem:[#allocation4 + $0x1c8] sm:$0x7]
          %v4210 = vld [vmem:[#allocation4 + $0x1d0] sm:$0x7]
          %v4211 = vld [vmem:[#allocation4 + $0x1d8] sm:$0x7]
          %v4212 = vld [vmem:[#allocation4 + $0x1e0] sm:$0x7]
          %v4213 = vld [vmem:[#allocation4 + $0x1e8] sm:$0x7]
          %v4214 = vld [vmem:[#allocation4 + $0x1f0] sm:$0x7]
          %v4215 = vld [vmem:[#allocation4 + $0x1f8] sm:$0x7]
          %v4216 = vadd.f32 %v4152, %v4153
          %v4217 = vadd.f32 %v4216, %v4154
          %v4218 = vadd.f32 %v4217, %v4155
          %v4219 = vadd.f32 %v4218, %v4156
          %v4220 = vadd.f32 %v4219, %v4157
          %v4221 = vadd.f32 %v4220, %v4158
          %v4222 = vadd.f32 %v4221, %v4159
          %v4223 = vadd.f32 %v4222, %v4160
          %v4224 = vadd.f32 %v4223, %v4161
          %v4225 = vadd.f32 %v4224, %v4162
          %v4226 = vadd.f32 %v4225, %v4163
          %v4227 = vadd.f32 %v4226, %v4164
          %v4228 = vadd.f32 %v4227, %v4165
          %v4229 = vadd.f32 %v4228, %v4166
          %v4230 = vadd.f32 %v4229, %v4167
          %v4231 = vadd.f32 %v4230, %v4168
          %v4232 = vadd.f32 %v4231, %v4169
          %v4233 = vadd.f32 %v4232, %v4170
          %v4234 = vadd.f32 %v4233, %v4171
          %v4235 = vadd.f32 %v4234, %v4172
          %v4236 = vadd.f32 %v4235, %v4173
          %v4237 = vadd.f32 %v4236, %v4174
          %v4238 = vadd.f32 %v4237, %v4175
          %v4239 = vadd.f32 %v4238, %v4176
          %v4240 = vadd.f32 %v4239, %v4177
          %v4241 = vadd.f32 %v4240, %v4178
          %v4242 = vadd.f32 %v4241, %v4179
          %v4243 = vadd.f32 %v4242, %v4180
          %v4244 = vadd.f32 %v4243, %v4181
          %v4245 = vadd.f32 %v4244, %v4182
          %v4246 = vadd.f32 %v4245, %v4183
          %4247 = vadd.xlane.f32.xlu0 %v4246
          %v4248 = vpop.xlane.xlu0 %4247
          %v4249 = vsel %vm929, %v4184, 0.0
          %v4250 = vsel %vm929, %v4185, 0.0
          %v4251 = vadd.f32 %v4249, %v4250
          %v4252 = vsel %vm929, %v4186, 0.0
          %v4253 = vadd.f32 %v4251, %v4252
          %v4254 = vsel %vm929, %v4187, 0.0
          %v4255 = vadd.f32 %v4253, %v4254
          %v4256 = vsel %vm929, %v4188, 0.0
          %v4257 = vadd.f32 %v4255, %v4256
          %v4258 = vsel %vm929, %v4189, 0.0
          %v4259 = vadd.f32 %v4257, %v4258
          %v4260 = vsel %vm929, %v4190, 0.0
          %v4261 = vadd.f32 %v4259, %v4260
          %v4262 = vsel %vm929, %v4191, 0.0
          %v4263 = vadd.f32 %v4261, %v4262
          %v4264 = vsel %vm929, %v4192, 0.0
          %v4265 = vadd.f32 %v4263, %v4264
          %v4266 = vsel %vm929, %v4193, 0.0
          %v4267 = vadd.f32 %v4265, %v4266
          %v4268 = vsel %vm929, %v4194, 0.0
          %v4269 = vadd.f32 %v4267, %v4268
          %v4270 = vsel %vm929, %v4195, 0.0
          %v4271 = vadd.f32 %v4269, %v4270
          %v4272 = vsel %vm929, %v4196, 0.0
          %v4273 = vadd.f32 %v4271, %v4272
          %v4274 = vsel %vm929, %v4197, 0.0
          %v4275 = vadd.f32 %v4273, %v4274
          %v4276 = vsel %vm929, %v4198, 0.0
          %v4277 = vadd.f32 %v4275, %v4276
          %v4278 = vsel %vm929, %v4199, 0.0
          %v4279 = vadd.f32 %v4277, %v4278
          %v4280 = vsel %vm929, %v4200, 0.0
          %v4281 = vadd.f32 %v4279, %v4280
          %v4282 = vsel %vm929, %v4201, 0.0
          %v4283 = vadd.f32 %v4281, %v4282
          %v4284 = vsel %vm929, %v4202, 0.0
          %v4285 = vadd.f32 %v4283, %v4284
          %v4286 = vsel %vm929, %v4203, 0.0
          %v4287 = vadd.f32 %v4285, %v4286
          %v4288 = vsel %vm929, %v4204, 0.0
          %v4289 = vadd.f32 %v4287, %v4288
          %v4290 = vsel %vm929, %v4205, 0.0
          %v4291 = vadd.f32 %v4289, %v4290
          %v4292 = vsel %vm929, %v4206, 0.0
          %v4293 = vadd.f32 %v4291, %v4292
          %v4294 = vsel %vm929, %v4207, 0.0
          %v4295 = vadd.f32 %v4293, %v4294
          %v4296 = vsel %vm929, %v4208, 0.0
          %v4297 = vadd.f32 %v4295, %v4296
          %v4298 = vsel %vm929, %v4209, 0.0
          %v4299 = vadd.f32 %v4297, %v4298
          %v4300 = vsel %vm929, %v4210, 0.0
          %v4301 = vadd.f32 %v4299, %v4300
          %v4302 = vsel %vm929, %v4211, 0.0
          %v4303 = vadd.f32 %v4301, %v4302
          %v4304 = vsel %vm929, %v4212, 0.0
          %v4305 = vadd.f32 %v4303, %v4304
          %v4306 = vsel %vm929, %v4213, 0.0
          %v4307 = vadd.f32 %v4305, %v4306
          %v4308 = vsel %vm929, %v4214, 0.0
          %v4309 = vadd.f32 %v4307, %v4308
          %v4310 = vsel %vm929, %v4215, 0.0
          %v4311 = vadd.f32 %v4309, %v4310
          %4312 = vadd.xlane.f32.xlu0 %v4311
          %v4313 = vpop.xlane.xlu0 %4312
          %4314 = vst.msk [vmem:[%s334] sm:$0xff] %vm3984, %v4248
          %4315 = vst.msk [vmem:[%s334 + $0x8] sm:$0x7] %vm3986, %v4313
          %v4316 = vld [vmem:[#allocation5] sm:$0xff]
          %v4317 = vld [vmem:[#allocation5 + $0x8] sm:$0xff]
          %v4318 = vld [vmem:[#allocation5 + $0x10] sm:$0xff]
          %v4319 = vld [vmem:[#allocation5 + $0x18] sm:$0xff]
          %v4324 = vlaneseq
          %v4325 = vshrl.u32 %v4324, 7
          %v4326 = vsub.s32 0, %v4325
          %v4327 = vrot.slane %v4316, %v4326
          %v4328 = vlaneseq
          %v4329 = vshrl.u32 %v4328, 7
          %v4330 = vsub.s32 1, %v4329
          %v4331 = vrot.slane %v4316, %v4330
          %v4332 = vlaneseq
          %v4333 = vshrl.u32 %v4332, 7
          %v4334 = vsub.s32 2, %v4333
          %v4335 = vrot.slane %v4316, %v4334
          %v4336 = vlaneseq
          %v4337 = vshrl.u32 %v4336, 7
          %v4338 = vsub.s32 3, %v4337
          %v4339 = vrot.slane %v4316, %v4338
          %v4340 = vlaneseq
          %v4341 = vshrl.u32 %v4340, 7
          %v4342 = vsub.s32 4, %v4341
          %v4343 = vrot.slane %v4316, %v4342
          %v4344 = vlaneseq
          %v4345 = vshrl.u32 %v4344, 7
          %v4346 = vsub.s32 5, %v4345
          %v4347 = vrot.slane %v4316, %v4346
          %v4348 = vlaneseq
          %v4349 = vshrl.u32 %v4348, 7
          %v4350 = vsub.s32 6, %v4349
          %v4351 = vrot.slane %v4316, %v4350
          %v4352 = vlaneseq
          %v4353 = vshrl.u32 %v4352, 7
          %v4354 = vsub.s32 7, %v4353
          %v4355 = vrot.slane %v4316, %v4354
          %v4356 = vlaneseq
          %v4357 = vshrl.u32 %v4356, 7
          %v4358 = vsub.s32 0, %v4357
          %v4359 = vrot.slane %v4317, %v4358
          %v4360 = vlaneseq
          %v4361 = vshrl.u32 %v4360, 7
          %v4362 = vsub.s32 1, %v4361
          %v4363 = vrot.slane %v4317, %v4362
          %v4364 = vlaneseq
          %v4365 = vshrl.u32 %v4364, 7
          %v4366 = vsub.s32 2, %v4365
          %v4367 = vrot.slane %v4317, %v4366
          %v4368 = vlaneseq
          %v4369 = vshrl.u32 %v4368, 7
          %v4370 = vsub.s32 3, %v4369
          %v4371 = vrot.slane %v4317, %v4370
          %v4372 = vlaneseq
          %v4373 = vshrl.u32 %v4372, 7
          %v4374 = vsub.s32 4, %v4373
          %v4375 = vrot.slane %v4317, %v4374
          %v4376 = vlaneseq
          %v4377 = vshrl.u32 %v4376, 7
          %v4378 = vsub.s32 5, %v4377
          %v4379 = vrot.slane %v4317, %v4378
          %v4380 = vlaneseq
          %v4381 = vshrl.u32 %v4380, 7
          %v4382 = vsub.s32 6, %v4381
          %v4383 = vrot.slane %v4317, %v4382
          %v4384 = vlaneseq
          %v4385 = vshrl.u32 %v4384, 7
          %v4386 = vsub.s32 7, %v4385
          %v4387 = vrot.slane %v4317, %v4386
          %v4388 = vlaneseq
          %v4389 = vshrl.u32 %v4388, 7
          %v4390 = vsub.s32 0, %v4389
          %v4391 = vrot.slane %v4318, %v4390
          %v4392 = vlaneseq
          %v4393 = vshrl.u32 %v4392, 7
          %v4394 = vsub.s32 1, %v4393
          %v4395 = vrot.slane %v4318, %v4394
          %v4396 = vlaneseq
          %v4397 = vshrl.u32 %v4396, 7
          %v4398 = vsub.s32 2, %v4397
          %v4399 = vrot.slane %v4318, %v4398
          %v4400 = vlaneseq
          %v4401 = vshrl.u32 %v4400, 7
          %v4402 = vsub.s32 3, %v4401
          %v4403 = vrot.slane %v4318, %v4402
          %v4404 = vlaneseq
          %v4405 = vshrl.u32 %v4404, 7
          %v4406 = vsub.s32 4, %v4405
          %v4407 = vrot.slane %v4318, %v4406
          %v4408 = vlaneseq
          %v4409 = vshrl.u32 %v4408, 7
          %v4410 = vsub.s32 5, %v4409
          %v4411 = vrot.slane %v4318, %v4410
          %v4412 = vlaneseq
          %v4413 = vshrl.u32 %v4412, 7
          %v4414 = vsub.s32 6, %v4413
          %v4415 = vrot.slane %v4318, %v4414
          %v4416 = vlaneseq
          %v4417 = vshrl.u32 %v4416, 7
          %v4418 = vsub.s32 7, %v4417
          %v4419 = vrot.slane %v4318, %v4418
          %v4420 = vlaneseq
          %v4421 = vshrl.u32 %v4420, 7
          %v4422 = vsub.s32 0, %v4421
          %v4423 = vrot.slane %v4319, %v4422
          %v4424 = vlaneseq
          %v4425 = vshrl.u32 %v4424, 7
          %v4426 = vsub.s32 1, %v4425
          %v4427 = vrot.slane %v4319, %v4426
          %v4428 = vlaneseq
          %v4429 = vshrl.u32 %v4428, 7
          %v4430 = vsub.s32 2, %v4429
          %v4431 = vrot.slane %v4319, %v4430
          %v4432 = vlaneseq
          %v4433 = vshrl.u32 %v4432, 7
          %v4434 = vsub.s32 3, %v4433
          %v4435 = vrot.slane %v4319, %v4434
          %v4436 = vlaneseq
          %v4437 = vshrl.u32 %v4436, 7
          %v4438 = vsub.s32 4, %v4437
          %v4439 = vrot.slane %v4319, %v4438
          %v4440 = vlaneseq
          %v4441 = vshrl.u32 %v4440, 7
          %v4442 = vsub.s32 5, %v4441
          %v4443 = vrot.slane %v4319, %v4442
          %v4444 = vlaneseq
          %v4445 = vshrl.u32 %v4444, 7
          %v4446 = vsub.s32 6, %v4445
          %v4447 = vrot.slane %v4319, %v4446
          %v4448 = vlaneseq
          %v4449 = vshrl.u32 %v4448, 7
          %v4450 = vsub.s32 7, %v4449
          %v4451 = vrot.slane %v4319, %v4450
          %vm4484 = vcmask 1040384
          %v4485 = vsel %vm4484, %v4327, 0.0
          %v4486 = vsel %vm4484, %v4331, 0.0
          %v4487 = vadd.f32 %v4485, %v4486
          %v4488 = vsel %vm4484, %v4335, 0.0
          %v4489 = vadd.f32 %v4487, %v4488
          %v4490 = vsel %vm4484, %v4339, 0.0
          %v4491 = vadd.f32 %v4489, %v4490
          %v4492 = vsel %vm4484, %v4343, 0.0
          %v4493 = vadd.f32 %v4491, %v4492
          %v4494 = vsel %vm4484, %v4347, 0.0
          %v4495 = vadd.f32 %v4493, %v4494
          %v4496 = vsel %vm4484, %v4351, 0.0
          %v4497 = vadd.f32 %v4495, %v4496
          %v4498 = vsel %vm4484, %v4355, 0.0
          %v4499 = vadd.f32 %v4497, %v4498
          %v4500 = vsel %vm4484, %v4359, 0.0
          %v4501 = vadd.f32 %v4499, %v4500
          %v4502 = vsel %vm4484, %v4363, 0.0
          %v4503 = vadd.f32 %v4501, %v4502
          %v4504 = vsel %vm4484, %v4367, 0.0
          %v4505 = vadd.f32 %v4503, %v4504
          %v4506 = vsel %vm4484, %v4371, 0.0
          %v4507 = vadd.f32 %v4505, %v4506
          %v4508 = vsel %vm4484, %v4375, 0.0
          %v4509 = vadd.f32 %v4507, %v4508
          %v4510 = vsel %vm4484, %v4379, 0.0
          %v4511 = vadd.f32 %v4509, %v4510
          %v4512 = vsel %vm4484, %v4383, 0.0
          %v4513 = vadd.f32 %v4511, %v4512
          %v4514 = vsel %vm4484, %v4387, 0.0
          %v4515 = vadd.f32 %v4513, %v4514
          %v4516 = vsel %vm4484, %v4391, 0.0
          %v4517 = vadd.f32 %v4515, %v4516
          %v4518 = vsel %vm4484, %v4395, 0.0
          %v4519 = vadd.f32 %v4517, %v4518
          %v4520 = vsel %vm4484, %v4399, 0.0
          %v4521 = vadd.f32 %v4519, %v4520
          %v4522 = vsel %vm4484, %v4403, 0.0
          %v4523 = vadd.f32 %v4521, %v4522
          %v4524 = vsel %vm4484, %v4407, 0.0
          %v4525 = vadd.f32 %v4523, %v4524
          %v4526 = vsel %vm4484, %v4411, 0.0
          %v4527 = vadd.f32 %v4525, %v4526
          %v4528 = vsel %vm4484, %v4415, 0.0
          %v4529 = vadd.f32 %v4527, %v4528
          %v4530 = vsel %vm4484, %v4419, 0.0
          %v4531 = vadd.f32 %v4529, %v4530
          %v4532 = vsel %vm4484, %v4423, 0.0
          %v4533 = vadd.f32 %v4531, %v4532
          %v4534 = vsel %vm4484, %v4427, 0.0
          %v4535 = vadd.f32 %v4533, %v4534
          %v4536 = vsel %vm4484, %v4431, 0.0
          %v4537 = vadd.f32 %v4535, %v4536
          %v4538 = vsel %vm4484, %v4435, 0.0
          %v4539 = vadd.f32 %v4537, %v4538
          %v4540 = vsel %vm4484, %v4439, 0.0
          %v4541 = vadd.f32 %v4539, %v4540
          %v4542 = vsel %vm4484, %v4443, 0.0
          %v4543 = vadd.f32 %v4541, %v4542
          %v4544 = vsel %vm4484, %v4447, 0.0
          %v4545 = vadd.f32 %v4543, %v4544
          %v4546 = vsel %vm4484, %v4451, 0.0
          %v4547 = vadd.f32 %v4545, %v4546
          %4548 = vadd.xlane.f32.xlu0 %v4547
          %v4549 = vpop.xlane.xlu0 %4548
          %vm4550 = vcmask 0
          %4551 = vst.msk [vmem:[%s337] sm:$0x1] %vm4550, %v4549
        $region52: #{tpu_custom_call.1} parent=27 // pred_fallthru
          _
        %p4552 = scmp.lt.s32.totalorder %s27, 1
        %s4553 = scalar_select %p4552, %s27, 1
        %s4554 = smul.addr %s4553, 2
        %s4555 = smul.addr %s4554, 8
        %s4556 = scalar_lea.vmem %s2, %s4555
        %p4557 = scmp.lt.s32.totalorder %s27, 1
        %s4558 = scalar_select %p4557, %s27, 1
        %s4559 = smul.addr %s4558, 2
        %s4560 = smul.addr %s4559, 8
        %s4561 = scalar_lea.vmem %s3, %s4560
        %p4562 = scmp.lt.s32.totalorder %s27, 1
        %s4563 = scalar_select %p4562, %s27, 1
        %s4564 = smul.addr %s4563, 2
        %s4565 = smul.addr %s4564, 8
        %s4566 = scalar_lea.vmem %s4, %s4565
        %p4567 = scmp.lt.s32.totalorder %s27, 1
        %s4568 = scalar_select %p4567, %s27, 1
        %s4569 = scalar_lea.vmem %s5, %s4568
        // Predicated region
        $region53: #{tpu_custom_call.1} parent=27 // pred_check
          %p4570 = pneg %p109
        $region54: #{tpu_custom_call.1} parent=27 // pred_check_branch
          %4572 = sbr.rel (%p4570) target = $region56
        $region55: #{tpu_custom_call.1} parent=27 // pred_region
          _
        $region56: #{tpu_custom_call.1} parent=27 // pred_fallthru
          _
        // Predicated region
        $region57: #{tpu_custom_call.1} parent=27 // pred_check
          %p4573 = pneg %p135
        $region58: #{tpu_custom_call.1} parent=27 // pred_check_branch
          %4575 = sbr.rel (%p4573) target = $region60
        $region59: #{tpu_custom_call.1} parent=27 // pred_region
          _
        $region60: #{tpu_custom_call.1} parent=27 // pred_fallthru
          _
        // Predicated region
        $region61: #{tpu_custom_call.1} parent=27 // pred_check
          %p4576 = pneg %p161
        $region62: #{tpu_custom_call.1} parent=27 // pred_check_branch
          %4578 = sbr.rel (%p4576) target = $region64
        $region63: #{tpu_custom_call.1} parent=27 // pred_region
          _
        $region64: #{tpu_custom_call.1} parent=27 // pred_fallthru
          _
        // Predicated region
        $region65: #{tpu_custom_call.1} parent=27 // pred_check
          %p4579 = pneg %p187
        $region66: #{tpu_custom_call.1} parent=27 // pred_check_branch
          %4581 = sbr.rel (%p4579) target = $region68
        $region67: #{tpu_custom_call.1} parent=27 // pred_region
          _
        $region68: #{tpu_custom_call.1} parent=27 // pred_fallthru
          _
      $region28: #{tpu_custom_call.1} parent=5 // pred_fallthru
        _
      %p4582 = scmp.le.s32.totalorder 2, %s18
      // Predicated region
      $region69: #{tpu_custom_call.1} parent=5 // pred_check
        %p4583 = pneg %p4582
      $region70: #{tpu_custom_call.1} parent=5 // pred_check_branch
        %4585 = sbr.rel (%p4583) target = $region72
      $region71: #{tpu_custom_call.1} parent=5 // pred_region
        %s4586 = ssub.s32 %s18, 2
        // Predicated region
        $region73: #{tpu_custom_call.1} parent=71 // pred_check
          %p4587 = pneg %p115
        $region74: #{tpu_custom_call.1} parent=71 // pred_check_branch
          %4589 = sbr.rel (%p4587) target = $region76
        $region75: #{tpu_custom_call.1} parent=71 // pred_region
          %p4590 = scmp.lt.s32.totalorder %s29, 1
          %s4591 = scalar_select %p4590, %s29, 1
          %s4592 = smul.addr %s4591, 2
          %s4593 = smul.addr %s4592, 8
          %s4594 = scalar_lea.vmem %s2, %s4593
        $region76: #{tpu_custom_call.1} parent=71 // pred_fallthru
          _
        // Predicated region
        $region77: #{tpu_custom_call.1} parent=71 // pred_check
          %p4595 = pneg %p141
        $region78: #{tpu_custom_call.1} parent=71 // pred_check_branch
          %4597 = sbr.rel (%p4595) target = $region80
        $region79: #{tpu_custom_call.1} parent=71 // pred_region
          %p4598 = scmp.lt.s32.totalorder %s29, 1
          %s4599 = scalar_select %p4598, %s29, 1
          %s4600 = smul.addr %s4599, 2
          %s4601 = smul.addr %s4600, 8
          %s4602 = scalar_lea.vmem %s3, %s4601
        $region80: #{tpu_custom_call.1} parent=71 // pred_fallthru
          _
        // Predicated region
        $region81: #{tpu_custom_call.1} parent=71 // pred_check
          %p4603 = pneg %p167
        $region82: #{tpu_custom_call.1} parent=71 // pred_check_branch
          %4605 = sbr.rel (%p4603) target = $region84
        $region83: #{tpu_custom_call.1} parent=71 // pred_region
          %p4606 = scmp.lt.s32.totalorder %s29, 1
          %s4607 = scalar_select %p4606, %s29, 1
          %s4608 = smul.addr %s4607, 2
          %s4609 = smul.addr %s4608, 8
          %s4610 = scalar_lea.vmem %s4, %s4609
        $region84: #{tpu_custom_call.1} parent=71 // pred_fallthru
          _
        // Predicated region
        $region85: #{tpu_custom_call.1} parent=71 // pred_check
          %p4611 = pneg %p193
        $region86: #{tpu_custom_call.1} parent=71 // pred_check_branch
          %4613 = sbr.rel (%p4611) target = $region88
        $region87: #{tpu_custom_call.1} parent=71 // pred_region
          %p4614 = scmp.lt.s32.totalorder %s29, 1
          %s4615 = scalar_select %p4614, %s29, 1
          %s4616 = scalar_lea.vmem %s5, %s4615
        $region88: #{tpu_custom_call.1} parent=71 // pred_fallthru
          _
      $region72: #{tpu_custom_call.1} parent=5 // pred_fallthru
        _
    $region6: #{tpu_custom_call.1} parent=1 // loop_footer
      %s22 = sadd.s32 1, %s18
    $region7: #{tpu_custom_call.1} parent=1 // loop_footer_branch
      %17 = sbr.rel target = $region3
    $region8: #{tpu_custom_call.1} parent=1 // loop_exit
      _
    %4617 = vsyncpa [#allocation7], 1
    %s4618 = scalar_lea.sflag [#allocation7], 1
    %4619 = vsyncpa %s4618, 1
    %4620 = vsyncpa [#allocation9], 1
    %s4621 = scalar_lea.sflag [#allocation9], 1
    %4622 = vsyncpa %s4621, 1

</llo_original>
